<compile_context>
chip_gen: v7x
topology: tpu7x:2x2x1
jax: 0.10.0
libtpu: 0.0.40
codegen_flags: <defaults>
</compile_context>

<pallas_src>
import math
import functools

import jax
import jax.numpy as jnp
from jax.experimental import pallas as pl
from jax.experimental.pallas import tpu as pltpu


# ----------------------------------------------------------------------------
# small helpers
# ----------------------------------------------------------------------------
def _gelu(x):
    # QAGNN's GELU (tanh approximation) - kept in f32 on the EUP.
    return 0.5 * x * (1.0 + jnp.tanh(math.sqrt(2.0 / math.pi) * (x + 0.044715 * x ** 3)))


_BF = jnp.bfloat16
_F32 = jnp.float32
_TM_MAX = 1024         # large row tile: fills MXU rows, amortizes per-step overhead
_TM_SPLIT_MIN = 256    # split single-step grids into 2 steps once per-step rows >= this


def _round_up(x, m):
    return ((x + m - 1) // m) * m


def _tile_rows(m, split_ok=True):
    """Return (padded_rows, row_tile).

    Small slabs run as one grid step; slabs with >= 2*_TM_SPLIT_MIN rows are split
    into at least 2 steps so both v7x TensorCores get work; big slabs tile at
    _TM_MAX rows (per-step pipeline cost amortized, DMA near HBM roofline).
    """
    mp8 = _round_up(max(m, 8), 8)
    if mp8 > _TM_MAX:
        return _round_up(m, _TM_MAX), _TM_MAX
    if split_ok and mp8 >= 2 * _TM_SPLIT_MIN:
        half = _round_up((mp8 + 1) // 2, 8)
        return 2 * half, half
    return mp8, mp8


def _prep_rows(x, mp):
    """Cast matmul operand to bf16 (no-op if already bf16) and pad rows."""
    m = x.shape[0]
    x = x.astype(_BF)
    if mp != m:
        x = jnp.pad(x, ((0, mp - m), (0, 0)))
    return x


def _row_spec(tm, cols):
    return pl.BlockSpec((tm, cols), lambda i: (i, 0))


def _full_spec(shape):
    # Constant-index (weight / bias) block.
    # TODO(synk): single-buffering these via pipeline_mode=pl.Buffered(1) would free
    #             VMEM headroom on v7x (64 MiB); skipped because pipeline_mode on
    #             top-level pallas_call BlockSpecs is not reliably supported across
    #             current releases and the bf16 weights at D=128 are far below the
    #             configured 32 MiB limit even double-buffered.
    return pl.BlockSpec(shape, lambda i: (0, 0))


_CP = pltpu.CompilerParams(dimension_semantics=("parallel",),
                           vmem_limit_bytes=32 * 1024 * 1024)


# ----------------------------------------------------------------------------
# Pallas kernels (matmul operands bf16, accumulation + elementwise in f32)
# ----------------------------------------------------------------------------
def _linear_kernel(x_ref, w_ref, b_ref, o_ref, *, act, act_cols):
    y = jnp.dot(x_ref[...], w_ref[...], preferred_element_type=_F32) + b_ref[...]
    if act == "gelu":
        g = _gelu(y)
        if act_cols is None:
            y = g
        else:
            lane = jax.lax.broadcasted_iota(jnp.int32, y.shape, 1)
            y = jnp.where(lane < act_cols, g, y)
    elif act == "relu":
        y = jnp.maximum(y, 0.0)
    o_ref[...] = y.astype(o_ref.dtype)


def _mlp2_kernel(x_ref, w1_ref, b1_ref, w2_ref, b2_ref, o_ref, *, out_act):
    # Linear -> (BatchNorm1d as identity, eval mode) -> ReLU -> Linear [-> GELU]
    h = jnp.dot(x_ref[...], w1_ref[...], preferred_element_type=_F32) + b1_ref[...]
    h = jnp.maximum(h, 0.0)
    y = jnp.dot(h.astype(w2_ref.dtype), w2_ref[...],
                preferred_element_type=_F32) + b2_ref[...]
    if out_act == "gelu":
        y = _gelu(y)
    o_ref[...] = y.astype(o_ref.dtype)


def _gat_msg_kernel(xi_ref, xj_ref, ef_ref,
                    we1_ref, be1_ref, we2_ref, be2_ref,
                    wkx_ref, bk_ref,
                    we_km_ref,
                    wj_mq_ref, bj_mq_ref,
                    o_ref, *, dim, inv_sqrt_dph):
    """Fused edge-encoder MLP + key/msg/query projections for GATConvE.

    MXU-wide formulation (N=256 on v6e/v7x):
      e     = edge_encoder(edge_feat)                                (tm, D)
      km_e  = e   @ [wke | wme]                = [key_e | msg_e]     (tm, 2D)
      mq    = x_j @ [wmx | wq ] + [bm | bq]    = [msg_x | query]     (tm, 2D)
      key   = x_i @ wkx + bk + key_e
      msg   = msg_x + msg_e
      query = query * 1/sqrt(dph)
    Output slab (tm, 2D): [:, :D] = msg, [:, D:] = query*key (per-head score
    reduction is a tiny reshape+sum done in the JAX glue).
    """
    # edge encoder: Linear -> BN(identity) -> ReLU -> Linear
    e = jnp.dot(ef_ref[...], we1_ref[...], preferred_element_type=_F32) + be1_ref[...]
    e = jnp.maximum(e, 0.0)
    e = jnp.dot(e.astype(we2_ref.dtype), we2_ref[...],
                preferred_element_type=_F32) + be2_ref[...]
    e_lo = e.astype(we_km_ref.dtype)

    km_e = jnp.dot(e_lo, we_km_ref[...], preferred_element_type=_F32)
    mq = jnp.dot(xj_ref[...], wj_mq_ref[...], preferred_element_type=_F32) + bj_mq_ref[...]
    key = (jnp.dot(xi_ref[...], wkx_ref[...], preferred_element_type=_F32)
           + bk_ref[...] + km_e[:, :dim])
    msg = mq[:, :dim] + km_e[:, dim:]
    qry = mq[:, dim:] * inv_sqrt_dph
    o_ref[:, :dim] = msg.astype(o_ref.dtype)
    o_ref[:, dim:] = (qry * key).astype(o_ref.dtype)


def _vhvx_kernel(h_ref, x_ref, wh_ref, bh_ref, wx_ref, bx_ref, o_ref):
    y = (jnp.dot(h_ref[...], wh_ref[...], preferred_element_type=_F32) + bh_ref[...]
         + jnp.dot(x_ref[...], wx_ref[...], preferred_element_type=_F32) + bx_ref[...])
    o_ref[...] = _gelu(y).astype(o_ref.dtype)


def _fc_head_kernel(x_ref, w1_ref, b1_ref, g_ref, be_ref, w2_ref, b2_ref, o_ref):
    # Linear -> LayerNorm -> GELU -> Linear -> Sigmoid  (QAGNN fc MLP + activateOut)
    h = jnp.dot(x_ref[...], w1_ref[...], preferred_element_type=_F32) + b1_ref[...]
    mu = jnp.mean(h, axis=-1, keepdims=True)
    var = jnp.mean((h - mu) ** 2, axis=-1, keepdims=True)
    hn = (h - mu) * jax.lax.rsqrt(var + 1e-5) * g_ref[...] + be_ref[...]
    hg = _gelu(hn)
    y = jnp.dot(hg.astype(w2_ref.dtype), w2_ref[...],
                preferred_element_type=_F32) + b2_ref[...]
    o_ref[...] = jax.nn.sigmoid(y).astype(o_ref.dtype)


# ----------------------------------------------------------------------------
# Pallas wrappers (weights/biases arrive pre-cast / pre-fused from prepare_params)
# ----------------------------------------------------------------------------
def pallas_linear(x, w, b, act="none", act_cols=None, out_dtype=_F32, split_ok=True):
    m0, K = x.shape
    N = w.shape[1]
    mp, tm = _tile_rows(m0, split_ok)
    ob = jnp.dtype(out_dtype).itemsize
    cost = pl.CostEstimate(
        flops=2 * mp * K * N,
        transcendentals=(mp * (N if act_cols is None else act_cols)) if act == "gelu" else 0,
        bytes_accessed=2 * mp * K + 2 * K * N + 4 * N + ob * mp * N)
    out = pl.pallas_call(
        functools.partial(_linear_kernel, act=act, act_cols=act_cols),
        out_shape=jax.ShapeDtypeStruct((mp, N), out_dtype),
        grid=(mp // tm,),
        in_specs=[_row_spec(tm, K), _full_spec((K, N)), _full_spec((1, N))],
        out_specs=_row_spec(tm, N),
        compiler_params=_CP,
        cost_estimate=cost,
    )(_prep_rows(x, mp), w, b)
    return out[:m0] if mp != m0 else out


def pallas_mlp2(x, mlp1, mlp2, out_act="none", out_dtype=_F32, split_ok=True):
    m0, K = x.shape
    Dm, Do = mlp1["w"].shape[1], mlp2["w"].shape[1]
    mp, tm = _tile_rows(m0, split_ok)
    ob = jnp.dtype(out_dtype).itemsize
    cost = pl.CostEstimate(
        flops=2 * mp * (K * Dm + Dm * Do),
        transcendentals=(mp * Do) if out_act == "gelu" else 0,
        bytes_accessed=2 * mp * K + 2 * (K * Dm + Dm * Do) + 4 * (Dm + Do) + ob * mp * Do)
    out = pl.pallas_call(
        functools.partial(_mlp2_kernel, out_act=out_act),
        out_shape=jax.ShapeDtypeStruct((mp, Do), out_dtype),
        grid=(mp // tm,),
        in_specs=[_row_spec(tm, K), _full_spec((K, Dm)), _full_spec((1, Dm)),
                  _full_spec((Dm, Do)), _full_spec((1, Do))],
        out_specs=_row_spec(tm, Do),
        compiler_params=_CP,
        cost_estimate=cost,
    )(_prep_rows(x, mp), mlp1["w"], mlp1["b"], mlp2["w"], mlp2["b"])
    return out[:m0] if mp != m0 else out


def pallas_gat_message(x_i, x_j, edge_feat, enc1, enc2, lp, *, head_count, dim_per_head):
    """Fused edge-encoder + key/msg/query projections.  Returns (msg, q*k) in f32."""
    D = head_count * dim_per_head
    m0, K2 = x_i.shape          # K2 = 2*D
    Ke = edge_feat.shape[1]
    mp, tm = _tile_rows(m0, split_ok=True)

    macs = Ke * D + D * D + D * 2 * D + K2 * 2 * D + K2 * D
    cost = pl.CostEstimate(
        flops=2 * mp * macs,
        transcendentals=0,
        bytes_accessed=2 * mp * (2 * K2 + Ke) + 2 * macs + 4 * 6 * D + 2 * mp * 2 * D)

    out = pl.pallas_call(
        functools.partial(_gat_msg_kernel, dim=D,
                          inv_sqrt_dph=1.0 / math.sqrt(dim_per_head)),
        out_shape=jax.ShapeDtypeStruct((mp, 2 * D), _BF),
        grid=(mp // tm,),
        in_specs=[_row_spec(tm, K2), _row_spec(tm, K2), _row_spec(tm, Ke),
                  _full_spec((Ke, D)), _full_spec((1, D)),
                  _full_spec((D, D)), _full_spec((1, D)),
                  _full_spec((K2, D)), _full_spec((1, D)),
                  _full_spec((D, 2 * D)),
                  _full_spec((K2, 2 * D)), _full_spec((1, 2 * D))],
        out_specs=_row_spec(tm, 2 * D),
        compiler_params=_CP,
        cost_estimate=cost,
    )(_prep_rows(x_i, mp), _prep_rows(x_j, mp), _prep_rows(edge_feat, mp),
      enc1["w"], enc1["b"], enc2["w"], enc2["b"],
      lp["wkx"], lp["bk"], lp["we_km"], lp["wj_mq"], lp["bj_mq"])
    out = out[:m0] if mp != m0 else out
    # upcast in glue: alpha-scale / segment sums stay f32
    return out[:, :D].astype(_F32), out[:, D:].astype(_F32)


def pallas_vhvx(h, x, vh, vx, out_dtype=_F32):
    m0, Dh = h.shape
    Dx = x.shape[1]
    Do = vh["w"].shape[1]
    mp, tm = _tile_rows(m0, split_ok=True)
    ob = jnp.dtype(out_dtype).itemsize
    cost = pl.CostEstimate(
        flops=2 * mp * (Dh * Do + Dx * Do),
        transcendentals=mp * Do,
        bytes_accessed=2 * mp * (Dh + Dx) + 2 * (Dh + Dx) * Do + 8 * Do + ob * mp * Do)
    out = pl.pallas_call(
        _vhvx_kernel,
        out_shape=jax.ShapeDtypeStruct((mp, Do), out_dtype),
        grid=(mp // tm,),
        in_specs=[_row_spec(tm, Dh), _row_spec(tm, Dx),
                  _full_spec((Dh, Do)), _full_spec((1, Do)),
                  _full_spec((Dx, Do)), _full_spec((1, Do))],
        out_specs=_row_spec(tm, Do),
        compiler_params=_CP,
        cost_estimate=cost,
    )(_prep_rows(h, mp), _prep_rows(x, mp),
      vh["w"], vh["b"], vx["w"], vx["b"])
    return out[:m0] if mp != m0 else out


def pallas_fc_head(x, pp, pre_dim):
    m0, K = x.shape
    Fd = pp["fc1"]["w"].shape[1]
    Np = pp["fc2"]["w"].shape[1]        # lane-padded to a multiple of 128
    mp, tm = _tile_rows(m0, split_ok=False)
    cost = pl.CostEstimate(
        flops=2 * mp * (K * Fd + Fd * Np),
        transcendentals=mp * (Fd + Np + 1),
        bytes_accessed=2 * mp * K + 2 * (K * Fd + Fd * Np) + 4 * (3 * Fd + Np) + 4 * mp * Np)
    out = pl.pallas_call(
        _fc_head_kernel,
        out_shape=jax.ShapeDtypeStruct((mp, Np), _F32),
        grid=(mp // tm,),
        in_specs=[_row_spec(tm, K), _full_spec((K, Fd)), _full_spec((1, Fd)),
                  _full_spec((1, Fd)), _full_spec((1, Fd)),
                  _full_spec((Fd, Np)), _full_spec((1, Np))],
        out_specs=_row_spec(tm, Np),
        compiler_params=_CP,
        cost_estimate=cost,
    )(_prep_rows(x, mp), pp["fc1"]["w"], pp["fc1"]["b"],
      pp["fc_ln_g"], pp["fc_ln_b"], pp["fc2"]["w"], pp["fc2"]["b"])
    return out[:m0, :pre_dim]


# ----------------------------------------------------------------------------
# Model components (glue in JAX, hot-path matmuls in Pallas)
# ----------------------------------------------------------------------------
def qagnn_mp(pp, cfg, H, edge_index, edge_type, node_type_ids, node_scores):
    B, n, D = H.shape
    n_ntype, n_etype = cfg["n_ntype"], cfg["n_etype"]
    Hh = cfg["head_count"]
    dph = D // Hh
    half = D // 2
    N = B * n

    T = jax.nn.one_hot(node_type_ids.reshape(-1), n_ntype, dtype=_F32)
    js = jnp.power(1.1, jnp.arange(half, dtype=_F32))
    Bsin = jnp.sin(js[None, None, :] * node_scores).reshape(-1, half)

    # Fused node-type + node-score embedding: one block-diagonal matmul with a
    # lane-dense D-wide bf16 output (one pallas_call instead of two narrow ones).
    nfe = pallas_linear(jnp.concatenate([T, Bsin], axis=1),
                        pp["emb_cat"]["w"], pp["emb_cat"]["b"],
                        act="gelu", out_dtype=_BF)

    _X = H.reshape(N, D)
    _node_type = node_type_ids.reshape(-1)

    # ---- layer-invariant edge features / self-loops / gathers (hoisted) ----
    edge_vec = jax.nn.one_hot(edge_type, n_etype + 1, dtype=_F32)
    self_edge_vec = jnp.zeros((N, n_etype + 1), _F32).at[:, n_etype].set(1.0)
    head_vec = jax.nn.one_hot(_node_type[edge_index[0]], n_ntype, dtype=_F32)
    tail_vec = jax.nn.one_hot(_node_type[edge_index[1]], n_ntype, dtype=_F32)
    headtail_vec = jnp.concatenate([head_vec, tail_vec], axis=1)
    self_head_vec = jax.nn.one_hot(_node_type, n_ntype, dtype=_F32)
    self_headtail_vec = jnp.concatenate([self_head_vec, self_head_vec], axis=1)
    edge_vec = jnp.concatenate([edge_vec, self_edge_vec], axis=0)
    headtail_vec = jnp.concatenate([headtail_vec, self_headtail_vec], axis=0)
    edge_feat = jnp.concatenate([edge_vec, headtail_vec], axis=1).astype(_BF)

    loop = jnp.arange(N, dtype=edge_index.dtype)
    ei = jnp.concatenate([edge_index, jnp.stack([loop, loop])], axis=1)
    src, dst = ei[0], ei[1]
    E = ei.shape[1]
    nfe_i = nfe[dst]           # layer-invariant bf16 gathers
    nfe_j = nfe[src]
    counts = jax.ops.segment_sum(jnp.ones((E,), _F32), src, num_segments=N)[src]

    all_edge_map, all_gnn_attn = [], []
    for lp in pp["gnn_layers"]:
        xb = _X.astype(_BF)                       # no-op after first layer
        x_i = jnp.concatenate([xb[dst], nfe_i], axis=1)      # (E+N, 2D) bf16
        x_j = jnp.concatenate([xb[src], nfe_j], axis=1)

        # fused edge-encoder + key/msg/query projections (single Pallas kernel)
        msg, qk = pallas_gat_message(x_i, x_j, edge_feat,
                                     pp["edge_enc1"], pp["edge_enc2"], lp,
                                     head_count=Hh, dim_per_head=dph)
        # tiny per-head score reduction in glue (keeps the kernel output lane-dense)
        scores = qk.reshape(-1, Hh, dph).sum(-1)

        # TODO(synk): PyG segment-softmax / scatter-add are data-dependent gather/scatter;
        #             kept in plain JAX segment ops (no clean static-BlockSpec Pallas form).
        seg_max = jax.ops.segment_max(scores, src, num_segments=N)
        alpha = jnp.exp(scores - seg_max[src])
        denom = jax.ops.segment_sum(alpha, src, num_segments=N)
        alpha = alpha / denom[src]
        alpha_scaled = alpha * counts[:, None]

        out_msg = (msg.reshape(-1, Hh, dph) * alpha_scaled[:, :, None]).reshape(-1, D)
        aggr = jax.ops.segment_sum(out_msg, dst, num_segments=N)

        # node MLP (Linear->BN(id)->ReLU->Linear) with the per-layer GELU fused in
        _X = pallas_mlp2(aggr, lp["mlp1"], lp["mlp2"], out_act="gelu", out_dtype=_BF)
        all_gnn_attn.append(alpha[:, -1][:500])
        all_edge_map.append(ei[:, :500])
        # dropout: identity (eval mode)

    X = _X.reshape(B, n, D)
    output = pallas_vhvx(H.reshape(-1, D), X.reshape(-1, D),
                         pp["Vh"], pp["Vx"], out_dtype=_BF).reshape(B, n, D)
    return output, (all_edge_map, all_gnn_attn)


def pooler(pp, sent_vecs, q_proj, gnn_output, mask, n_head):
    B, L, D = gnn_output.shape
    d_k = D // n_head
    # K and V projections fused into a single (D -> 2D) lane-dense bf16 matmul.
    kv = pallas_linear(gnn_output.reshape(B * L, D), pp["pool_kv"]["w"],
                       pp["pool_kv"]["b"], out_dtype=_BF).astype(_F32)
    k = kv[:, :D].reshape(B, L, n_head, d_k)
    v = kv[:, D:].reshape(B, L, n_head, d_k)
    q = q_proj.astype(_F32).reshape(B, n_head, d_k)
    scores = jnp.einsum("bhd,blhd->bhl", q, k) / math.sqrt(d_k)
    scores = jnp.where(mask[:, None, :], -1e30, scores)       # masked_fill(-inf)
    attn = jax.nn.softmax(scores, axis=-1)
    out = jnp.einsum("bhl,blhd->bhd", attn, v).reshape(B, n_head * d_k)
    return out, attn


def qagnn_decoder(pp, cfg, sent_vecs, concept_ids, node_type_ids, node_scores,
                  adj_lengths, adj):
    edge_index, edge_type = adj
    D = cfg["concept_dim"]

    # Fused svec2nvec(GELU) + pooler query projection: one (S -> 2D) matmul,
    # GELU only on the first D lanes; split in glue.
    sp = pallas_linear(sent_vecs, pp["sv2n_poolq"]["w"], pp["sv2n_poolq"]["b"],
                       act="gelu", act_cols=D, out_dtype=_BF, split_ok=False)
    gnn_input0 = sp[:, :D][:, None, :]
    pool_q_vec = sp[:, D:]

    idx = concept_ids[:, 1:] - 1
    emb = pp["concept_table"][idx]                          # (B, n-1, concept_in_dim) bf16
    B_, nm1, cin = emb.shape
    gnn_input1 = pallas_linear(emb.reshape(-1, cin), pp["cpt_transform"]["w"],
                               pp["cpt_transform"]["b"], act="gelu",
                               out_dtype=_BF).reshape(B_, nm1, D)
    gnn_input = jnp.concatenate([gnn_input0, gnn_input1], axis=1)   # dropout_e: identity

    n_nodes = gnn_input.shape[1]
    lens_f = adj_lengths.astype(_F32)
    _mask = (jnp.arange(n_nodes)[None, :] < adj_lengths[:, None]).astype(_F32)
    ns = -node_scores
    ns = ns - ns[:, 0:1, :]
    ns = ns[..., 0]
    ns = ns * _mask
    mean_norm = jnp.abs(ns).sum(axis=1) / lens_f
    ns = ns / (mean_norm[:, None] + 1e-5)
    node_scores_n = ns[:, :, None]

    gnn_output, (edge_idx, edge_weight) = qagnn_mp(
        pp, cfg, gnn_input, edge_index, edge_type, node_type_ids, node_scores_n)

    Z_vecs = gnn_output[:, 0]
    mask = (jnp.arange(n_nodes)[None, :] >= adj_lengths[:, None]) | (node_type_ids == 3)
    all_masked = jnp.all(mask, axis=1)
    mask = mask.at[:, 0].set(jnp.where(all_masked, False, mask[:, 0]))

    graph_vecs, pool_attn = pooler(pp, sent_vecs, pool_q_vec, gnn_output, mask,
                                   cfg["n_attention_head"])

    concat = jnp.concatenate([graph_vecs.astype(_BF), sent_vecs.astype(_BF),
                              Z_vecs.astype(_BF)], axis=1)    # dropout_fc: identity
    logits = pallas_fc_head(concat, pp, cfg["pre_dim"])       # fc MLP + sigmoid
    return logits, pool_attn, (edge_idx, edge_weight)


def hita_encoder(pp, diagnosis_codes, seq_time_step, mask_mult, mask_final,
                 mask_code, lengths, seq_time_step2):
    # TODO(synk): TransformerTime (HITA) definition not provided; deterministic stub.
    bs, V, C = diagnosis_codes.shape
    dh = pp["hita_code_table"].shape[1]
    code_emb = pp["hita_code_table"][diagnosis_codes]       # (bs, V, C, dh)
    visit_emb = (code_emb * mask_code).sum(axis=2)          # (bs, V, dh)
    t = seq_time_step.astype(_F32) / 180.0
    # Linear(1, dh) is an outer product (K=1 would be pure MXU padding) -> glue.
    time_emb = _gelu(t[..., None] * pp["hita_time"]["w"][0][None, None, :]
                     + pp["hita_time"]["b"][None, None, :])
    h = visit_emb + time_emb
    # width-1 attention logit kept in glue (avoids a 1-lane kernel output)
    att_logit = (jnp.einsum("bvd,d->bv", h, pp["hita_att"]["w"][:, 0])
                 + pp["hita_att"]["b"][0])
    valid = mask_mult[..., 0] > 0
    att_logit = jnp.where(valid, att_logit, -1e30)
    visit_att = jax.nn.softmax(att_logit, axis=-1)
    pooled = jnp.einsum("bv,bvd->bd", visit_att, h)
    sent_vec = pallas_linear(pooled, pp["hita_out"]["w"], pp["hita_out"]["b"],
                             act="gelu", out_dtype=_BF, split_ok=False)
    sa = jnp.einsum("bvd,bwd->bvw", h, h) / math.sqrt(dh)
    sa = jnp.where(valid[:, None, :], sa, -1e30)
    self_att = jax.nn.softmax(sa, axis=-1)
    return sent_vec, visit_att, self_att


def _core_forward(cfg, pp, diagnosis_codes, seq_time_step, mask_mult, mask_final,
                  mask_code, lengths, seq_time_step2, concept_ids, node_type_ids,
                  node_scores, adj_lengths, edge_index, edge_type):
    sent_vec, visit_att, self_att = hita_encoder(
        pp, diagnosis_codes, seq_time_step, mask_mult, mask_final,
        mask_code, lengths, seq_time_step2)
    logits, attn, (edge_idx, edge_weight) = qagnn_decoder(
        pp, cfg, sent_vec, concept_ids, node_type_ids, node_scores,
        adj_lengths, (edge_index, edge_type))
    return logits, attn, (edge_idx, edge_weight), visit_att, self_att


@functools.lru_cache(maxsize=None)
def _get_core(cfg_items):
    cfg = dict(cfg_items)
    return jax.jit(functools.partial(_core_forward, cfg))


def lm_qagnn_forward(pp, cfg, diagnosis_codes, seq_time_step, mask_mult,
                     mask_final, mask_code, lengths, seq_time_step2, *inputs):
    concept_ids, node_type_ids, node_scores, adj_lengths = inputs[-6:-2]
    edge_index_init, edge_type_init = inputs[-2:]

    bs, nc = concept_ids.shape[0], concept_ids.shape[1]
    concept_ids = concept_ids.reshape(bs * nc, *concept_ids.shape[2:])
    node_type_ids = node_type_ids.reshape(bs * nc, *node_type_ids.shape[2:])
    node_scores = node_scores.reshape(bs * nc, *node_scores.shape[2:])
    adj_lengths = adj_lengths.reshape(bs * nc)

    # batch_graph: flatten list-of-lists, offset node indices per example (host glue)
    edge_index_flat = [e for sub in edge_index_init for e in sub]
    edge_type_flat = [t for sub in edge_type_init for t in sub]
    n_nodes = concept_ids.shape[1]
    edge_index = jnp.concatenate(
        [edge_index_flat[i] + i * n_nodes for i in range(len(edge_index_flat))], axis=1)
    edge_type = jnp.concatenate(edge_type_flat, axis=0)

    core = _get_core(tuple(sorted(cfg.items())))
    return core(pp, diagnosis_codes, seq_time_step, mask_mult, mask_final,
                mask_code, lengths, seq_time_step2, concept_ids, node_type_ids,
                node_scores, adj_lengths, edge_index, edge_type)


# ----------------------------------------------------------------------------
# parameter preparation: pre-cast / pre-fuse all weights ONCE, outside the jit
# ----------------------------------------------------------------------------
def prepare_params(params, cfg):
    D, S = cfg["concept_dim"], cfg["sent_dim"]
    half = D // 2
    n_ntype = cfg["n_ntype"]

    def w_bf(w):
        return jnp.asarray(w, _BF)

    def b_row(b):
        return jnp.asarray(b, _F32).reshape(1, -1)

    pp = {}
    # HITA stub (glue params stay f32)
    pp["hita_code_table"] = params["hita_code_table"]
    pp["hita_time"] = params["hita_time"]
    pp["hita_att"] = params["hita_att"]
    pp["hita_out"] = {"w": w_bf(params["hita_out"]["w"]), "b": b_row(params["hita_out"]["b"])}

    # fused svec2nvec (GELU) + pooler query projection: (S -> 2D)
    pp["sv2n_poolq"] = {
        "w": w_bf(jnp.concatenate([params["svec2nvec"]["w"], params["pool_q"]["w"]], axis=1)),
        "b": b_row(jnp.concatenate([params["svec2nvec"]["b"], params["pool_q"]["b"]], axis=0))}

    pp["concept_table"] = w_bf(params["concept_table"])   # bf16 before the gather
    pp["cpt_transform"] = {"w": w_bf(params["cpt_transform"]["w"]),
                           "b": b_row(params["cpt_transform"]["b"])}

    # fused node-type + node-score embedding: block-diagonal (n_ntype+half -> D)
    w_cat = jnp.zeros((n_ntype + half, D), _F32)
    w_cat = (w_cat.at[:n_ntype, :half].set(params["emb_node_type"]["w"])
                  .at[n_ntype:, half:].set(params["emb_score"]["w"]))
    b_cat = jnp.concatenate([params["emb_node_type"]["b"], params["emb_score"]["b"]], axis=0)
    pp["emb_cat"] = {"w": w_bf(w_cat), "b": b_row(b_cat)}

    pp["edge_enc1"] = {"w": w_bf(params["edge_enc1"]["w"]), "b": b_row(params["edge_enc1"]["b"])}
    pp["edge_enc2"] = {"w": w_bf(params["edge_enc2"]["w"]), "b": b_row(params["edge_enc2"]["b"])}

    layers = []
    K2 = 2 * D
    for lp in params["gnn_layers"]:
        wk, wm, wq = lp["key"]["w"], lp["msg"]["w"], lp["query"]["w"]
        layers.append({
            "wkx": w_bf(wk[:K2]),                                           # (2D, D)
            "bk": b_row(lp["key"]["b"]),
            "we_km": w_bf(jnp.concatenate([wk[K2:], wm[K2:]], axis=1)),     # (D, 2D): [key_e|msg_e]
            "wj_mq": w_bf(jnp.concatenate([wm[:K2], wq], axis=1)),          # (2D, 2D): [msg_x|query]
            "bj_mq": b_row(jnp.concatenate([lp["msg"]["b"], lp["query"]["b"]], axis=0)),
            "mlp1": {"w": w_bf(lp["mlp1"]["w"]), "b": b_row(lp["mlp1"]["b"])},
            "mlp2": {"w": w_bf(lp["mlp2"]["w"]), "b": b_row(lp["mlp2"]["b"])},
        })
    pp["gnn_layers"] = layers

    pp["Vh"] = {"w": w_bf(params["Vh"]["w"]), "b": b_row(params["Vh"]["b"])}
    pp["Vx"] = {"w": w_bf(params["Vx"]["w"]), "b": b_row(params["Vx"]["b"])}
    pp["pool_kv"] = {
        "w": w_bf(jnp.concatenate([params["pool_k"]["w"], params["pool_v"]["w"]], axis=1)),
        "b": b_row(jnp.concatenate([params["pool_k"]["b"], params["pool_v"]["b"]], axis=0))}

    Fd = params["fc1"]["w"].shape[1]
    P = params["fc2"]["w"].shape[1]
    Np = _round_up(P, 128)         # lane-dense fc2 output (slice to pre_dim in glue)
    w2p = jnp.zeros((Fd, Np), _F32).at[:, :P].set(params["fc2"]["w"])
    b2p = jnp.zeros((Np,), _F32).at[:P].set(params["fc2"]["b"])
    pp["fc1"] = {"w": w_bf(params["fc1"]["w"]), "b": b_row(params["fc1"]["b"])}
    pp["fc_ln_g"] = params["fc_ln_g"].reshape(1, Fd).astype(_F32)
    pp["fc_ln_b"] = params["fc_ln_b"].reshape(1, Fd).astype(_F32)
    pp["fc2"] = {"w": w_bf(w2p), "b": b_row(b2p)}
    return pp


# ----------------------------------------------------------------------------
# deterministic parameter initialization
# ----------------------------------------------------------------------------
def init_params(key, cfg):
    keys = iter(jax.random.split(key, 64))

    def lin(fi, fo, scale=0.08):
        w = scale * jax.random.normal(next(keys), (fi, fo), _F32)
        b = jnp.zeros((fo,), _F32)
        return {"w": w, "b": b}

    D, S = cfg["concept_dim"], cfg["sent_dim"]
    p = {}
    # HITA stub
    p["hita_code_table"] = 0.08 * jax.random.normal(
        next(keys), (cfg["n_diag_codes"], cfg["hita_dim"]), _F32)
    p["hita_time"] = lin(1, cfg["hita_dim"])
    p["hita_att"] = lin(cfg["hita_dim"], 1)
    p["hita_out"] = lin(cfg["hita_dim"], S)
    # decoder
    p["svec2nvec"] = lin(S, D)
    p["concept_table"] = 0.08 * jax.random.normal(
        next(keys), (cfg["n_concept"], cfg["concept_in_dim"]), _F32)
    p["cpt_transform"] = lin(cfg["concept_in_dim"], D)
    p["emb_node_type"] = lin(cfg["n_ntype"], D // 2)
    p["emb_score"] = lin(D // 2, D // 2)
    edge_in = cfg["n_etype"] + 1 + 2 * cfg["n_ntype"]
    p["edge_enc1"] = lin(edge_in, D)
    p["edge_enc2"] = lin(D, D)
    p["gnn_layers"] = []
    for _ in range(cfg["k"]):
        p["gnn_layers"].append({
            "key": lin(3 * D, D), "msg": lin(3 * D, D), "query": lin(2 * D, D),
            "mlp1": lin(D, D), "mlp2": lin(D, D)})
    p["Vh"] = lin(D, D)
    p["Vx"] = lin(D, D)
    p["pool_q"] = lin(S, D)
    p["pool_k"] = lin(D, D)
    p["pool_v"] = lin(D, D)
    fc_in = 2 * D + S
    p["fc1"] = lin(fc_in, cfg["fc_dim"])
    p["fc_ln_g"] = jnp.ones((cfg["fc_dim"],), _F32)
    p["fc_ln_b"] = jnp.zeros((cfg["fc_dim"],), _F32)
    p["fc2"] = lin(cfg["fc_dim"], cfg["pre_dim"])
    return p


# ----------------------------------------------------------------------------
# main
# ----------------------------------------------------------------------------
if __name__ == "__main__":
    # Feature dims chosen 128-aligned so every kernel output is lane-dense
    # (vregs are 128 lanes wide); rows stay small for a quick smoke test.
    cfg = dict(concept_dim=128, sent_dim=128, hita_dim=128, n_ntype=4, n_etype=3,
               n_concept=50, concept_in_dim=128, head_count=4, k=2,
               n_attention_head=2, fc_dim=128, pre_dim=2, n_diag_codes=30)
    params = init_params(jax.random.PRNGKey(0), cfg)
    # All weight casting / fusion happens ONCE here, outside the jitted forward.
    pp = prepare_params(params, cfg)

    bs, nc, n_nodes = 2, 1, 8
    V, C = 6, 5                     # HITA visits / codes-per-visit
    k0, k1, k2, k3, k4, k5, k6 = jax.random.split(jax.random.PRNGKey(1), 7)

    diagnosis_codes = jax.random.randint(k0, (bs, V, C), 0, cfg["n_diag_codes"])
    seq_time_step = jax.random.uniform(k1, (bs, V), minval=0.0, maxval=365.0)
    mask_mult = jnp.ones((bs, V, 1), _F32)
    mask_final = jnp.zeros((bs, V, 1), _F32).at[:, -1, :].set(1.0)
    mask_code = jnp.ones((bs, V, C, 1), _F32)
    lengths = jnp.full((bs,), V, jnp.int32)
    seq_time_step2 = seq_time_step[..., None]

    concept_ids = jax.random.randint(k2, (bs, nc, n_nodes), 1, cfg["n_concept"])
    node_type_ids = jax.random.randint(k3, (bs, nc, n_nodes), 0, 3)
    node_type_ids = node_type_ids.at[:, :, 0].set(3)      # context node is type 3
    node_scores = jax.random.normal(k4, (bs, nc, n_nodes, 1), _F32)
    adj_lengths = jnp.array([[8], [6]], jnp.int32)

    # per-(example, choice) edge lists: list[bs] of list[nc] of arrays
    E_per = 6
    ei_list, et_list = [], []
    cnt = 0
    for b in range(bs):
        sub_ei, sub_et = [], []
        for c in range(nc):
            ks = jax.random.fold_in(k5, cnt)
            kd = jax.random.fold_in(k6, cnt)
            kt = jax.random.fold_in(ks, 777)
            cnt += 1
            src = jax.random.randint(ks, (E_per,), 0, n_nodes).astype(jnp.int32)
            dst = jax.random.randint(kd, (E_per,), 0, n_nodes).astype(jnp.int32)
            sub_ei.append(jnp.stack([src, dst]))
            sub_et.append(jax.random.randint(kt, (E_per,), 0, cfg["n_etype"]).astype(jnp.int32))
        ei_list.append(sub_ei)
        et_list.append(sub_et)

    lm_inputs_dummy = jnp.zeros((bs, nc, 4), jnp.int32)    # placeholder LM inputs (unused)
    inputs = (lm_inputs_dummy, concept_ids, node_type_ids, node_scores,
              adj_lengths, ei_list, et_list)

    logits, attn, (edge_idx, edge_weight), visit_att, self_att = lm_qagnn_forward(
        pp, cfg, diagnosis_codes, seq_time_step, mask_mult, mask_final,
        mask_code, lengths, seq_time_step2, *inputs)

    jax.block_until_ready(logits)
    jax.block_until_ready(attn)
    jax.block_until_ready(edge_weight[-1])
    assert logits.shape == (bs * nc, cfg["pre_dim"])
    assert jnp.all(jnp.isfinite(logits))
    print("KERNEL_OK")
</pallas_src>

<mosaic_0001>
module attributes {stable_mosaic.version = 11 : i64} {
  func.func @_linear_kernel(%arg0: i32, %arg1: memref<16x128xbf16, #tpu.memory_space<vmem>>, %arg2: memref<128x128xbf16, #tpu.memory_space<vmem>>, %arg3: memref<1x128xf32, #tpu.memory_space<vmem>>, %arg4: memref<16x128xbf16, #tpu.memory_space<vmem>>) attributes {dimension_semantics = [#tpu.dimension_semantics<parallel>], iteration_bounds = array<i64: 1>, scalar_prefetch = 0 : i64, scratch_operands = 0 : i64, tpu.core_type = #tpu.core_type<tc>, window_params = [{transform_indices = @transform_0, window_bounds = array<i64: 16, 128>}, {pipeline_mode = #tpu.pipeline_mode<synchronous>, transform_indices = @transform_1, window_bounds = array<i64: 128, 128>}, {pipeline_mode = #tpu.pipeline_mode<synchronous>, transform_indices = @transform_2, window_bounds = array<i64: 1, 128>}, {transform_indices = @transform_3, window_bounds = array<i64: 16, 128>}]} {
    %c0 = arith.constant 0 : index
    %c0_0 = arith.constant 0 : index
    %0 = vector.load %arg1[%c0, %c0_0] : memref<16x128xbf16, #tpu.memory_space<vmem>>, vector<16x128xbf16>
    %c0_1 = arith.constant 0 : index
    %c0_2 = arith.constant 0 : index
    %1 = vector.load %arg2[%c0_1, %c0_2] : memref<128x128xbf16, #tpu.memory_space<vmem>>, vector<128x128xbf16>
    %cst = arith.constant dense<0.000000e+00> : vector<16x128xf32>
    %2 = tpu.matmul %0, %1, %cst {dimension_numbers = #tpu.dot_dimension_numbers<[1], [0], [0], [1], [0, 0, 1, 1], [], []>} : vector<16x128xbf16>, vector<128x128xbf16>, vector<16x128xf32> -> vector<16x128xf32>
    %c0_3 = arith.constant 0 : index
    %c0_4 = arith.constant 0 : index
    %3 = vector.load %arg3[%c0_3, %c0_4] : memref<1x128xf32, #tpu.memory_space<vmem>>, vector<1x128xf32>
    %4 = vector.broadcast %3 : vector<1x128xf32> to vector<16x128xf32>
    %5 = arith.addf %2, %4 : vector<16x128xf32>
    %cst_5 = arith.constant 5.000000e-01 : f32
    %6 = vector.broadcast %cst_5 : f32 to vector<16x128xf32>
    %7 = arith.mulf %6, %5 : vector<16x128xf32>
    %8 = arith.mulf %5, %5 : vector<16x128xf32>
    %9 = arith.mulf %5, %8 : vector<16x128xf32>
    %cst_6 = arith.constant 4.471500e-02 : f32
    %10 = vector.broadcast %cst_6 : f32 to vector<16x128xf32>
    %11 = arith.mulf %10, %9 : vector<16x128xf32>
    %12 = arith.addf %5, %11 : vector<16x128xf32>
    %cst_7 = arith.constant 0.797884583 : f32
    %13 = vector.broadcast %cst_7 : f32 to vector<16x128xf32>
    %14 = arith.mulf %13, %12 : vector<16x128xf32>
    %15 = math.tanh %14 : vector<16x128xf32>
    %cst_8 = arith.constant 1.000000e+00 : f32
    %16 = vector.broadcast %cst_8 : f32 to vector<16x128xf32>
    %17 = arith.addf %16, %15 : vector<16x128xf32>
    %18 = arith.mulf %7, %17 : vector<16x128xf32>
    %19 = arith.truncf %18 : vector<16x128xf32> to vector<16x128xbf16>
    %c0_9 = arith.constant 0 : index
    %c0_10 = arith.constant 0 : index
    %20 = vector.load %arg4[%c0_9, %c0_10] : memref<16x128xbf16, #tpu.memory_space<vmem>>, vector<16x128xbf16>
    tpu.vector_store %arg4[%c0_9, %c0_10], %19 {strides = array<i32>} : memref<16x128xbf16, #tpu.memory_space<vmem>>, vector<16x128xbf16>,
    return
  }
  func.func @transform_0(%arg0: i32) -> (i32, i32) {
    %c0_i32 = arith.constant 0 : i32
    %c0_i32_0 = arith.constant 0 : i32
    return %arg0, %c0_i32 : i32, i32
  }
  func.func @transform_1(%arg0: i32) -> (i32, i32) {
    %c0_i32 = arith.constant 0 : i32
    %c0_i32_0 = arith.constant 0 : i32
    %c0_i32_1 = arith.constant 0 : i32
    return %c0_i32, %c0_i32_0 : i32, i32
  }
  func.func @transform_2(%arg0: i32) -> (i32, i32) {
    %c0_i32 = arith.constant 0 : i32
    %c0_i32_0 = arith.constant 0 : i32
    %c0_i32_1 = arith.constant 0 : i32
    return %c0_i32, %c0_i32_0 : i32, i32
  }
  func.func @transform_3(%arg0: i32) -> (i32, i32) {
    %c0_i32 = arith.constant 0 : i32
    %c0_i32_0 = arith.constant 0 : i32
    return %arg0, %c0_i32 : i32, i32
  }
}

module attributes {stable_mosaic.version = 11 : i64} {
  func.func @_linear_kernel(%arg0: i32, %arg1: memref<16x68xbf16, #tpu.memory_space<vmem>>, %arg2: memref<68x128xbf16, #tpu.memory_space<vmem>>, %arg3: memref<1x128xf32, #tpu.memory_space<vmem>>, %arg4: memref<16x128xbf16, #tpu.memory_space<vmem>>) attributes {dimension_semantics = [#tpu.dimension_semantics<parallel>], iteration_bounds = array<i64: 1>, scalar_prefetch = 0 : i64, scratch_operands = 0 : i64, tpu.core_type = #tpu.core_type<tc>, window_params = [{transform_indices = @transform_0, window_bounds = array<i64: 16, 68>}, {pipeline_mode = #tpu.pipeline_mode<synchronous>, transform_indices = @transform_1, window_bounds = array<i64: 68, 128>}, {pipeline_mode = #tpu.pipeline_mode<synchronous>, transform_indices = @transform_2, window_bounds = array<i64: 1, 128>}, {transform_indices = @transform_3, window_bounds = array<i64: 16, 128>}]} {
    %c0 = arith.constant 0 : index
    %c0_0 = arith.constant 0 : index
    %0 = vector.load %arg1[%c0, %c0_0] : memref<16x68xbf16, #tpu.memory_space<vmem>>, vector<16x68xbf16>
    %c0_1 = arith.constant 0 : index
    %c0_2 = arith.constant 0 : index
    %1 = vector.load %arg2[%c0_1, %c0_2] : memref<68x128xbf16, #tpu.memory_space<vmem>>, vector<68x128xbf16>
    %cst = arith.constant dense<0.000000e+00> : vector<16x128xf32>
    %2 = tpu.matmul %0, %1, %cst {dimension_numbers = #tpu.dot_dimension_numbers<[1], [0], [0], [1], [0, 0, 1, 1], [], []>} : vector<16x68xbf16>, vector<68x128xbf16>, vector<16x128xf32> -> vector<16x128xf32>
    %c0_3 = arith.constant 0 : index
    %c0_4 = arith.constant 0 : index
    %3 = vector.load %arg3[%c0_3, %c0_4] : memref<1x128xf32, #tpu.memory_space<vmem>>, vector<1x128xf32>
    %4 = vector.broadcast %3 : vector<1x128xf32> to vector<16x128xf32>
    %5 = arith.addf %2, %4 : vector<16x128xf32>
    %cst_5 = arith.constant 5.000000e-01 : f32
    %6 = vector.broadcast %cst_5 : f32 to vector<16x128xf32>
    %7 = arith.mulf %6, %5 : vector<16x128xf32>
    %8 = arith.mulf %5, %5 : vector<16x128xf32>
    %9 = arith.mulf %5, %8 : vector<16x128xf32>
    %cst_6 = arith.constant 4.471500e-02 : f32
    %10 = vector.broadcast %cst_6 : f32 to vector<16x128xf32>
    %11 = arith.mulf %10, %9 : vector<16x128xf32>
    %12 = arith.addf %5, %11 : vector<16x128xf32>
    %cst_7 = arith.constant 0.797884583 : f32
    %13 = vector.broadcast %cst_7 : f32 to vector<16x128xf32>
    %14 = arith.mulf %13, %12 : vector<16x128xf32>
    %15 = math.tanh %14 : vector<16x128xf32>
    %cst_8 = arith.constant 1.000000e+00 : f32
    %16 = vector.broadcast %cst_8 : f32 to vector<16x128xf32>
    %17 = arith.addf %16, %15 : vector<16x128xf32>
    %18 = arith.mulf %7, %17 : vector<16x128xf32>
    %19 = arith.truncf %18 : vector<16x128xf32> to vector<16x128xbf16>
    %c0_9 = arith.constant 0 : index
    %c0_10 = arith.constant 0 : index
    %20 = vector.load %arg4[%c0_9, %c0_10] : memref<16x128xbf16, #tpu.memory_space<vmem>>, vector<16x128xbf16>
    tpu.vector_store %arg4[%c0_9, %c0_10], %19 {strides = array<i32>} : memref<16x128xbf16, #tpu.memory_space<vmem>>, vector<16x128xbf16>,
    return
  }
  func.func @transform_0(%arg0: i32) -> (i32, i32) {
    %c0_i32 = arith.constant 0 : i32
    %c0_i32_0 = arith.constant 0 : i32
    return %arg0, %c0_i32 : i32, i32
  }
  func.func @transform_1(%arg0: i32) -> (i32, i32) {
    %c0_i32 = arith.constant 0 : i32
    %c0_i32_0 = arith.constant 0 : i32
    %c0_i32_1 = arith.constant 0 : i32
    return %c0_i32, %c0_i32_0 : i32, i32
  }
  func.func @transform_2(%arg0: i32) -> (i32, i32) {
    %c0_i32 = arith.constant 0 : i32
    %c0_i32_0 = arith.constant 0 : i32
    %c0_i32_1 = arith.constant 0 : i32
    return %c0_i32, %c0_i32_0 : i32, i32
  }
  func.func @transform_3(%arg0: i32) -> (i32, i32) {
    %c0_i32 = arith.constant 0 : i32
    %c0_i32_0 = arith.constant 0 : i32
    return %arg0, %c0_i32 : i32, i32
  }
}

module attributes {stable_mosaic.version = 11 : i64} {
  func.func @_linear_kernel(%arg0: i32, %arg1: memref<8x128xbf16, #tpu.memory_space<vmem>>, %arg2: memref<128x128xbf16, #tpu.memory_space<vmem>>, %arg3: memref<1x128xf32, #tpu.memory_space<vmem>>, %arg4: memref<8x128xbf16, #tpu.memory_space<vmem>>) attributes {dimension_semantics = [#tpu.dimension_semantics<parallel>], iteration_bounds = array<i64: 1>, scalar_prefetch = 0 : i64, scratch_operands = 0 : i64, tpu.core_type = #tpu.core_type<tc>, window_params = [{transform_indices = @transform_0, window_bounds = array<i64: 8, 128>}, {pipeline_mode = #tpu.pipeline_mode<synchronous>, transform_indices = @transform_1, window_bounds = array<i64: 128, 128>}, {pipeline_mode = #tpu.pipeline_mode<synchronous>, transform_indices = @transform_2, window_bounds = array<i64: 1, 128>}, {transform_indices = @transform_3, window_bounds = array<i64: 8, 128>}]} {
    %c0 = arith.constant 0 : index
    %c0_0 = arith.constant 0 : index
    %0 = vector.load %arg1[%c0, %c0_0] : memref<8x128xbf16, #tpu.memory_space<vmem>>, vector<8x128xbf16>
    %c0_1 = arith.constant 0 : index
    %c0_2 = arith.constant 0 : index
    %1 = vector.load %arg2[%c0_1, %c0_2] : memref<128x128xbf16, #tpu.memory_space<vmem>>, vector<128x128xbf16>
    %cst = arith.constant dense<0.000000e+00> : vector<8x128xf32>
    %2 = tpu.matmul %0, %1, %cst {dimension_numbers = #tpu.dot_dimension_numbers<[1], [0], [0], [1], [0, 0, 1, 1], [], []>} : vector<8x128xbf16>, vector<128x128xbf16>, vector<8x128xf32> -> vector<8x128xf32>
    %c0_3 = arith.constant 0 : index
    %c0_4 = arith.constant 0 : index
    %3 = vector.load %arg3[%c0_3, %c0_4] : memref<1x128xf32, #tpu.memory_space<vmem>>, vector<1x128xf32>
    %4 = vector.broadcast %3 : vector<1x128xf32> to vector<8x128xf32>
    %5 = arith.addf %2, %4 : vector<8x128xf32>
    %cst_5 = arith.constant 5.000000e-01 : f32
    %6 = vector.broadcast %cst_5 : f32 to vector<8x128xf32>
    %7 = arith.mulf %6, %5 : vector<8x128xf32>
    %8 = arith.mulf %5, %5 : vector<8x128xf32>
    %9 = arith.mulf %5, %8 : vector<8x128xf32>
    %cst_6 = arith.constant 4.471500e-02 : f32
    %10 = vector.broadcast %cst_6 : f32 to vector<8x128xf32>
    %11 = arith.mulf %10, %9 : vector<8x128xf32>
    %12 = arith.addf %5, %11 : vector<8x128xf32>
    %cst_7 = arith.constant 0.797884583 : f32
    %13 = vector.broadcast %cst_7 : f32 to vector<8x128xf32>
    %14 = arith.mulf %13, %12 : vector<8x128xf32>
    %15 = math.tanh %14 : vector<8x128xf32>
    %cst_8 = arith.constant 1.000000e+00 : f32
    %16 = vector.broadcast %cst_8 : f32 to vector<8x128xf32>
    %17 = arith.addf %16, %15 : vector<8x128xf32>
    %18 = arith.mulf %7, %17 : vector<8x128xf32>
    %19 = arith.truncf %18 : vector<8x128xf32> to vector<8x128xbf16>
    %c0_9 = arith.constant 0 : index
    %c0_10 = arith.constant 0 : index
    %20 = vector.load %arg4[%c0_9, %c0_10] : memref<8x128xbf16, #tpu.memory_space<vmem>>, vector<8x128xbf16>
    tpu.vector_store %arg4[%c0_9, %c0_10], %19 {strides = array<i32>} : memref<8x128xbf16, #tpu.memory_space<vmem>>, vector<8x128xbf16>,
    return
  }
  func.func @transform_0(%arg0: i32) -> (i32, i32) {
    %c0_i32 = arith.constant 0 : i32
    %c0_i32_0 = arith.constant 0 : i32
    return %arg0, %c0_i32 : i32, i32
  }
  func.func @transform_1(%arg0: i32) -> (i32, i32) {
    %c0_i32 = arith.constant 0 : i32
    %c0_i32_0 = arith.constant 0 : i32
    %c0_i32_1 = arith.constant 0 : i32
    return %c0_i32, %c0_i32_0 : i32, i32
  }
  func.func @transform_2(%arg0: i32) -> (i32, i32) {
    %c0_i32 = arith.constant 0 : i32
    %c0_i32_0 = arith.constant 0 : i32
    %c0_i32_1 = arith.constant 0 : i32
    return %c0_i32, %c0_i32_0 : i32, i32
  }
  func.func @transform_3(%arg0: i32) -> (i32, i32) {
    %c0_i32 = arith.constant 0 : i32
    %c0_i32_0 = arith.constant 0 : i32
    return %arg0, %c0_i32 : i32, i32
  }
}

module attributes {stable_mosaic.version = 11 : i64} {
  func.func @_gat_msg_kernel(%arg0: i32, %arg1: memref<32x256xbf16, #tpu.memory_space<vmem>>, %arg2: memref<32x256xbf16, #tpu.memory_space<vmem>>, %arg3: memref<32x12xbf16, #tpu.memory_space<vmem>>, %arg4: memref<12x128xbf16, #tpu.memory_space<vmem>>, %arg5: memref<1x128xf32, #tpu.memory_space<vmem>>, %arg6: memref<128x128xbf16, #tpu.memory_space<vmem>>, %arg7: memref<1x128xf32, #tpu.memory_space<vmem>>, %arg8: memref<256x128xbf16, #tpu.memory_space<vmem>>, %arg9: memref<1x128xf32, #tpu.memory_space<vmem>>, %arg10: memref<128x256xbf16, #tpu.memory_space<vmem>>, %arg11: memref<256x256xbf16, #tpu.memory_space<vmem>>, %arg12: memref<1x256xf32, #tpu.memory_space<vmem>>, %arg13: memref<32x256xbf16, #tpu.memory_space<vmem>>) attributes {dimension_semantics = [#tpu.dimension_semantics<parallel>], iteration_bounds = array<i64: 1>, scalar_prefetch = 0 : i64, scratch_operands = 0 : i64, tpu.core_type = #tpu.core_type<tc>, window_params = [{transform_indices = @transform_0, window_bounds = array<i64: 32, 256>}, {transform_indices = @transform_1, window_bounds = array<i64: 32, 256>}, {transform_indices = @transform_2, window_bounds = array<i64: 32, 12>}, {pipeline_mode = #tpu.pipeline_mode<synchronous>, transform_indices = @transform_3, window_bounds = array<i64: 12, 128>}, {pipeline_mode = #tpu.pipeline_mode<synchronous>, transform_indices = @transform_4, window_bounds = array<i64: 1, 128>}, {pipeline_mode = #tpu.pipeline_mode<synchronous>, transform_indices = @transform_5, window_bounds = array<i64: 128, 128>}, {pipeline_mode = #tpu.pipeline_mode<synchronous>, transform_indices = @transform_6, window_bounds = array<i64: 1, 128>}, {pipeline_mode = #tpu.pipeline_mode<synchronous>, transform_indices = @transform_7, window_bounds = array<i64: 256, 128>}, {pipeline_mode = #tpu.pipeline_mode<synchronous>, transform_indices = @transform_8, window_bounds = array<i64: 1, 128>}, {pipeline_mode = #tpu.pipeline_mode<synchronous>, transform_indices = @transform_9, window_bounds = array<i64: 128, 256>}, {pipeline_mode = #tpu.pipeline_mode<synchronous>, transform_indices = @transform_10, window_bounds = array<i64: 256, 256>}, {pipeline_mode = #tpu.pipeline_mode<synchronous>, transform_indices = @transform_11, window_bounds = array<i64: 1, 256>}, {transform_indices = @transform_12, window_bounds = array<i64: 32, 256>}]} {
    %c0 = arith.constant 0 : index
    %c0_0 = arith.constant 0 : index
    %0 = vector.load %arg3[%c0, %c0_0] : memref<32x12xbf16, #tpu.memory_space<vmem>>, vector<32x12xbf16>
    %c0_1 = arith.constant 0 : index
    %c0_2 = arith.constant 0 : index
    %1 = vector.load %arg4[%c0_1, %c0_2] : memref<12x128xbf16, #tpu.memory_space<vmem>>, vector<12x128xbf16>
    %cst = arith.constant dense<0.000000e+00> : vector<32x128xf32>
    %2 = tpu.matmul %0, %1, %cst {dimension_numbers = #tpu.dot_dimension_numbers<[1], [0], [0], [1], [0, 0, 1, 1], [], []>} : vector<32x12xbf16>, vector<12x128xbf16>, vector<32x128xf32> -> vector<32x128xf32>
    %c0_3 = arith.constant 0 : index
    %c0_4 = arith.constant 0 : index
    %3 = vector.load %arg5[%c0_3, %c0_4] : memref<1x128xf32, #tpu.memory_space<vmem>>, vector<1x128xf32>
    %4 = vector.broadcast %3 : vector<1x128xf32> to vector<32x128xf32>
    %5 = arith.addf %2, %4 : vector<32x128xf32>
    %cst_5 = arith.constant 0.000000e+00 : f32
    %6 = vector.broadcast %cst_5 : f32 to vector<32x128xf32>
    %7 = arith.maximumf %5, %6 : vector<32x128xf32>
    %8 = arith.truncf %7 : vector<32x128xf32> to vector<32x128xbf16>
    %c0_6 = arith.constant 0 : index
    %c0_7 = arith.constant 0 : index
    %9 = vector.load %arg6[%c0_6, %c0_7] : memref<128x128xbf16, #tpu.memory_space<vmem>>, vector<128x128xbf16>
    %cst_8 = arith.constant dense<0.000000e+00> : vector<32x128xf32>
    %10 = tpu.matmul %8, %9, %cst_8 {dimension_numbers = #tpu.dot_dimension_numbers<[1], [0], [0], [1], [0, 0, 1, 1], [], []>} : vector<32x128xbf16>, vector<128x128xbf16>, vector<32x128xf32> -> vector<32x128xf32>
    %c0_9 = arith.constant 0 : index
    %c0_10 = arith.constant 0 : index
    %11 = vector.load %arg7[%c0_9, %c0_10] : memref<1x128xf32, #tpu.memory_space<vmem>>, vector<1x128xf32>
    %12 = vector.broadcast %11 : vector<1x128xf32> to vector<32x128xf32>
    %13 = arith.addf %10, %12 : vector<32x128xf32>
    %14 = arith.truncf %13 : vector<32x128xf32> to vector<32x128xbf16>
    %c0_11 = arith.constant 0 : index
    %c0_12 = arith.constant 0 : index
    %15 = vector.load %arg10[%c0_11, %c0_12] : memref<128x256xbf16, #tpu.memory_space<vmem>>, vector<128x256xbf16>
    %cst_13 = arith.constant dense<0.000000e+00> : vector<32x256xf32>
    %16 = tpu.matmul %14, %15, %cst_13 {dimension_numbers = #tpu.dot_dimension_numbers<[1], [0], [0], [1], [0, 0, 1, 1], [], []>} : vector<32x128xbf16>, vector<128x256xbf16>, vector<32x256xf32> -> vector<32x256xf32>
    %c0_14 = arith.constant 0 : index
    %c0_15 = arith.constant 0 : index
    %17 = vector.load %arg2[%c0_14, %c0_15] : memref<32x256xbf16, #tpu.memory_space<vmem>>, vector<32x256xbf16>
    %c0_16 = arith.constant 0 : index
    %c0_17 = arith.constant 0 : index
    %18 = vector.load %arg11[%c0_16, %c0_17] : memref<256x256xbf16, #tpu.memory_space<vmem>>, vector<256x256xbf16>
    %cst_18 = arith.constant dense<0.000000e+00> : vector<32x256xf32>
    %19 = tpu.matmul %17, %18, %cst_18 {dimension_numbers = #tpu.dot_dimension_numbers<[1], [0], [0], [1], [0, 0, 1, 1], [], []>} : vector<32x256xbf16>, vector<256x256xbf16>, vector<32x256xf32> -> vector<32x256xf32>
    %c0_19 = arith.constant 0 : index
    %c0_20 = arith.constant 0 : index
    %20 = vector.load %arg12[%c0_19, %c0_20] : memref<1x256xf32, #tpu.memory_space<vmem>>, vector<1x256xf32>
    %21 = vector.broadcast %20 : vector<1x256xf32> to vector<32x256xf32>
    %22 = arith.addf %19, %21 : vector<32x256xf32>
    %c0_21 = arith.constant 0 : index
    %c0_22 = arith.constant 0 : index
    %23 = vector.load %arg1[%c0_21, %c0_22] : memref<32x256xbf16, #tpu.memory_space<vmem>>, vector<32x256xbf16>
    %c0_23 = arith.constant 0 : index
    %c0_24 = arith.constant 0 : index
    %24 = vector.load %arg8[%c0_23, %c0_24] : memref<256x128xbf16, #tpu.memory_space<vmem>>, vector<256x128xbf16>
    %cst_25 = arith.constant dense<0.000000e+00> : vector<32x128xf32>
    %25 = tpu.matmul %23, %24, %cst_25 {dimension_numbers = #tpu.dot_dimension_numbers<[1], [0], [0], [1], [0, 0, 1, 1], [], []>} : vector<32x256xbf16>, vector<256x128xbf16>, vector<32x128xf32> -> vector<32x128xf32>
    %c0_26 = arith.constant 0 : index
    %c0_27 = arith.constant 0 : index
    %26 = vector.load %arg9[%c0_26, %c0_27] : memref<1x128xf32, #tpu.memory_space<vmem>>, vector<1x128xf32>
    %27 = vector.broadcast %26 : vector<1x128xf32> to vector<32x128xf32>
    %28 = arith.addf %25, %27 : vector<32x128xf32>
    %29 = vector.extract_strided_slice %16 {offsets = [0, 0], sizes = [32, 128], strides = [1, 1]} : vector<32x256xf32> to vector<32x128xf32>
    %30 = arith.addf %28, %29 : vector<32x128xf32>
    %31 = vector.extract_strided_slice %22 {offsets = [0, 0], sizes = [32, 128], strides = [1, 1]} : vector<32x256xf32> to vector<32x128xf32>
    %32 = vector.extract_strided_slice %16 {offsets = [0, 128], sizes = [32, 128], strides = [1, 1]} : vector<32x256xf32> to vector<32x128xf32>
    %33 = arith.addf %31, %32 : vector<32x128xf32>
    %34 = vector.extract_strided_slice %22 {offsets = [0, 128], sizes = [32, 128], strides = [1, 1]} : vector<32x256xf32> to vector<32x128xf32>
    %cst_28 = arith.constant 0.176776692 : f32
    %35 = vector.broadcast %cst_28 : f32 to vector<32x128xf32>
    %36 = arith.mulf %34, %35 : vector<32x128xf32>
    %37 = arith.truncf %33 : vector<32x128xf32> to vector<32x128xbf16>
    %c0_29 = arith.constant 0 : index
    %c0_30 = arith.constant 0 : index
    %38 = vector.load %arg13[%c0_29, %c0_30] : memref<32x256xbf16, #tpu.memory_space<vmem>>, vector<32x128xbf16>
    tpu.vector_store %arg13[%c0_29, %c0_30], %37 {strides = array<i32>} : memref<32x256xbf16, #tpu.memory_space<vmem>>, vector<32x128xbf16>,
    %39 = arith.mulf %36, %30 : vector<32x128xf32>
    %40 = arith.truncf %39 : vector<32x128xf32> to vector<32x128xbf16>
    %c0_31 = arith.constant 0 : index
    %c128 = arith.constant 128 : index
    %41 = vector.load %arg13[%c0_31, %c128] : memref<32x256xbf16, #tpu.memory_space<vmem>>, vector<32x128xbf16>
    tpu.vector_store %arg13[%c0_31, %c128], %40 {strides = array<i32>} : memref<32x256xbf16, #tpu.memory_space<vmem>>, vector<32x128xbf16>,
    return
  }
  func.func @transform_0(%arg0: i32) -> (i32, i32) {
    %c0_i32 = arith.constant 0 : i32
    %c0_i32_0 = arith.constant 0 : i32
    return %arg0, %c0_i32 : i32, i32
  }
  func.func @transform_1(%arg0: i32) -> (i32, i32) {
    %c0_i32 = arith.constant 0 : i32
    %c0_i32_0 = arith.constant 0 : i32
    return %arg0, %c0_i32 : i32, i32
  }
  func.func @transform_2(%arg0: i32) -> (i32, i32) {
    %c0_i32 = arith.constant 0 : i32
    %c0_i32_0 = arith.constant 0 : i32
    return %arg0, %c0_i32 : i32, i32
  }
  func.func @transform_3(%arg0: i32) -> (i32, i32) {
    %c0_i32 = arith.constant 0 : i32
    %c0_i32_0 = arith.constant 0 : i32
    %c0_i32_1 = arith.constant 0 : i32
    return %c0_i32, %c0_i32_0 : i32, i32
  }
  func.func @transform_4(%arg0: i32) -> (i32, i32) {
    %c0_i32 = arith.constant 0 : i32
    %c0_i32_0 = arith.constant 0 : i32
    %c0_i32_1 = arith.constant 0 : i32
    return %c0_i32, %c0_i32_0 : i32, i32
  }
  func.func @transform_5(%arg0: i32) -> (i32, i32) {
    %c0_i32 = arith.constant 0 : i32
    %c0_i32_0 = arith.constant 0 : i32
    %c0_i32_1 = arith.constant 0 : i32
    return %c0_i32, %c0_i32_0 : i32, i32
  }
  func.func @transform_6(%arg0: i32) -> (i32, i32) {
    %c0_i32 = arith.constant 0 : i32
    %c0_i32_0 = arith.constant 0 : i32
    %c0_i32_1 = arith.constant 0 : i32
    return %c0_i32, %c0_i32_0 : i32, i32
  }
  func.func @transform_7(%arg0: i32) -> (i32, i32) {
    %c0_i32 = arith.constant 0 : i32
    %c0_i32_0 = arith.constant 0 : i32
    %c0_i32_1 = arith.constant 0 : i32
    return %c0_i32, %c0_i32_0 : i32, i32
  }
  func.func @transform_8(%arg0: i32) -> (i32, i32) {
    %c0_i32 = arith.constant 0 : i32
    %c0_i32_0 = arith.constant 0 : i32
    %c0_i32_1 = arith.constant 0 : i32
    return %c0_i32, %c0_i32_0 : i32, i32
  }
  func.func @transform_9(%arg0: i32) -> (i32, i32) {
    %c0_i32 = arith.constant 0 : i32
    %c0_i32_0 = arith.constant 0 : i32
    %c0_i32_1 = arith.constant 0 : i32
    return %c0_i32, %c0_i32_0 : i32, i32
  }
  func.func @transform_10(%arg0: i32) -> (i32, i32) {
    %c0_i32 = arith.constant 0 : i32
    %c0_i32_0 = arith.constant 0 : i32
    %c0_i32_1 = arith.constant 0 : i32
    return %c0_i32, %c0_i32_0 : i32, i32
  }
  func.func @transform_11(%arg0: i32) -> (i32, i32) {
    %c0_i32 = arith.constant 0 : i32
    %c0_i32_0 = arith.constant 0 : i32
    %c0_i32_1 = arith.constant 0 : i32
    return %c0_i32, %c0_i32_0 : i32, i32
  }
  func.func @transform_12(%arg0: i32) -> (i32, i32) {
    %c0_i32 = arith.constant 0 : i32
    %c0_i32_0 = arith.constant 0 : i32
    return %arg0, %c0_i32 : i32, i32
  }
}

module attributes {stable_mosaic.version = 11 : i64} {
  func.func @_linear_kernel(%arg0: i32, %arg1: memref<8x128xbf16, #tpu.memory_space<vmem>>, %arg2: memref<128x256xbf16, #tpu.memory_space<vmem>>, %arg3: memref<1x256xf32, #tpu.memory_space<vmem>>, %arg4: memref<8x256xbf16, #tpu.memory_space<vmem>>) attributes {dimension_semantics = [#tpu.dimension_semantics<parallel>], iteration_bounds = array<i64: 1>, scalar_prefetch = 0 : i64, scratch_operands = 0 : i64, tpu.core_type = #tpu.core_type<tc>, window_params = [{transform_indices = @transform_0, window_bounds = array<i64: 8, 128>}, {pipeline_mode = #tpu.pipeline_mode<synchronous>, transform_indices = @transform_1, window_bounds = array<i64: 128, 256>}, {pipeline_mode = #tpu.pipeline_mode<synchronous>, transform_indices = @transform_2, window_bounds = array<i64: 1, 256>}, {transform_indices = @transform_3, window_bounds = array<i64: 8, 256>}]} {
    %c0 = arith.constant 0 : index
    %c0_0 = arith.constant 0 : index
    %0 = vector.load %arg1[%c0, %c0_0] : memref<8x128xbf16, #tpu.memory_space<vmem>>, vector<8x128xbf16>
    %c0_1 = arith.constant 0 : index
    %c0_2 = arith.constant 0 : index
    %1 = vector.load %arg2[%c0_1, %c0_2] : memref<128x256xbf16, #tpu.memory_space<vmem>>, vector<128x256xbf16>
    %cst = arith.constant dense<0.000000e+00> : vector<8x256xf32>
    %2 = tpu.matmul %0, %1, %cst {dimension_numbers = #tpu.dot_dimension_numbers<[1], [0], [0], [1], [0, 0, 1, 1], [], []>} : vector<8x128xbf16>, vector<128x256xbf16>, vector<8x256xf32> -> vector<8x256xf32>
    %c0_3 = arith.constant 0 : index
    %c0_4 = arith.constant 0 : index
    %3 = vector.load %arg3[%c0_3, %c0_4] : memref<1x256xf32, #tpu.memory_space<vmem>>, vector<1x256xf32>
    %4 = vector.broadcast %3 : vector<1x256xf32> to vector<8x256xf32>
    %5 = arith.addf %2, %4 : vector<8x256xf32>
    %cst_5 = arith.constant 5.000000e-01 : f32
    %6 = vector.broadcast %cst_5 : f32 to vector<8x256xf32>
    %7 = arith.mulf %6, %5 : vector<8x256xf32>
    %8 = arith.mulf %5, %5 : vector<8x256xf32>
    %9 = arith.mulf %5, %8 : vector<8x256xf32>
    %cst_6 = arith.constant 4.471500e-02 : f32
    %10 = vector.broadcast %cst_6 : f32 to vector<8x256xf32>
    %11 = arith.mulf %10, %9 : vector<8x256xf32>
    %12 = arith.addf %5, %11 : vector<8x256xf32>
    %cst_7 = arith.constant 0.797884583 : f32
    %13 = vector.broadcast %cst_7 : f32 to vector<8x256xf32>
    %14 = arith.mulf %13, %12 : vector<8x256xf32>
    %15 = math.tanh %14 : vector<8x256xf32>
    %cst_8 = arith.constant 1.000000e+00 : f32
    %16 = vector.broadcast %cst_8 : f32 to vector<8x256xf32>
    %17 = arith.addf %16, %15 : vector<8x256xf32>
    %18 = arith.mulf %7, %17 : vector<8x256xf32>
    %19 = tpu.iota {dimensions = array<i32: 1>} : vector<8x256xi32>
    %c128_i32 = arith.constant 128 : i32
    %20 = vector.broadcast %c128_i32 : i32 to vector<8x256xi32>
    %21 = arith.cmpi slt, %19, %20 : vector<8x256xi32>
    %22 = arith.select %21, %18, %5 : vector<8x256xi1>, vector<8x256xf32>
    %23 = arith.truncf %22 : vector<8x256xf32> to vector<8x256xbf16>
    %c0_9 = arith.constant 0 : index
    %c0_10 = arith.constant 0 : index
    %24 = vector.load %arg4[%c0_9, %c0_10] : memref<8x256xbf16, #tpu.memory_space<vmem>>, vector<8x256xbf16>
    tpu.vector_store %arg4[%c0_9, %c0_10], %23 {strides = array<i32>} : memref<8x256xbf16, #tpu.memory_space<vmem>>, vector<8x256xbf16>,
    return
  }
  func.func @transform_0(%arg0: i32) -> (i32, i32) {
    %c0_i32 = arith.constant 0 : i32
    %c0_i32_0 = arith.constant 0 : i32
    return %arg0, %c0_i32 : i32, i32
  }
  func.func @transform_1(%arg0: i32) -> (i32, i32) {
    %c0_i32 = arith.constant 0 : i32
    %c0_i32_0 = arith.constant 0 : i32
    %c0_i32_1 = arith.constant 0 : i32
    return %c0_i32, %c0_i32_0 : i32, i32
  }
  func.func @transform_2(%arg0: i32) -> (i32, i32) {
    %c0_i32 = arith.constant 0 : i32
    %c0_i32_0 = arith.constant 0 : i32
    %c0_i32_1 = arith.constant 0 : i32
    return %c0_i32, %c0_i32_0 : i32, i32
  }
  func.func @transform_3(%arg0: i32) -> (i32, i32) {
    %c0_i32 = arith.constant 0 : i32
    %c0_i32_0 = arith.constant 0 : i32
    return %arg0, %c0_i32 : i32, i32
  }
}

module attributes {stable_mosaic.version = 11 : i64} {
  func.func @_vhvx_kernel(%arg0: i32, %arg1: memref<16x128xbf16, #tpu.memory_space<vmem>>, %arg2: memref<16x128xbf16, #tpu.memory_space<vmem>>, %arg3: memref<128x128xbf16, #tpu.memory_space<vmem>>, %arg4: memref<1x128xf32, #tpu.memory_space<vmem>>, %arg5: memref<128x128xbf16, #tpu.memory_space<vmem>>, %arg6: memref<1x128xf32, #tpu.memory_space<vmem>>, %arg7: memref<16x128xbf16, #tpu.memory_space<vmem>>) attributes {dimension_semantics = [#tpu.dimension_semantics<parallel>], iteration_bounds = array<i64: 1>, scalar_prefetch = 0 : i64, scratch_operands = 0 : i64, tpu.core_type = #tpu.core_type<tc>, window_params = [{transform_indices = @transform_0, window_bounds = array<i64: 16, 128>}, {transform_indices = @transform_1, window_bounds = array<i64: 16, 128>}, {pipeline_mode = #tpu.pipeline_mode<synchronous>, transform_indices = @transform_2, window_bounds = array<i64: 128, 128>}, {pipeline_mode = #tpu.pipeline_mode<synchronous>, transform_indices = @transform_3, window_bounds = array<i64: 1, 128>}, {pipeline_mode = #tpu.pipeline_mode<synchronous>, transform_indices = @transform_4, window_bounds = array<i64: 128, 128>}, {pipeline_mode = #tpu.pipeline_mode<synchronous>, transform_indices = @transform_5, window_bounds = array<i64: 1, 128>}, {transform_indices = @transform_6, window_bounds = array<i64: 16, 128>}]} {
    %c0 = arith.constant 0 : index
    %c0_0 = arith.constant 0 : index
    %0 = vector.load %arg1[%c0, %c0_0] : memref<16x128xbf16, #tpu.memory_space<vmem>>, vector<16x128xbf16>
    %c0_1 = arith.constant 0 : index
    %c0_2 = arith.constant 0 : index
    %1 = vector.load %arg3[%c0_1, %c0_2] : memref<128x128xbf16, #tpu.memory_space<vmem>>, vector<128x128xbf16>
    %cst = arith.constant dense<0.000000e+00> : vector<16x128xf32>
    %2 = tpu.matmul %0, %1, %cst {dimension_numbers = #tpu.dot_dimension_numbers<[1], [0], [0], [1], [0, 0, 1, 1], [], []>} : vector<16x128xbf16>, vector<128x128xbf16>, vector<16x128xf32> -> vector<16x128xf32>
    %c0_3 = arith.constant 0 : index
    %c0_4 = arith.constant 0 : index
    %3 = vector.load %arg4[%c0_3, %c0_4] : memref<1x128xf32, #tpu.memory_space<vmem>>, vector<1x128xf32>
    %4 = vector.broadcast %3 : vector<1x128xf32> to vector<16x128xf32>
    %5 = arith.addf %2, %4 : vector<16x128xf32>
    %c0_5 = arith.constant 0 : index
    %c0_6 = arith.constant 0 : index
    %6 = vector.load %arg2[%c0_5, %c0_6] : memref<16x128xbf16, #tpu.memory_space<vmem>>, vector<16x128xbf16>
    %c0_7 = arith.constant 0 : index
    %c0_8 = arith.constant 0 : index
    %7 = vector.load %arg5[%c0_7, %c0_8] : memref<128x128xbf16, #tpu.memory_space<vmem>>, vector<128x128xbf16>
    %cst_9 = arith.constant dense<0.000000e+00> : vector<16x128xf32>
    %8 = tpu.matmul %6, %7, %cst_9 {dimension_numbers = #tpu.dot_dimension_numbers<[1], [0], [0], [1], [0, 0, 1, 1], [], []>} : vector<16x128xbf16>, vector<128x128xbf16>, vector<16x128xf32> -> vector<16x128xf32>
    %9 = arith.addf %5, %8 : vector<16x128xf32>
    %c0_10 = arith.constant 0 : index
    %c0_11 = arith.constant 0 : index
    %10 = vector.load %arg6[%c0_10, %c0_11] : memref<1x128xf32, #tpu.memory_space<vmem>>, vector<1x128xf32>
    %11 = vector.broadcast %10 : vector<1x128xf32> to vector<16x128xf32>
    %12 = arith.addf %9, %11 : vector<16x128xf32>
    %cst_12 = arith.constant 5.000000e-01 : f32
    %13 = vector.broadcast %cst_12 : f32 to vector<16x128xf32>
    %14 = arith.mulf %13, %12 : vector<16x128xf32>
    %15 = arith.mulf %12, %12 : vector<16x128xf32>
    %16 = arith.mulf %12, %15 : vector<16x128xf32>
    %cst_13 = arith.constant 4.471500e-02 : f32
    %17 = vector.broadcast %cst_13 : f32 to vector<16x128xf32>
    %18 = arith.mulf %17, %16 : vector<16x128xf32>
    %19 = arith.addf %12, %18 : vector<16x128xf32>
    %cst_14 = arith.constant 0.797884583 : f32
    %20 = vector.broadcast %cst_14 : f32 to vector<16x128xf32>
    %21 = arith.mulf %20, %19 : vector<16x128xf32>
    %22 = math.tanh %21 : vector<16x128xf32>
    %cst_15 = arith.constant 1.000000e+00 : f32
    %23 = vector.broadcast %cst_15 : f32 to vector<16x128xf32>
    %24 = arith.addf %23, %22 : vector<16x128xf32>
    %25 = arith.mulf %14, %24 : vector<16x128xf32>
    %26 = arith.truncf %25 : vector<16x128xf32> to vector<16x128xbf16>
    %c0_16 = arith.constant 0 : index
    %c0_17 = arith.constant 0 : index
    %27 = vector.load %arg7[%c0_16, %c0_17] : memref<16x128xbf16, #tpu.memory_space<vmem>>, vector<16x128xbf16>
    tpu.vector_store %arg7[%c0_16, %c0_17], %26 {strides = array<i32>} : memref<16x128xbf16, #tpu.memory_space<vmem>>, vector<16x128xbf16>,
    return
  }
  func.func @transform_0(%arg0: i32) -> (i32, i32) {
    %c0_i32 = arith.constant 0 : i32
    %c0_i32_0 = arith.constant 0 : i32
    return %arg0, %c0_i32 : i32, i32
  }
  func.func @transform_1(%arg0: i32) -> (i32, i32) {
    %c0_i32 = arith.constant 0 : i32
    %c0_i32_0 = arith.constant 0 : i32
    return %arg0, %c0_i32 : i32, i32
  }
  func.func @transform_2(%arg0: i32) -> (i32, i32) {
    %c0_i32 = arith.constant 0 : i32
    %c0_i32_0 = arith.constant 0 : i32
    %c0_i32_1 = arith.constant 0 : i32
    return %c0_i32, %c0_i32_0 : i32, i32
  }
  func.func @transform_3(%arg0: i32) -> (i32, i32) {
    %c0_i32 = arith.constant 0 : i32
    %c0_i32_0 = arith.constant 0 : i32
    %c0_i32_1 = arith.constant 0 : i32
    return %c0_i32, %c0_i32_0 : i32, i32
  }
  func.func @transform_4(%arg0: i32) -> (i32, i32) {
    %c0_i32 = arith.constant 0 : i32
    %c0_i32_0 = arith.constant 0 : i32
    %c0_i32_1 = arith.constant 0 : i32
    return %c0_i32, %c0_i32_0 : i32, i32
  }
  func.func @transform_5(%arg0: i32) -> (i32, i32) {
    %c0_i32 = arith.constant 0 : i32
    %c0_i32_0 = arith.constant 0 : i32
    %c0_i32_1 = arith.constant 0 : i32
    return %c0_i32, %c0_i32_0 : i32, i32
  }
  func.func @transform_6(%arg0: i32) -> (i32, i32) {
    %c0_i32 = arith.constant 0 : i32
    %c0_i32_0 = arith.constant 0 : i32
    return %arg0, %c0_i32 : i32, i32
  }
}

module attributes {stable_mosaic.version = 11 : i64} {
  func.func @_mlp2_kernel(%arg0: i32, %arg1: memref<16x128xbf16, #tpu.memory_space<vmem>>, %arg2: memref<128x128xbf16, #tpu.memory_space<vmem>>, %arg3: memref<1x128xf32, #tpu.memory_space<vmem>>, %arg4: memref<128x128xbf16, #tpu.memory_space<vmem>>, %arg5: memref<1x128xf32, #tpu.memory_space<vmem>>, %arg6: memref<16x128xbf16, #tpu.memory_space<vmem>>) attributes {dimension_semantics = [#tpu.dimension_semantics<parallel>], iteration_bounds = array<i64: 1>, scalar_prefetch = 0 : i64, scratch_operands = 0 : i64, tpu.core_type = #tpu.core_type<tc>, window_params = [{transform_indices = @transform_0, window_bounds = array<i64: 16, 128>}, {pipeline_mode = #tpu.pipeline_mode<synchronous>, transform_indices = @transform_1, window_bounds = array<i64: 128, 128>}, {pipeline_mode = #tpu.pipeline_mode<synchronous>, transform_indices = @transform_2, window_bounds = array<i64: 1, 128>}, {pipeline_mode = #tpu.pipeline_mode<synchronous>, transform_indices = @transform_3, window_bounds = array<i64: 128, 128>}, {pipeline_mode = #tpu.pipeline_mode<synchronous>, transform_indices = @transform_4, window_bounds = array<i64: 1, 128>}, {transform_indices = @transform_5, window_bounds = array<i64: 16, 128>}]} {
    %c0 = arith.constant 0 : index
    %c0_0 = arith.constant 0 : index
    %0 = vector.load %arg1[%c0, %c0_0] : memref<16x128xbf16, #tpu.memory_space<vmem>>, vector<16x128xbf16>
    %c0_1 = arith.constant 0 : index
    %c0_2 = arith.constant 0 : index
    %1 = vector.load %arg2[%c0_1, %c0_2] : memref<128x128xbf16, #tpu.memory_space<vmem>>, vector<128x128xbf16>
    %cst = arith.constant dense<0.000000e+00> : vector<16x128xf32>
    %2 = tpu.matmul %0, %1, %cst {dimension_numbers = #tpu.dot_dimension_numbers<[1], [0], [0], [1], [0, 0, 1, 1], [], []>} : vector<16x128xbf16>, vector<128x128xbf16>, vector<16x128xf32> -> vector<16x128xf32>
    %c0_3 = arith.constant 0 : index
    %c0_4 = arith.constant 0 : index
    %3 = vector.load %arg3[%c0_3, %c0_4] : memref<1x128xf32, #tpu.memory_space<vmem>>, vector<1x128xf32>
    %4 = vector.broadcast %3 : vector<1x128xf32> to vector<16x128xf32>
    %5 = arith.addf %2, %4 : vector<16x128xf32>
    %cst_5 = arith.constant 0.000000e+00 : f32
    %6 = vector.broadcast %cst_5 : f32 to vector<16x128xf32>
    %7 = arith.maximumf %5, %6 : vector<16x128xf32>
    %8 = arith.truncf %7 : vector<16x128xf32> to vector<16x128xbf16>
    %c0_6 = arith.constant 0 : index
    %c0_7 = arith.constant 0 : index
    %9 = vector.load %arg4[%c0_6, %c0_7] : memref<128x128xbf16, #tpu.memory_space<vmem>>, vector<128x128xbf16>
    %cst_8 = arith.constant dense<0.000000e+00> : vector<16x128xf32>
    %10 = tpu.matmul %8, %9, %cst_8 {dimension_numbers = #tpu.dot_dimension_numbers<[1], [0], [0], [1], [0, 0, 1, 1], [], []>} : vector<16x128xbf16>, vector<128x128xbf16>, vector<16x128xf32> -> vector<16x128xf32>
    %c0_9 = arith.constant 0 : index
    %c0_10 = arith.constant 0 : index
    %11 = vector.load %arg5[%c0_9, %c0_10] : memref<1x128xf32, #tpu.memory_space<vmem>>, vector<1x128xf32>
    %12 = vector.broadcast %11 : vector<1x128xf32> to vector<16x128xf32>
    %13 = arith.addf %10, %12 : vector<16x128xf32>
    %cst_11 = arith.constant 5.000000e-01 : f32
    %14 = vector.broadcast %cst_11 : f32 to vector<16x128xf32>
    %15 = arith.mulf %14, %13 : vector<16x128xf32>
    %16 = arith.mulf %13, %13 : vector<16x128xf32>
    %17 = arith.mulf %13, %16 : vector<16x128xf32>
    %cst_12 = arith.constant 4.471500e-02 : f32
    %18 = vector.broadcast %cst_12 : f32 to vector<16x128xf32>
    %19 = arith.mulf %18, %17 : vector<16x128xf32>
    %20 = arith.addf %13, %19 : vector<16x128xf32>
    %cst_13 = arith.constant 0.797884583 : f32
    %21 = vector.broadcast %cst_13 : f32 to vector<16x128xf32>
    %22 = arith.mulf %21, %20 : vector<16x128xf32>
    %23 = math.tanh %22 : vector<16x128xf32>
    %cst_14 = arith.constant 1.000000e+00 : f32
    %24 = vector.broadcast %cst_14 : f32 to vector<16x128xf32>
    %25 = arith.addf %24, %23 : vector<16x128xf32>
    %26 = arith.mulf %15, %25 : vector<16x128xf32>
    %27 = arith.truncf %26 : vector<16x128xf32> to vector<16x128xbf16>
    %c0_15 = arith.constant 0 : index
    %c0_16 = arith.constant 0 : index
    %28 = vector.load %arg6[%c0_15, %c0_16] : memref<16x128xbf16, #tpu.memory_space<vmem>>, vector<16x128xbf16>
    tpu.vector_store %arg6[%c0_15, %c0_16], %27 {strides = array<i32>} : memref<16x128xbf16, #tpu.memory_space<vmem>>, vector<16x128xbf16>,
    return
  }
  func.func @transform_0(%arg0: i32) -> (i32, i32) {
    %c0_i32 = arith.constant 0 : i32
    %c0_i32_0 = arith.constant 0 : i32
    return %arg0, %c0_i32 : i32, i32
  }
  func.func @transform_1(%arg0: i32) -> (i32, i32) {
    %c0_i32 = arith.constant 0 : i32
    %c0_i32_0 = arith.constant 0 : i32
    %c0_i32_1 = arith.constant 0 : i32
    return %c0_i32, %c0_i32_0 : i32, i32
  }
  func.func @transform_2(%arg0: i32) -> (i32, i32) {
    %c0_i32 = arith.constant 0 : i32
    %c0_i32_0 = arith.constant 0 : i32
    %c0_i32_1 = arith.constant 0 : i32
    return %c0_i32, %c0_i32_0 : i32, i32
  }
  func.func @transform_3(%arg0: i32) -> (i32, i32) {
    %c0_i32 = arith.constant 0 : i32
    %c0_i32_0 = arith.constant 0 : i32
    %c0_i32_1 = arith.constant 0 : i32
    return %c0_i32, %c0_i32_0 : i32, i32
  }
  func.func @transform_4(%arg0: i32) -> (i32, i32) {
    %c0_i32 = arith.constant 0 : i32
    %c0_i32_0 = arith.constant 0 : i32
    %c0_i32_1 = arith.constant 0 : i32
    return %c0_i32, %c0_i32_0 : i32, i32
  }
  func.func @transform_5(%arg0: i32) -> (i32, i32) {
    %c0_i32 = arith.constant 0 : i32
    %c0_i32_0 = arith.constant 0 : i32
    return %arg0, %c0_i32 : i32, i32
  }
}

module attributes {stable_mosaic.version = 11 : i64} {
  func.func @_linear_kernel(%arg0: i32, %arg1: memref<16x128xbf16, #tpu.memory_space<vmem>>, %arg2: memref<128x256xbf16, #tpu.memory_space<vmem>>, %arg3: memref<1x256xf32, #tpu.memory_space<vmem>>, %arg4: memref<16x256xbf16, #tpu.memory_space<vmem>>) attributes {dimension_semantics = [#tpu.dimension_semantics<parallel>], iteration_bounds = array<i64: 1>, scalar_prefetch = 0 : i64, scratch_operands = 0 : i64, tpu.core_type = #tpu.core_type<tc>, window_params = [{transform_indices = @transform_0, window_bounds = array<i64: 16, 128>}, {pipeline_mode = #tpu.pipeline_mode<synchronous>, transform_indices = @transform_1, window_bounds = array<i64: 128, 256>}, {pipeline_mode = #tpu.pipeline_mode<synchronous>, transform_indices = @transform_2, window_bounds = array<i64: 1, 256>}, {transform_indices = @transform_3, window_bounds = array<i64: 16, 256>}]} {
    %c0 = arith.constant 0 : index
    %c0_0 = arith.constant 0 : index
    %0 = vector.load %arg1[%c0, %c0_0] : memref<16x128xbf16, #tpu.memory_space<vmem>>, vector<16x128xbf16>
    %c0_1 = arith.constant 0 : index
    %c0_2 = arith.constant 0 : index
    %1 = vector.load %arg2[%c0_1, %c0_2] : memref<128x256xbf16, #tpu.memory_space<vmem>>, vector<128x256xbf16>
    %cst = arith.constant dense<0.000000e+00> : vector<16x256xf32>
    %2 = tpu.matmul %0, %1, %cst {dimension_numbers = #tpu.dot_dimension_numbers<[1], [0], [0], [1], [0, 0, 1, 1], [], []>} : vector<16x128xbf16>, vector<128x256xbf16>, vector<16x256xf32> -> vector<16x256xf32>
    %c0_3 = arith.constant 0 : index
    %c0_4 = arith.constant 0 : index
    %3 = vector.load %arg3[%c0_3, %c0_4] : memref<1x256xf32, #tpu.memory_space<vmem>>, vector<1x256xf32>
    %4 = vector.broadcast %3 : vector<1x256xf32> to vector<16x256xf32>
    %5 = arith.addf %2, %4 : vector<16x256xf32>
    %6 = arith.truncf %5 : vector<16x256xf32> to vector<16x256xbf16>
    %c0_5 = arith.constant 0 : index
    %c0_6 = arith.constant 0 : index
    %7 = vector.load %arg4[%c0_5, %c0_6] : memref<16x256xbf16, #tpu.memory_space<vmem>>, vector<16x256xbf16>
    tpu.vector_store %arg4[%c0_5, %c0_6], %6 {strides = array<i32>} : memref<16x256xbf16, #tpu.memory_space<vmem>>, vector<16x256xbf16>,
    return
  }
  func.func @transform_0(%arg0: i32) -> (i32, i32) {
    %c0_i32 = arith.constant 0 : i32
    %c0_i32_0 = arith.constant 0 : i32
    return %arg0, %c0_i32 : i32, i32
  }
  func.func @transform_1(%arg0: i32) -> (i32, i32) {
    %c0_i32 = arith.constant 0 : i32
    %c0_i32_0 = arith.constant 0 : i32
    %c0_i32_1 = arith.constant 0 : i32
    return %c0_i32, %c0_i32_0 : i32, i32
  }
  func.func @transform_2(%arg0: i32) -> (i32, i32) {
    %c0_i32 = arith.constant 0 : i32
    %c0_i32_0 = arith.constant 0 : i32
    %c0_i32_1 = arith.constant 0 : i32
    return %c0_i32, %c0_i32_0 : i32, i32
  }
  func.func @transform_3(%arg0: i32) -> (i32, i32) {
    %c0_i32 = arith.constant 0 : i32
    %c0_i32_0 = arith.constant 0 : i32
    return %arg0, %c0_i32 : i32, i32
  }
}

module attributes {stable_mosaic.version = 11 : i64} {
  func.func @_fc_head_kernel(%arg0: i32, %arg1: memref<8x384xbf16, #tpu.memory_space<vmem>>, %arg2: memref<384x128xbf16, #tpu.memory_space<vmem>>, %arg3: memref<1x128xf32, #tpu.memory_space<vmem>>, %arg4: memref<1x128xf32, #tpu.memory_space<vmem>>, %arg5: memref<1x128xf32, #tpu.memory_space<vmem>>, %arg6: memref<128x128xbf16, #tpu.memory_space<vmem>>, %arg7: memref<1x128xf32, #tpu.memory_space<vmem>>, %arg8: memref<8x128xf32, #tpu.memory_space<vmem>>) attributes {dimension_semantics = [#tpu.dimension_semantics<parallel>], iteration_bounds = array<i64: 1>, scalar_prefetch = 0 : i64, scratch_operands = 0 : i64, tpu.core_type = #tpu.core_type<tc>, window_params = [{transform_indices = @transform_0, window_bounds = array<i64: 8, 384>}, {pipeline_mode = #tpu.pipeline_mode<synchronous>, transform_indices = @transform_1, window_bounds = array<i64: 384, 128>}, {pipeline_mode = #tpu.pipeline_mode<synchronous>, transform_indices = @transform_2, window_bounds = array<i64: 1, 128>}, {pipeline_mode = #tpu.pipeline_mode<synchronous>, transform_indices = @transform_3, window_bounds = array<i64: 1, 128>}, {pipeline_mode = #tpu.pipeline_mode<synchronous>, transform_indices = @transform_4, window_bounds = array<i64: 1, 128>}, {pipeline_mode = #tpu.pipeline_mode<synchronous>, transform_indices = @transform_5, window_bounds = array<i64: 128, 128>}, {pipeline_mode = #tpu.pipeline_mode<synchronous>, transform_indices = @transform_6, window_bounds = array<i64: 1, 128>}, {transform_indices = @transform_7, window_bounds = array<i64: 8, 128>}]} {
    %c0 = arith.constant 0 : index
    %c0_0 = arith.constant 0 : index
    %0 = vector.load %arg1[%c0, %c0_0] : memref<8x384xbf16, #tpu.memory_space<vmem>>, vector<8x384xbf16>
    %c0_1 = arith.constant 0 : index
    %c0_2 = arith.constant 0 : index
    %1 = vector.load %arg2[%c0_1, %c0_2] : memref<384x128xbf16, #tpu.memory_space<vmem>>, vector<384x128xbf16>
    %cst = arith.constant dense<0.000000e+00> : vector<8x128xf32>
    %2 = tpu.matmul %0, %1, %cst {dimension_numbers = #tpu.dot_dimension_numbers<[1], [0], [0], [1], [0, 0, 1, 1], [], []>} : vector<8x384xbf16>, vector<384x128xbf16>, vector<8x128xf32> -> vector<8x128xf32>
    %c0_3 = arith.constant 0 : index
    %c0_4 = arith.constant 0 : index
    %3 = vector.load %arg3[%c0_3, %c0_4] : memref<1x128xf32, #tpu.memory_space<vmem>>, vector<1x128xf32>
    %4 = vector.broadcast %3 : vector<1x128xf32> to vector<8x128xf32>
    %5 = arith.addf %2, %4 : vector<8x128xf32>
    %cst_5 = arith.constant dense<0.000000e+00> : vector<8xf32>
    %6 = vector.multi_reduction <add>, %5, %cst_5 [1] : vector<8x128xf32> to vector<8xf32>
    %7 = vector.shape_cast %6 : vector<8xf32> to vector<8x1xf32>
    %cst_6 = arith.constant 1.280000e+02 : f32
    %8 = vector.broadcast %cst_6 : f32 to vector<8x1xf32>
    %9 = arith.divf %7, %8 : vector<8x1xf32>
    %10 = vector.broadcast %9 : vector<8x1xf32> to vector<8x128xf32>
    %11 = arith.subf %5, %10 : vector<8x128xf32>
    %12 = arith.mulf %11, %11 : vector<8x128xf32>
    %cst_7 = arith.constant dense<0.000000e+00> : vector<8xf32>
    %13 = vector.multi_reduction <add>, %12, %cst_7 [1] : vector<8x128xf32> to vector<8xf32>
    %14 = vector.shape_cast %13 : vector<8xf32> to vector<8x1xf32>
    %cst_8 = arith.constant 1.280000e+02 : f32
    %15 = vector.broadcast %cst_8 : f32 to vector<8x1xf32>
    %16 = arith.divf %14, %15 : vector<8x1xf32>
    %17 = vector.broadcast %9 : vector<8x1xf32> to vector<8x128xf32>
    %18 = arith.subf %5, %17 : vector<8x128xf32>
    %cst_9 = arith.constant 9.99999974E-6 : f32
    %19 = vector.broadcast %cst_9 : f32 to vector<8x1xf32>
    %20 = arith.addf %16, %19 : vector<8x1xf32>
    %21 = math.rsqrt %20 : vector<8x1xf32>
    %22 = vector.broadcast %21 : vector<8x1xf32> to vector<8x128xf32>
    %23 = arith.mulf %18, %22 : vector<8x128xf32>
    %c0_10 = arith.constant 0 : index
    %c0_11 = arith.constant 0 : index
    %24 = vector.load %arg4[%c0_10, %c0_11] : memref<1x128xf32, #tpu.memory_space<vmem>>, vector<1x128xf32>
    %25 = vector.broadcast %24 : vector<1x128xf32> to vector<8x128xf32>
    %26 = arith.mulf %23, %25 : vector<8x128xf32>
    %c0_12 = arith.constant 0 : index
    %c0_13 = arith.constant 0 : index
    %27 = vector.load %arg5[%c0_12, %c0_13] : memref<1x128xf32, #tpu.memory_space<vmem>>, vector<1x128xf32>
    %28 = vector.broadcast %27 : vector<1x128xf32> to vector<8x128xf32>
    %29 = arith.addf %26, %28 : vector<8x128xf32>
    %cst_14 = arith.constant 5.000000e-01 : f32
    %30 = vector.broadcast %cst_14 : f32 to vector<8x128xf32>
    %31 = arith.mulf %30, %29 : vector<8x128xf32>
    %32 = arith.mulf %29, %29 : vector<8x128xf32>
    %33 = arith.mulf %29, %32 : vector<8x128xf32>
    %cst_15 = arith.constant 4.471500e-02 : f32
    %34 = vector.broadcast %cst_15 : f32 to vector<8x128xf32>
    %35 = arith.mulf %34, %33 : vector<8x128xf32>
    %36 = arith.addf %29, %35 : vector<8x128xf32>
    %cst_16 = arith.constant 0.797884583 : f32
    %37 = vector.broadcast %cst_16 : f32 to vector<8x128xf32>
    %38 = arith.mulf %37, %36 : vector<8x128xf32>
    %39 = math.tanh %38 : vector<8x128xf32>
    %cst_17 = arith.constant 1.000000e+00 : f32
    %40 = vector.broadcast %cst_17 : f32 to vector<8x128xf32>
    %41 = arith.addf %40, %39 : vector<8x128xf32>
    %42 = arith.mulf %31, %41 : vector<8x128xf32>
    %43 = arith.truncf %42 : vector<8x128xf32> to vector<8x128xbf16>
    %c0_18 = arith.constant 0 : index
    %c0_19 = arith.constant 0 : index
    %44 = vector.load %arg6[%c0_18, %c0_19] : memref<128x128xbf16, #tpu.memory_space<vmem>>, vector<128x128xbf16>
    %cst_20 = arith.constant dense<0.000000e+00> : vector<8x128xf32>
    %45 = tpu.matmul %43, %44, %cst_20 {dimension_numbers = #tpu.dot_dimension_numbers<[1], [0], [0], [1], [0, 0, 1, 1], [], []>} : vector<8x128xbf16>, vector<128x128xbf16>, vector<8x128xf32> -> vector<8x128xf32>
    %c0_21 = arith.constant 0 : index
    %c0_22 = arith.constant 0 : index
    %46 = vector.load %arg7[%c0_21, %c0_22] : memref<1x128xf32, #tpu.memory_space<vmem>>, vector<1x128xf32>
    %47 = vector.broadcast %46 : vector<1x128xf32> to vector<8x128xf32>
    %48 = arith.addf %45, %47 : vector<8x128xf32>
    %49 = arith.negf %48 : vector<8x128xf32>
    %50 = math.exp %49 : vector<8x128xf32>
    %cst_23 = arith.constant 1.000000e+00 : f32
    %51 = vector.broadcast %cst_23 : f32 to vector<8x128xf32>
    %52 = arith.addf %51, %50 : vector<8x128xf32>
    %53 = arith.divf %51, %52 : vector<8x128xf32>
    %c0_24 = arith.constant 0 : index
    %c0_25 = arith.constant 0 : index
    %54 = vector.load %arg8[%c0_24, %c0_25] : memref<8x128xf32, #tpu.memory_space<vmem>>, vector<8x128xf32>
    tpu.vector_store %arg8[%c0_24, %c0_25], %53 {strides = array<i32>} : memref<8x128xf32, #tpu.memory_space<vmem>>, vector<8x128xf32>,
    return
  }
  func.func @transform_0(%arg0: i32) -> (i32, i32) {
    %c0_i32 = arith.constant 0 : i32
    %c0_i32_0 = arith.constant 0 : i32
    return %arg0, %c0_i32 : i32, i32
  }
  func.func @transform_1(%arg0: i32) -> (i32, i32) {
    %c0_i32 = arith.constant 0 : i32
    %c0_i32_0 = arith.constant 0 : i32
    %c0_i32_1 = arith.constant 0 : i32
    return %c0_i32, %c0_i32_0 : i32, i32
  }
  func.func @transform_2(%arg0: i32) -> (i32, i32) {
    %c0_i32 = arith.constant 0 : i32
    %c0_i32_0 = arith.constant 0 : i32
    %c0_i32_1 = arith.constant 0 : i32
    return %c0_i32, %c0_i32_0 : i32, i32
  }
  func.func @transform_3(%arg0: i32) -> (i32, i32) {
    %c0_i32 = arith.constant 0 : i32
    %c0_i32_0 = arith.constant 0 : i32
    %c0_i32_1 = arith.constant 0 : i32
    return %c0_i32, %c0_i32_0 : i32, i32
  }
  func.func @transform_4(%arg0: i32) -> (i32, i32) {
    %c0_i32 = arith.constant 0 : i32
    %c0_i32_0 = arith.constant 0 : i32
    %c0_i32_1 = arith.constant 0 : i32
    return %c0_i32, %c0_i32_0 : i32, i32
  }
  func.func @transform_5(%arg0: i32) -> (i32, i32) {
    %c0_i32 = arith.constant 0 : i32
    %c0_i32_0 = arith.constant 0 : i32
    %c0_i32_1 = arith.constant 0 : i32
    return %c0_i32, %c0_i32_0 : i32, i32
  }
  func.func @transform_6(%arg0: i32) -> (i32, i32) {
    %c0_i32 = arith.constant 0 : i32
    %c0_i32_0 = arith.constant 0 : i32
    %c0_i32_1 = arith.constant 0 : i32
    return %c0_i32, %c0_i32_0 : i32, i32
  }
  func.func @transform_7(%arg0: i32) -> (i32, i32) {
    %c0_i32 = arith.constant 0 : i32
    %c0_i32_0 = arith.constant 0 : i32
    return %arg0, %c0_i32 : i32, i32
  }
}

</mosaic_0001>

<llo_original>
// kernel: eq.1
$region0: #{eq.1}
  %s0 = inlined_call_operand.vmem [shape: s32[2,8], index: 0, kind: input, shape index: {}]
  %s1 = inlined_call_operand.vmem [shape: s32[16], index: 1, kind: output, shape index: {}]
  $region1: #{eq.1} parent=0
    #allocation0 [shape = 'u8[4096]{0}', space=vmem, size = 0x1000, scoped, tag = 'scoped mem for output reshape']
    #allocation1 [shape = 'u8[4096]{0}', space=vmem, size = 0x1000, scoped, tag = 'scoped mem for input reshape']
    %s3 = sshllo.u32 0, 2
    %v4 = vld [vmem:[%s0] sm:%s3]
    %5 = vst [vmem:[#allocation1] sm:%s3] %v4
    %v6 = vld [vmem:[#allocation1] sm:$0x1]
    %vm7 = vcmask 64512
    %8 = vst.msk [vmem:[#allocation0] sm:$0x1] %vm7, %v6
    %s9 = scalar_lea.vmem [#allocation1], 1
    %v10 = vld [vmem:[%s9] sm:$0x1]
    %11 = vrot.lane.b32.xlu0 %v10, 8
    %v12 = vpop.permute.xlu0 %11
    %vm13 = vcmask 130112
    %14 = vst.msk [vmem:[#allocation0] sm:$0x1] %vm13, %v12
    %s16 = sshllo.u32 0, 1
    %v18 = vld [vmem:[#allocation0] sm:%s16]
    %s19 = sshllo.u32 0, 1
    %20 = vst [vmem:[%s1] sm:%s19] %v18

// kernel: neg.1
$region0: #{neg.1}
  #allocation0 [shape = 's32[1]{0}', space=sflag, size = 0x4, scoped, tag = 'scoped memory for neg.1']
  %s0 = inlined_call_operand.vmem [shape: f32[2,8,1], index: 0, kind: input, shape index: {}]
  %s1 = inlined_call_operand.vmem [shape: f32[2,8,1], index: 1, kind: output, shape index: {}]
  %v2 = vld [vmem:[%s0] sm:$0x1]
  %3 = xla_tuple %v2
  %4 = xla_tuple %3
  %v5 = vxor.u32 %v2, 2147483648
  %6 = xla_tuple %v5
  %7 = vst [vmem:[%s1] sm:$0x1] %v5
  %s8 = scalar_lea.vmem %s0, 1
  %v9 = vld [vmem:[%s8] sm:$0x1]
  %10 = xla_tuple %v9
  %11 = xla_tuple %10
  %v12 = vxor.u32 %v9, 2147483648
  %13 = xla_tuple %v12
  %s14 = scalar_lea.vmem %s1, 1
  %15 = vst [vmem:[%s14] sm:$0x1] %v12

// kernel: _core_forward.14
$region0: #{_core_forward.14}
  #allocation0 [shape = 'u32[]', space=smem, size = 0x4, offset = 0x4, fixed_abs, tag = 'smem constant byte address 0x4 - core index']
  #allocation1 [shape = 'u32[144,128]{1,0:T(1,128)}', space=vmem, size = 0x12000, scoped, tag = 'internal scratch']
  %s0 = inlined_call_operand.vmem [shape: bf16[16,68], index: 0, kind: input, shape index: {}]
  %s1 = inlined_call_operand.vmem [shape: bf16[68,128], index: 1, kind: input, shape index: {}]
  %s2 = inlined_call_operand.vmem [shape: f32[1,128], index: 2, kind: input, shape index: {}]
  %s3 = inlined_call_operand.vmem [shape: bf16[16,128], index: 3, kind: output, shape index: {}]
  %s4 = sld [smem:[#allocation0]]
  $region22: #{_core_forward.14} parent=0
    _
  %s6 = ssub.s32 1, %s4
  %s7 = scalar_select 0, %s6, %s4
  // Predicated region
  $region2: #{_core_forward.14} parent=0 // pred_check
    _
  $region3: #{_core_forward.14} parent=0 // pred_check_branch
    %9 = sbr.rel (0) target = $region5
  $region4: #{_core_forward.14} parent=0 // pred_region
    _
  $region5: #{_core_forward.14} parent=0 // pred_fallthru
    _
  // Predicated region
  $region6: #{_core_forward.14} parent=0 // pred_check
    _
  $region7: #{_core_forward.14} parent=0 // pred_check_branch
    %11 = sbr.rel (0) target = $region9
  $region8: #{_core_forward.14} parent=0 // pred_region
    _
  $region9: #{_core_forward.14} parent=0 // pred_fallthru
    _
  // Predicated region
  $region10: #{_core_forward.14} parent=0 // pred_check
    _
  $region11: #{_core_forward.14} parent=0 // pred_check_branch
    %13 = sbr.rel (0) target = $region13
  $region12: #{_core_forward.14} parent=0 // pred_region
    _
  $region13: #{_core_forward.14} parent=0 // pred_fallthru
    _
  %v15 = vld [vmem:[%s0] sm:$0xf]
  %v16 = vld [vmem:[%s0 + $0x4] sm:$0xf]
  %v17 = vld [vmem:[%s1] sm:$0xf]
  %v18 = vld [vmem:[%s1 + $0x4] sm:$0xf]
  %v19 = vld [vmem:[%s1 + $0x8] sm:$0xf]
  %v20 = vld [vmem:[%s1 + $0xc] sm:$0xf]
  %v21 = vld [vmem:[%s1 + $0x10] sm:$0xf]
  %v22 = vld [vmem:[%s1 + $0x14] sm:$0xf]
  %v23 = vld [vmem:[%s1 + $0x18] sm:$0xf]
  %v24 = vld [vmem:[%s1 + $0x1c] sm:$0xf]
  %v25 = vld [vmem:[%s1 + $0x20] sm:$0x3]
  %v26 = vld [vmem:[%s2] sm:$0x1]
  %v28 = vlaneseq
  %v29 = vshrl.u32 %v28, 7
  %v30 = vsub.s32 0, %v29
  %v31 = vrot.slane %v26, %v30
  %v35 = vunpack.c.l.b16 %v15
  %v36 = vunpack.c.l.b16 %v16
  %v37 = vpack.c.b16 %v36, %v35
  %v47 = vunpack.c.l.b16 %v17
  %v48 = vunpack.c.l.b16 %v18
  %v49 = vunpack.c.l.b16 %v19
  %v50 = vunpack.c.l.b16 %v20
  %v51 = vunpack.c.l.b16 %v21
  %v52 = vunpack.c.l.b16 %v22
  %v53 = vunpack.c.l.b16 %v23
  %v54 = vunpack.c.l.b16 %v24
  %v55 = vunpack.c.l.b16 %v25
  %v56 = vpack.c.b16 %v48, %v47
  %v57 = vpack.c.b16 %v50, %v49
  %v58 = vpack.c.b16 %v52, %v51
  %v59 = vpack.c.b16 %v54, %v53
  %v60 = vpack.c.b16 %v55, %v55
  %vm65 = vcmask 556032
  %v67 = vsel %vm65, %v37, 0
  %vm69 = vcmask 1041408
  %v71 = vsel %vm69, %v60, 0
  %73 = vmatprep.subr.bf16.mxu0 0
  %74 = vmatpush1.bf16.msra.mxu0 %v56
  %75 = vmatprep.subr.bf16.mxu0 0
  %76 = vmatpush1.bf16.msra.mxu0 %v57
  %77 = vmatprep.subr.bf16.mxu0 0
  %78 = vmatpush1.bf16.msra.mxu0 %v58
  %79 = vmatprep.subr.bf16.mxu0 0
  %80 = vmatpush1.bf16.msra.mxu0 %v59
  %81 = vmatprep.subr.bf16.mxu0 0
  %82 = vmatpush1.bf16.msra.mxu0 %v71
  %83 = vmatprep.subr.bf16.mxu0 0
  %84 = vmatpush1.bf16.msra.mxu0 0
  %85 = vmatprep.subr.bf16.mxu0 0
  %86 = vmatpush1.bf16.msra.mxu0 0
  %87 = vmatprep.subr.bf16.mxu0 0
  %88 = vmatpush1.bf16.msra.mxu0 0
  %89 = vmatprep.subr.bf16.mxu0 0
  %90 = vmatpush1.bf16.msra.mxu0 0
  %91 = vmatprep.subr.bf16.mxu0 0
  %92 = vmatpush1.bf16.msra.mxu0 0
  %93 = vmatprep.subr.bf16.mxu0 0
  %94 = vmatpush1.bf16.msra.mxu0 0
  %95 = vmatprep.subr.bf16.mxu0 0
  %96 = vmatpush1.bf16.msra.mxu0 0
  %97 = vmatprep.subr.bf16.mxu0 0
  %98 = vmatpush1.bf16.msra.mxu0 0
  %99 = vmatprep.subr.bf16.mxu0 0
  %100 = vmatpush1.bf16.msra.mxu0 0
  %101 = vmatprep.subr.bf16.mxu0 0
  %102 = vmatpush1.bf16.msra.mxu0 0
  %103 = vmatprep.subr.bf16.mxu0 0
  %104 = vmatpush1.bf16.msra.mxu0 0
  %105 = vmatprep.mubr.bf16.mxu0 0
  %106 = vmatmul.mubr.bf16.gmra.mrb[0].mxu0 %v67
  %v107 = vpop.f32.mrb[0].mxu0
  %v108 = vadd.f32 %v31, %v107
  %v109 = vpop.f32.mrb[0].mxu0
  %v110 = vpop.f32.mrb[0].mxu0
  %v111 = vadd.f32 %v31, %v110
  %v112 = vpop.f32.mrb[0].mxu0
  %113 = vdwg.mxu0
  %v114 = vmul.f32 %v108, 0.5
  %v115 = vmul.f32 %v111, 0.5
  %v116 = vmul.f32 %v108, %v108
  %v117 = vmul.f32 %v111, %v111
  %v118 = vmul.f32 %v108, %v116
  %v119 = vmul.f32 %v111, %v117
  %v120 = vmul.f32 %v118, 0.044715
  %v121 = vmul.f32 %v119, 0.044715
  %v122 = vadd.f32 %v108, %v120
  %v123 = vadd.f32 %v111, %v121
  %v124 = vmul.f32 %v122, 0.7978846
  %v125 = vmul.f32 %v123, 0.7978846
  %v126 = vtanh.pop %v124
  %v127 = vtanh.pop %v125
  %v128 = vadd.f32 %v126, 1.0
  %v129 = vadd.f32 %v127, 1.0
  %v130 = vmul.f32 %v114, %v128
  %v131 = vmul.f32 %v115, %v129
  %v132 = vpack.c.bf16 %v131, %v130
  %v134 = vunpack.c.l.b16 %v132
  %v135 = vunpack.c.h.b16 %v132
  %v136 = vpack.c.b16 %v134, %v134
  %v137 = vpack.c.b16 %v135, %v135
  %140 = vst [vmem:[%s3] sm:$0xf] %v136
  %141 = vst [vmem:[%s3 + $0x4] sm:$0xf] %v137
  // Predicated region
  $region14: #{_core_forward.14} parent=0 // pred_check
    _
  $region15: #{_core_forward.14} parent=0 // pred_check_branch
    %143 = sbr.rel (0) target = $region17
  $region16: #{_core_forward.14} parent=0 // pred_region
    _
  $region17: #{_core_forward.14} parent=0 // pred_fallthru
    _
  // Predicated region
  $region18: #{_core_forward.14} parent=0 // pred_check
    _
  $region19: #{_core_forward.14} parent=0 // pred_check_branch
    %145 = sbr.rel (0) target = $region21
  $region20: #{_core_forward.14} parent=0 // pred_region
    _
  $region21: #{_core_forward.14} parent=0 // pred_fallthru
    _

// kernel: _core_forward.13
$region0: #{_core_forward.13}
  #allocation0 [shape = 'u32[]', space=smem, size = 0x4, offset = 0x4, fixed_abs, tag = 'smem constant byte address 0x4 - core index']
  #allocation1 [shape = 'u32[144,128]{1,0:T(1,128)}', space=vmem, size = 0x12000, scoped, tag = 'internal scratch']
  %s0 = inlined_call_operand.vmem [shape: bf16[16,128], index: 0, kind: input, shape index: {}]
  %s1 = inlined_call_operand.vmem [shape: bf16[128,128], index: 1, kind: input, shape index: {}]
  %s2 = inlined_call_operand.vmem [shape: f32[1,128], index: 2, kind: input, shape index: {}]
  %s3 = inlined_call_operand.vmem [shape: bf16[16,128], index: 3, kind: output, shape index: {}]
  %s4 = sld [smem:[#allocation0]]
  $region22: #{_core_forward.13} parent=0
    _
  %s6 = ssub.s32 1, %s4
  %s7 = scalar_select 0, %s6, %s4
  // Predicated region
  $region2: #{_core_forward.13} parent=0 // pred_check
    _
  $region3: #{_core_forward.13} parent=0 // pred_check_branch
    %9 = sbr.rel (0) target = $region5
  $region4: #{_core_forward.13} parent=0 // pred_region
    _
  $region5: #{_core_forward.13} parent=0 // pred_fallthru
    _
  // Predicated region
  $region6: #{_core_forward.13} parent=0 // pred_check
    _
  $region7: #{_core_forward.13} parent=0 // pred_check_branch
    %11 = sbr.rel (0) target = $region9
  $region8: #{_core_forward.13} parent=0 // pred_region
    _
  $region9: #{_core_forward.13} parent=0 // pred_fallthru
    _
  // Predicated region
  $region10: #{_core_forward.13} parent=0 // pred_check
    _
  $region11: #{_core_forward.13} parent=0 // pred_check_branch
    %13 = sbr.rel (0) target = $region13
  $region12: #{_core_forward.13} parent=0 // pred_region
    _
  $region13: #{_core_forward.13} parent=0 // pred_fallthru
    _
  %v15 = vld [vmem:[%s0] sm:$0xf]
  %v16 = vld [vmem:[%s0 + $0x4] sm:$0xf]
  %v17 = vld [vmem:[%s1] sm:$0xf]
  %v18 = vld [vmem:[%s1 + $0x4] sm:$0xf]
  %v19 = vld [vmem:[%s1 + $0x8] sm:$0xf]
  %v20 = vld [vmem:[%s1 + $0xc] sm:$0xf]
  %v21 = vld [vmem:[%s1 + $0x10] sm:$0xf]
  %v22 = vld [vmem:[%s1 + $0x14] sm:$0xf]
  %v23 = vld [vmem:[%s1 + $0x18] sm:$0xf]
  %v24 = vld [vmem:[%s1 + $0x1c] sm:$0xf]
  %v25 = vld [vmem:[%s1 + $0x20] sm:$0xf]
  %v26 = vld [vmem:[%s1 + $0x24] sm:$0xf]
  %v27 = vld [vmem:[%s1 + $0x28] sm:$0xf]
  %v28 = vld [vmem:[%s1 + $0x2c] sm:$0xf]
  %v29 = vld [vmem:[%s1 + $0x30] sm:$0xf]
  %v30 = vld [vmem:[%s1 + $0x34] sm:$0xf]
  %v31 = vld [vmem:[%s1 + $0x38] sm:$0xf]
  %v32 = vld [vmem:[%s1 + $0x3c] sm:$0xf]
  %v33 = vld [vmem:[%s2] sm:$0x1]
  %v35 = vlaneseq
  %v36 = vshrl.u32 %v35, 7
  %v37 = vsub.s32 0, %v36
  %v38 = vrot.slane %v33, %v37
  %v42 = vunpack.c.l.b16 %v15
  %v43 = vunpack.c.l.b16 %v16
  %v44 = vpack.c.b16 %v43, %v42
  %v62 = vunpack.c.l.b16 %v17
  %v63 = vunpack.c.l.b16 %v18
  %v64 = vunpack.c.l.b16 %v19
  %v65 = vunpack.c.l.b16 %v20
  %v66 = vunpack.c.l.b16 %v21
  %v67 = vunpack.c.l.b16 %v22
  %v68 = vunpack.c.l.b16 %v23
  %v69 = vunpack.c.l.b16 %v24
  %v70 = vunpack.c.l.b16 %v25
  %v71 = vunpack.c.l.b16 %v26
  %v72 = vunpack.c.l.b16 %v27
  %v73 = vunpack.c.l.b16 %v28
  %v74 = vunpack.c.l.b16 %v29
  %v75 = vunpack.c.l.b16 %v30
  %v76 = vunpack.c.l.b16 %v31
  %v77 = vunpack.c.l.b16 %v32
  %v78 = vpack.c.b16 %v63, %v62
  %v79 = vpack.c.b16 %v65, %v64
  %v80 = vpack.c.b16 %v67, %v66
  %v81 = vpack.c.b16 %v69, %v68
  %v82 = vpack.c.b16 %v71, %v70
  %v83 = vpack.c.b16 %v73, %v72
  %v84 = vpack.c.b16 %v75, %v74
  %v85 = vpack.c.b16 %v77, %v76
  %94 = vmatprep.subr.bf16.mxu0 0
  %95 = vmatpush1.bf16.msra.mxu0 %v78
  %96 = vmatprep.subr.bf16.mxu0 0
  %97 = vmatpush1.bf16.msra.mxu0 %v79
  %98 = vmatprep.subr.bf16.mxu0 0
  %99 = vmatpush1.bf16.msra.mxu0 %v80
  %100 = vmatprep.subr.bf16.mxu0 0
  %101 = vmatpush1.bf16.msra.mxu0 %v81
  %102 = vmatprep.subr.bf16.mxu0 0
  %103 = vmatpush1.bf16.msra.mxu0 %v82
  %104 = vmatprep.subr.bf16.mxu0 0
  %105 = vmatpush1.bf16.msra.mxu0 %v83
  %106 = vmatprep.subr.bf16.mxu0 0
  %107 = vmatpush1.bf16.msra.mxu0 %v84
  %108 = vmatprep.subr.bf16.mxu0 0
  %109 = vmatpush1.bf16.msra.mxu0 %v85
  %110 = vmatprep.subr.bf16.mxu0 0
  %111 = vmatpush1.bf16.msra.mxu0 0
  %112 = vmatprep.subr.bf16.mxu0 0
  %113 = vmatpush1.bf16.msra.mxu0 0
  %114 = vmatprep.subr.bf16.mxu0 0
  %115 = vmatpush1.bf16.msra.mxu0 0
  %116 = vmatprep.subr.bf16.mxu0 0
  %117 = vmatpush1.bf16.msra.mxu0 0
  %118 = vmatprep.subr.bf16.mxu0 0
  %119 = vmatpush1.bf16.msra.mxu0 0
  %120 = vmatprep.subr.bf16.mxu0 0
  %121 = vmatpush1.bf16.msra.mxu0 0
  %122 = vmatprep.subr.bf16.mxu0 0
  %123 = vmatpush1.bf16.msra.mxu0 0
  %124 = vmatprep.subr.bf16.mxu0 0
  %125 = vmatpush1.bf16.msra.mxu0 0
  %126 = vmatprep.mubr.bf16.mxu0 0
  %127 = vmatmul.mubr.bf16.gmra.mrb[0].mxu0 %v44
  %v128 = vpop.f32.mrb[0].mxu0
  %v129 = vadd.f32 %v38, %v128
  %v130 = vpop.f32.mrb[0].mxu0
  %v131 = vpop.f32.mrb[0].mxu0
  %v132 = vadd.f32 %v38, %v131
  %v133 = vpop.f32.mrb[0].mxu0
  %134 = vdwg.mxu0
  %v135 = vmul.f32 %v129, 0.5
  %v136 = vmul.f32 %v132, 0.5
  %v137 = vmul.f32 %v129, %v129
  %v138 = vmul.f32 %v132, %v132
  %v139 = vmul.f32 %v129, %v137
  %v140 = vmul.f32 %v132, %v138
  %v141 = vmul.f32 %v139, 0.044715
  %v142 = vmul.f32 %v140, 0.044715
  %v143 = vadd.f32 %v129, %v141
  %v144 = vadd.f32 %v132, %v142
  %v145 = vmul.f32 %v143, 0.7978846
  %v146 = vmul.f32 %v144, 0.7978846
  %v147 = vtanh.pop %v145
  %v148 = vtanh.pop %v146
  %v149 = vadd.f32 %v147, 1.0
  %v150 = vadd.f32 %v148, 1.0
  %v151 = vmul.f32 %v135, %v149
  %v152 = vmul.f32 %v136, %v150
  %v153 = vpack.c.bf16 %v152, %v151
  %v155 = vunpack.c.l.b16 %v153
  %v156 = vunpack.c.h.b16 %v153
  %v157 = vpack.c.b16 %v155, %v155
  %v158 = vpack.c.b16 %v156, %v156
  %161 = vst [vmem:[%s3] sm:$0xf] %v157
  %162 = vst [vmem:[%s3 + $0x4] sm:$0xf] %v158
  // Predicated region
  $region14: #{_core_forward.13} parent=0 // pred_check
    _
  $region15: #{_core_forward.13} parent=0 // pred_check_branch
    %164 = sbr.rel (0) target = $region17
  $region16: #{_core_forward.13} parent=0 // pred_region
    _
  $region17: #{_core_forward.13} parent=0 // pred_fallthru
    _
  // Predicated region
  $region18: #{_core_forward.13} parent=0 // pred_check
    _
  $region19: #{_core_forward.13} parent=0 // pred_check_branch
    %166 = sbr.rel (0) target = $region21
  $region20: #{_core_forward.13} parent=0 // pred_region
    _
  $region21: #{_core_forward.13} parent=0 // pred_fallthru
    _

// kernel: _core_forward.11
$region0: #{_core_forward.11}
  #allocation0 [shape = 'u32[]', space=smem, size = 0x4, offset = 0x4, fixed_abs, tag = 'smem constant byte address 0x4 - core index']
  #allocation1 [shape = 'u32[144,128]{1,0:T(1,128)}', space=vmem, size = 0x12000, scoped, tag = 'internal scratch']
  %s0 = inlined_call_operand.vmem [shape: bf16[8,128], index: 0, kind: input, shape index: {}]
  %s1 = inlined_call_operand.vmem [shape: bf16[128,128], index: 1, kind: input, shape index: {}]
  %s2 = inlined_call_operand.vmem [shape: f32[1,128], index: 2, kind: input, shape index: {}]
  %s3 = inlined_call_operand.vmem [shape: bf16[8,128], index: 3, kind: output, shape index: {}]
  %s4 = sld [smem:[#allocation0]]
  $region22: #{_core_forward.11} parent=0
    _
  %s6 = ssub.s32 1, %s4
  %s7 = scalar_select 0, %s6, %s4
  // Predicated region
  $region2: #{_core_forward.11} parent=0 // pred_check
    _
  $region3: #{_core_forward.11} parent=0 // pred_check_branch
    %9 = sbr.rel (0) target = $region5
  $region4: #{_core_forward.11} parent=0 // pred_region
    _
  $region5: #{_core_forward.11} parent=0 // pred_fallthru
    _
  // Predicated region
  $region6: #{_core_forward.11} parent=0 // pred_check
    _
  $region7: #{_core_forward.11} parent=0 // pred_check_branch
    %11 = sbr.rel (0) target = $region9
  $region8: #{_core_forward.11} parent=0 // pred_region
    _
  $region9: #{_core_forward.11} parent=0 // pred_fallthru
    _
  // Predicated region
  $region10: #{_core_forward.11} parent=0 // pred_check
    _
  $region11: #{_core_forward.11} parent=0 // pred_check_branch
    %13 = sbr.rel (0) target = $region13
  $region12: #{_core_forward.11} parent=0 // pred_region
    _
  $region13: #{_core_forward.11} parent=0 // pred_fallthru
    _
  %v15 = vld [vmem:[%s0] sm:$0xf]
  %v16 = vld [vmem:[%s1] sm:$0xf]
  %v17 = vld [vmem:[%s1 + $0x4] sm:$0xf]
  %v18 = vld [vmem:[%s1 + $0x8] sm:$0xf]
  %v19 = vld [vmem:[%s1 + $0xc] sm:$0xf]
  %v20 = vld [vmem:[%s1 + $0x10] sm:$0xf]
  %v21 = vld [vmem:[%s1 + $0x14] sm:$0xf]
  %v22 = vld [vmem:[%s1 + $0x18] sm:$0xf]
  %v23 = vld [vmem:[%s1 + $0x1c] sm:$0xf]
  %v24 = vld [vmem:[%s1 + $0x20] sm:$0xf]
  %v25 = vld [vmem:[%s1 + $0x24] sm:$0xf]
  %v26 = vld [vmem:[%s1 + $0x28] sm:$0xf]
  %v27 = vld [vmem:[%s1 + $0x2c] sm:$0xf]
  %v28 = vld [vmem:[%s1 + $0x30] sm:$0xf]
  %v29 = vld [vmem:[%s1 + $0x34] sm:$0xf]
  %v30 = vld [vmem:[%s1 + $0x38] sm:$0xf]
  %v31 = vld [vmem:[%s1 + $0x3c] sm:$0xf]
  %v32 = vld [vmem:[%s2] sm:$0x1]
  %v34 = vlaneseq
  %v35 = vshrl.u32 %v34, 7
  %v36 = vsub.s32 0, %v35
  %v37 = vrot.slane %v32, %v36
  %v55 = vunpack.c.l.b16 %v16
  %v56 = vunpack.c.l.b16 %v17
  %v57 = vunpack.c.l.b16 %v18
  %v58 = vunpack.c.l.b16 %v19
  %v59 = vunpack.c.l.b16 %v20
  %v60 = vunpack.c.l.b16 %v21
  %v61 = vunpack.c.l.b16 %v22
  %v62 = vunpack.c.l.b16 %v23
  %v63 = vunpack.c.l.b16 %v24
  %v64 = vunpack.c.l.b16 %v25
  %v65 = vunpack.c.l.b16 %v26
  %v66 = vunpack.c.l.b16 %v27
  %v67 = vunpack.c.l.b16 %v28
  %v68 = vunpack.c.l.b16 %v29
  %v69 = vunpack.c.l.b16 %v30
  %v70 = vunpack.c.l.b16 %v31
  %v71 = vpack.c.b16 %v56, %v55
  %v72 = vpack.c.b16 %v58, %v57
  %v73 = vpack.c.b16 %v60, %v59
  %v74 = vpack.c.b16 %v62, %v61
  %v75 = vpack.c.b16 %v64, %v63
  %v76 = vpack.c.b16 %v66, %v65
  %v77 = vpack.c.b16 %v68, %v67
  %v78 = vpack.c.b16 %v70, %v69
  %87 = vmatprep.subr.bf16.mxu0 0
  %88 = vmatpush1.bf16.msra.mxu0 %v71
  %89 = vmatprep.subr.bf16.mxu0 0
  %90 = vmatpush1.bf16.msra.mxu0 %v72
  %91 = vmatprep.subr.bf16.mxu0 0
  %92 = vmatpush1.bf16.msra.mxu0 %v73
  %93 = vmatprep.subr.bf16.mxu0 0
  %94 = vmatpush1.bf16.msra.mxu0 %v74
  %95 = vmatprep.subr.bf16.mxu0 0
  %96 = vmatpush1.bf16.msra.mxu0 %v75
  %97 = vmatprep.subr.bf16.mxu0 0
  %98 = vmatpush1.bf16.msra.mxu0 %v76
  %99 = vmatprep.subr.bf16.mxu0 0
  %100 = vmatpush1.bf16.msra.mxu0 %v77
  %101 = vmatprep.subr.bf16.mxu0 0
  %102 = vmatpush1.bf16.msra.mxu0 %v78
  %103 = vmatprep.subr.bf16.mxu0 0
  %104 = vmatpush1.bf16.msra.mxu0 0
  %105 = vmatprep.subr.bf16.mxu0 0
  %106 = vmatpush1.bf16.msra.mxu0 0
  %107 = vmatprep.subr.bf16.mxu0 0
  %108 = vmatpush1.bf16.msra.mxu0 0
  %109 = vmatprep.subr.bf16.mxu0 0
  %110 = vmatpush1.bf16.msra.mxu0 0
  %111 = vmatprep.subr.bf16.mxu0 0
  %112 = vmatpush1.bf16.msra.mxu0 0
  %113 = vmatprep.subr.bf16.mxu0 0
  %114 = vmatpush1.bf16.msra.mxu0 0
  %115 = vmatprep.subr.bf16.mxu0 0
  %116 = vmatpush1.bf16.msra.mxu0 0
  %117 = vmatprep.subr.bf16.mxu0 0
  %118 = vmatpush1.bf16.msra.mxu0 0
  %119 = vmatprep.mubr.bf16.mxu0 0
  %120 = vmatmul.mubr.bf16.gmra.mrb[0].mxu0 %v15
  %v121 = vpop.f32.mrb[0].mxu0
  %v122 = vadd.f32 %v37, %v121
  %v123 = vpop.f32.mrb[0].mxu0
  %v124 = vpop.f32.mrb[0].mxu0
  %v125 = vpop.f32.mrb[0].mxu0
  %126 = vdwg.mxu0
  %v127 = vmul.f32 %v122, 0.5
  %v128 = vmul.f32 %v122, %v122
  %v129 = vmul.f32 %v122, %v128
  %v130 = vmul.f32 %v129, 0.044715
  %v131 = vadd.f32 %v122, %v130
  %v132 = vmul.f32 %v131, 0.7978846
  %v133 = vtanh.pop %v132
  %v134 = vadd.f32 %v133, 1.0
  %v135 = vmul.f32 %v127, %v134
  %v136 = vpack.c.bf16 %v135, %v135
  %137 = vst [vmem:[%s3] sm:$0xf] %v136
  // Predicated region
  $region14: #{_core_forward.11} parent=0 // pred_check
    _
  $region15: #{_core_forward.11} parent=0 // pred_check_branch
    %139 = sbr.rel (0) target = $region17
  $region16: #{_core_forward.11} parent=0 // pred_region
    _
  $region17: #{_core_forward.11} parent=0 // pred_fallthru
    _
  // Predicated region
  $region18: #{_core_forward.11} parent=0 // pred_check
    _
  $region19: #{_core_forward.11} parent=0 // pred_check_branch
    %141 = sbr.rel (0) target = $region21
  $region20: #{_core_forward.11} parent=0 // pred_region
    _
  $region21: #{_core_forward.11} parent=0 // pred_fallthru
    _

// kernel: _core_forward.12
$region0: #{_core_forward.12}
  #allocation0 [shape = 'u32[]', space=smem, size = 0x4, offset = 0x4, fixed_abs, tag = 'smem constant byte address 0x4 - core index']
  #allocation1 [shape = 'u32[144,128]{1,0:T(1,128)}', space=vmem, size = 0x12000, scoped, tag = 'internal scratch']
  %s0 = inlined_call_operand.vmem [shape: bf16[8,128], index: 0, kind: input, shape index: {}]
  %s1 = inlined_call_operand.vmem [shape: bf16[128,256], index: 1, kind: input, shape index: {}]
  %s2 = inlined_call_operand.vmem [shape: f32[1,256], index: 2, kind: input, shape index: {}]
  %s3 = inlined_call_operand.vmem [shape: bf16[8,256], index: 3, kind: output, shape index: {}]
  %s4 = sld [smem:[#allocation0]]
  $region22: #{_core_forward.12} parent=0
    _
  %s6 = ssub.s32 1, %s4
  %s7 = scalar_select 0, %s6, %s4
  // Predicated region
  $region2: #{_core_forward.12} parent=0 // pred_check
    _
  $region3: #{_core_forward.12} parent=0 // pred_check_branch
    %9 = sbr.rel (0) target = $region5
  $region4: #{_core_forward.12} parent=0 // pred_region
    _
  $region5: #{_core_forward.12} parent=0 // pred_fallthru
    _
  // Predicated region
  $region6: #{_core_forward.12} parent=0 // pred_check
    _
  $region7: #{_core_forward.12} parent=0 // pred_check_branch
    %11 = sbr.rel (0) target = $region9
  $region8: #{_core_forward.12} parent=0 // pred_region
    _
  $region9: #{_core_forward.12} parent=0 // pred_fallthru
    _
  // Predicated region
  $region10: #{_core_forward.12} parent=0 // pred_check
    _
  $region11: #{_core_forward.12} parent=0 // pred_check_branch
    %13 = sbr.rel (0) target = $region13
  $region12: #{_core_forward.12} parent=0 // pred_region
    _
  $region13: #{_core_forward.12} parent=0 // pred_fallthru
    _
  %v15 = vld [vmem:[%s0] sm:$0xf]
  %v16 = vld [vmem:[%s1] sm:$0xff]
  %v17 = vld [vmem:[%s1 + $0x8] sm:$0xff]
  %v18 = vld [vmem:[%s1 + $0x10] sm:$0xff]
  %v19 = vld [vmem:[%s1 + $0x18] sm:$0xff]
  %v20 = vld [vmem:[%s1 + $0x20] sm:$0xff]
  %v21 = vld [vmem:[%s1 + $0x28] sm:$0xff]
  %v22 = vld [vmem:[%s1 + $0x30] sm:$0xff]
  %v23 = vld [vmem:[%s1 + $0x38] sm:$0xff]
  %v24 = vld [vmem:[%s1 + $0x40] sm:$0xff]
  %v25 = vld [vmem:[%s1 + $0x48] sm:$0xff]
  %v26 = vld [vmem:[%s1 + $0x50] sm:$0xff]
  %v27 = vld [vmem:[%s1 + $0x58] sm:$0xff]
  %v28 = vld [vmem:[%s1 + $0x60] sm:$0xff]
  %v29 = vld [vmem:[%s1 + $0x68] sm:$0xff]
  %v30 = vld [vmem:[%s1 + $0x70] sm:$0xff]
  %v31 = vld [vmem:[%s1 + $0x78] sm:$0xff]
  %v32 = vld [vmem:[%s2] sm:$0x3]
  %v34 = vlaneseq
  %v35 = vshrl.u32 %v34, 7
  %v36 = vsub.s32 0, %v35
  %v37 = vrot.slane %v32, %v36
  %v38 = vlaneseq
  %v39 = vshrl.u32 %v38, 7
  %v40 = vsub.s32 1, %v39
  %v41 = vrot.slane %v32, %v40
  %v60 = vunpack.c.l.b16 %v16
  %v61 = vunpack.c.h.b16 %v16
  %v62 = vunpack.c.l.b16 %v17
  %v63 = vunpack.c.h.b16 %v17
  %v64 = vunpack.c.l.b16 %v18
  %v65 = vunpack.c.h.b16 %v18
  %v66 = vunpack.c.l.b16 %v19
  %v67 = vunpack.c.h.b16 %v19
  %v68 = vunpack.c.l.b16 %v20
  %v69 = vunpack.c.h.b16 %v20
  %v70 = vunpack.c.l.b16 %v21
  %v71 = vunpack.c.h.b16 %v21
  %v72 = vunpack.c.l.b16 %v22
  %v73 = vunpack.c.h.b16 %v22
  %v74 = vunpack.c.l.b16 %v23
  %v75 = vunpack.c.h.b16 %v23
  %v76 = vunpack.c.l.b16 %v24
  %v77 = vunpack.c.h.b16 %v24
  %v78 = vunpack.c.l.b16 %v25
  %v79 = vunpack.c.h.b16 %v25
  %v80 = vunpack.c.l.b16 %v26
  %v81 = vunpack.c.h.b16 %v26
  %v82 = vunpack.c.l.b16 %v27
  %v83 = vunpack.c.h.b16 %v27
  %v84 = vunpack.c.l.b16 %v28
  %v85 = vunpack.c.h.b16 %v28
  %v86 = vunpack.c.l.b16 %v29
  %v87 = vunpack.c.h.b16 %v29
  %v88 = vunpack.c.l.b16 %v30
  %v89 = vunpack.c.h.b16 %v30
  %v90 = vunpack.c.l.b16 %v31
  %v91 = vunpack.c.h.b16 %v31
  %v92 = vpack.c.b16 %v62, %v60
  %v93 = vpack.c.b16 %v63, %v61
  %v94 = vpack.c.b16 %v66, %v64
  %v95 = vpack.c.b16 %v67, %v65
  %v96 = vpack.c.b16 %v70, %v68
  %v97 = vpack.c.b16 %v71, %v69
  %v98 = vpack.c.b16 %v74, %v72
  %v99 = vpack.c.b16 %v75, %v73
  %v100 = vpack.c.b16 %v78, %v76
  %v101 = vpack.c.b16 %v79, %v77
  %v102 = vpack.c.b16 %v82, %v80
  %v103 = vpack.c.b16 %v83, %v81
  %v104 = vpack.c.b16 %v86, %v84
  %v105 = vpack.c.b16 %v87, %v85
  %v106 = vpack.c.b16 %v90, %v88
  %v107 = vpack.c.b16 %v91, %v89
  %124 = vmatprep.subr.bf16.mxu0 %v93
  %125 = vmatpush1.bf16.msra.mxu0 %v92
  %126 = vmatprep.subr.bf16.mxu0 %v95
  %127 = vmatpush1.bf16.msra.mxu0 %v94
  %128 = vmatprep.subr.bf16.mxu0 %v97
  %129 = vmatpush1.bf16.msra.mxu0 %v96
  %130 = vmatprep.subr.bf16.mxu0 %v99
  %131 = vmatpush1.bf16.msra.mxu0 %v98
  %132 = vmatprep.subr.bf16.mxu0 %v101
  %133 = vmatpush1.bf16.msra.mxu0 %v100
  %134 = vmatprep.subr.bf16.mxu0 %v103
  %135 = vmatpush1.bf16.msra.mxu0 %v102
  %136 = vmatprep.subr.bf16.mxu0 %v105
  %137 = vmatpush1.bf16.msra.mxu0 %v104
  %138 = vmatprep.subr.bf16.mxu0 %v107
  %139 = vmatpush1.bf16.msra.mxu0 %v106
  %140 = vmatprep.subr.bf16.mxu0 0
  %141 = vmatpush1.bf16.msra.mxu0 0
  %142 = vmatprep.subr.bf16.mxu0 0
  %143 = vmatpush1.bf16.msra.mxu0 0
  %144 = vmatprep.subr.bf16.mxu0 0
  %145 = vmatpush1.bf16.msra.mxu0 0
  %146 = vmatprep.subr.bf16.mxu0 0
  %147 = vmatpush1.bf16.msra.mxu0 0
  %148 = vmatprep.subr.bf16.mxu0 0
  %149 = vmatpush1.bf16.msra.mxu0 0
  %150 = vmatprep.subr.bf16.mxu0 0
  %151 = vmatpush1.bf16.msra.mxu0 0
  %152 = vmatprep.subr.bf16.mxu0 0
  %153 = vmatpush1.bf16.msra.mxu0 0
  %154 = vmatprep.subr.bf16.mxu0 0
  %155 = vmatpush1.bf16.msra.mxu0 0
  %156 = vmatprep.mubr.bf16.mxu0 0
  %157 = vmatmul.mubr.bf16.gmra.mrb[0].mxu0 %v15
  %v158 = vpop.f32.mrb[0].mxu0
  %v159 = vadd.f32 %v37, %v158
  %v160 = vpop.f32.mrb[0].mxu0
  %v161 = vadd.f32 %v41, %v160
  %v162 = vpop.f32.mrb[0].mxu0
  %v163 = vpop.f32.mrb[0].mxu0
  %164 = vdwg.mxu0
  %v165 = vmul.f32 %v159, 0.5
  %v166 = vmul.f32 %v161, 0.5
  %v167 = vmul.f32 %v159, %v159
  %v168 = vmul.f32 %v161, %v161
  %v169 = vmul.f32 %v159, %v167
  %v170 = vmul.f32 %v161, %v168
  %v171 = vmul.f32 %v169, 0.044715
  %v172 = vmul.f32 %v170, 0.044715
  %v173 = vadd.f32 %v159, %v171
  %v174 = vadd.f32 %v161, %v172
  %v175 = vmul.f32 %v173, 0.7978846
  %v176 = vmul.f32 %v174, 0.7978846
  %v177 = vtanh.pop %v175
  %v178 = vtanh.pop %v176
  %v179 = vadd.f32 %v177, 1.0
  %v180 = vadd.f32 %v178, 1.0
  %v181 = vmul.f32 %v165, %v179
  %v182 = vmul.f32 %v166, %v180
  %v183 = vlaneseq
  %v184 = vand.u32 %v183, 127
  %v185 = vadd.s32 %v184, 128
  %vm186 = vcmp.lt.s32.totalorder %v184, 128
  %vm187 = vcmp.lt.s32.totalorder %v185, 128
  %v188 = vsel %vm186, %v181, %v159
  %v189 = vsel %vm187, %v182, %v161
  %v190 = vpack.c.bf16 %v188, %v188
  %v191 = vpack.c.bf16 %v189, %v189
  %v194 = vunpack.c.l.b16 %v190
  %v195 = vunpack.c.l.b16 %v191
  %v196 = vpack.c.b16 %v195, %v194
  %198 = vst [vmem:[%s3] sm:$0xff] %v196
  // Predicated region
  $region14: #{_core_forward.12} parent=0 // pred_check
    _
  $region15: #{_core_forward.12} parent=0 // pred_check_branch
    %200 = sbr.rel (0) target = $region17
  $region16: #{_core_forward.12} parent=0 // pred_region
    _
  $region17: #{_core_forward.12} parent=0 // pred_fallthru
    _
  // Predicated region
  $region18: #{_core_forward.12} parent=0 // pred_check
    _
  $region19: #{_core_forward.12} parent=0 // pred_check_branch
    %202 = sbr.rel (0) target = $region21
  $region20: #{_core_forward.12} parent=0 // pred_region
    _
  $region21: #{_core_forward.12} parent=0 // pred_fallthru
    _

// kernel: _core_forward.15
$region0: #{_core_forward.15}
  #allocation0 [shape = 'u32[]', space=smem, size = 0x4, offset = 0x4, fixed_abs, tag = 'smem constant byte address 0x4 - core index']
  #allocation1 [shape = 'u32[144,128]{1,0:T(1,128)}', space=vmem, size = 0x12000, scoped, tag = 'internal scratch']
  %s0 = inlined_call_operand.vmem [shape: bf16[32,256], index: 0, kind: input, shape index: {}]
  %s1 = inlined_call_operand.vmem [shape: bf16[32,256], index: 1, kind: input, shape index: {}]
  %s2 = inlined_call_operand.vmem [shape: bf16[32,12], index: 2, kind: input, shape index: {}]
  %s3 = inlined_call_operand.vmem [shape: bf16[12,128], index: 3, kind: input, shape index: {}]
  %s4 = inlined_call_operand.vmem [shape: f32[1,128], index: 4, kind: input, shape index: {}]
  %s5 = inlined_call_operand.vmem [shape: bf16[128,128], index: 5, kind: input, shape index: {}]
  %s6 = inlined_call_operand.vmem [shape: f32[1,128], index: 6, kind: input, shape index: {}]
  %s7 = inlined_call_operand.vmem [shape: bf16[256,128], index: 7, kind: input, shape index: {}]
  %s8 = inlined_call_operand.vmem [shape: f32[1,128], index: 8, kind: input, shape index: {}]
  %s9 = inlined_call_operand.vmem [shape: bf16[128,256], index: 9, kind: input, shape index: {}]
  %s10 = inlined_call_operand.vmem [shape: bf16[256,256], index: 10, kind: input, shape index: {}]
  %s11 = inlined_call_operand.vmem [shape: f32[1,256], index: 11, kind: input, shape index: {}]
  %s12 = inlined_call_operand.vmem [shape: bf16[32,256], index: 12, kind: output, shape index: {}]
  %s13 = sld [smem:[#allocation0]]
  $region58: #{_core_forward.15} parent=0
    _
  %s15 = ssub.s32 1, %s13
  %s16 = scalar_select 0, %s15, %s13
  // Predicated region
  $region2: #{_core_forward.15} parent=0 // pred_check
    _
  $region3: #{_core_forward.15} parent=0 // pred_check_branch
    %18 = sbr.rel (0) target = $region5
  $region4: #{_core_forward.15} parent=0 // pred_region
    _
  $region5: #{_core_forward.15} parent=0 // pred_fallthru
    _
  // Predicated region
  $region6: #{_core_forward.15} parent=0 // pred_check
    _
  $region7: #{_core_forward.15} parent=0 // pred_check_branch
    %20 = sbr.rel (0) target = $region9
  $region8: #{_core_forward.15} parent=0 // pred_region
    _
  $region9: #{_core_forward.15} parent=0 // pred_fallthru
    _
  // Predicated region
  $region10: #{_core_forward.15} parent=0 // pred_check
    _
  $region11: #{_core_forward.15} parent=0 // pred_check_branch
    %22 = sbr.rel (0) target = $region13
  $region12: #{_core_forward.15} parent=0 // pred_region
    _
  $region13: #{_core_forward.15} parent=0 // pred_fallthru
    _
  // Predicated region
  $region14: #{_core_forward.15} parent=0 // pred_check
    _
  $region15: #{_core_forward.15} parent=0 // pred_check_branch
    %24 = sbr.rel (0) target = $region17
  $region16: #{_core_forward.15} parent=0 // pred_region
    _
  $region17: #{_core_forward.15} parent=0 // pred_fallthru
    _
  // Predicated region
  $region18: #{_core_forward.15} parent=0 // pred_check
    _
  $region19: #{_core_forward.15} parent=0 // pred_check_branch
    %26 = sbr.rel (0) target = $region21
  $region20: #{_core_forward.15} parent=0 // pred_region
    _
  $region21: #{_core_forward.15} parent=0 // pred_fallthru
    _
  // Predicated region
  $region22: #{_core_forward.15} parent=0 // pred_check
    _
  $region23: #{_core_forward.15} parent=0 // pred_check_branch
    %28 = sbr.rel (0) target = $region25
  $region24: #{_core_forward.15} parent=0 // pred_region
    _
  $region25: #{_core_forward.15} parent=0 // pred_fallthru
    _
  // Predicated region
  $region26: #{_core_forward.15} parent=0 // pred_check
    _
  $region27: #{_core_forward.15} parent=0 // pred_check_branch
    %30 = sbr.rel (0) target = $region29
  $region28: #{_core_forward.15} parent=0 // pred_region
    _
  $region29: #{_core_forward.15} parent=0 // pred_fallthru
    _
  // Predicated region
  $region30: #{_core_forward.15} parent=0 // pred_check
    _
  $region31: #{_core_forward.15} parent=0 // pred_check_branch
    %32 = sbr.rel (0) target = $region33
  $region32: #{_core_forward.15} parent=0 // pred_region
    _
  $region33: #{_core_forward.15} parent=0 // pred_fallthru
    _
  // Predicated region
  $region34: #{_core_forward.15} parent=0 // pred_check
    _
  $region35: #{_core_forward.15} parent=0 // pred_check_branch
    %34 = sbr.rel (0) target = $region37
  $region36: #{_core_forward.15} parent=0 // pred_region
    _
  $region37: #{_core_forward.15} parent=0 // pred_fallthru
    _
  // Predicated region
  $region38: #{_core_forward.15} parent=0 // pred_check
    _
  $region39: #{_core_forward.15} parent=0 // pred_check_branch
    %36 = sbr.rel (0) target = $region41
  $region40: #{_core_forward.15} parent=0 // pred_region
    _
  $region41: #{_core_forward.15} parent=0 // pred_fallthru
    _
  // Predicated region
  $region42: #{_core_forward.15} parent=0 // pred_check
    _
  $region43: #{_core_forward.15} parent=0 // pred_check_branch
    %38 = sbr.rel (0) target = $region45
  $region44: #{_core_forward.15} parent=0 // pred_region
    _
  $region45: #{_core_forward.15} parent=0 // pred_fallthru
    _
  // Predicated region
  $region46: #{_core_forward.15} parent=0 // pred_check
    _
  $region47: #{_core_forward.15} parent=0 // pred_check_branch
    %40 = sbr.rel (0) target = $region49
  $region48: #{_core_forward.15} parent=0 // pred_region
    _
  $region49: #{_core_forward.15} parent=0 // pred_fallthru
    _
  %v42 = vld [vmem:[%s2] sm:$0xf]
  %v43 = vld [vmem:[%s2 + $0x4] sm:$0xf]
  %v44 = vld [vmem:[%s2 + $0x8] sm:$0xf]
  %v45 = vld [vmem:[%s2 + $0xc] sm:$0xf]
  %v46 = vld [vmem:[%s3] sm:$0xf]
  %v47 = vld [vmem:[%s3 + $0x4] sm:$0x3]
  %v48 = vld [vmem:[%s4] sm:$0x1]
  %v50 = vlaneseq
  %v51 = vshrl.u32 %v50, 7
  %v52 = vsub.s32 0, %v51
  %v53 = vrot.slane %v48, %v52
  %v59 = vunpack.c.l.b16 %v42
  %v60 = vunpack.c.l.b16 %v43
  %v61 = vunpack.c.l.b16 %v44
  %v62 = vunpack.c.l.b16 %v45
  %v63 = vpack.c.b16 %v60, %v59
  %v64 = vpack.c.b16 %v62, %v61
  %v67 = vunpack.c.l.b16 %v46
  %v68 = vunpack.c.l.b16 %v47
  %v69 = vpack.c.b16 %v68, %v67
  %vm70 = vcmask 97280
  %v72 = vsel %vm70, %v63, 0
  %v75 = vsel %vm70, %v64, 0
  %vm77 = vcmask 1045504
  %v79 = vsel %vm77, %v69, 0
  %81 = vmatprep.subr.bf16.mxu0 0
  %82 = vmatpush1.bf16.msra.mxu0 %v79
  %83 = vmatprep.subr.bf16.mxu0 0
  %84 = vmatpush1.bf16.msra.mxu0 0
  %85 = vmatprep.subr.bf16.mxu0 0
  %86 = vmatpush1.bf16.msra.mxu0 0
  %87 = vmatprep.subr.bf16.mxu0 0
  %88 = vmatpush1.bf16.msra.mxu0 0
  %89 = vmatprep.subr.bf16.mxu0 0
  %90 = vmatpush1.bf16.msra.mxu0 0
  %91 = vmatprep.subr.bf16.mxu0 0
  %92 = vmatpush1.bf16.msra.mxu0 0
  %93 = vmatprep.subr.bf16.mxu0 0
  %94 = vmatpush1.bf16.msra.mxu0 0
  %95 = vmatprep.subr.bf16.mxu0 0
  %96 = vmatpush1.bf16.msra.mxu0 0
  %97 = vmatprep.subr.bf16.mxu0 0
  %98 = vmatpush1.bf16.msra.mxu0 0
  %99 = vmatprep.subr.bf16.mxu0 0
  %100 = vmatpush1.bf16.msra.mxu0 0
  %101 = vmatprep.subr.bf16.mxu0 0
  %102 = vmatpush1.bf16.msra.mxu0 0
  %103 = vmatprep.subr.bf16.mxu0 0
  %104 = vmatpush1.bf16.msra.mxu0 0
  %105 = vmatprep.subr.bf16.mxu0 0
  %106 = vmatpush1.bf16.msra.mxu0 0
  %107 = vmatprep.subr.bf16.mxu0 0
  %108 = vmatpush1.bf16.msra.mxu0 0
  %109 = vmatprep.subr.bf16.mxu0 0
  %110 = vmatpush1.bf16.msra.mxu0 0
  %111 = vmatprep.subr.bf16.mxu0 0
  %112 = vmatpush1.bf16.msra.mxu0 0
  %113 = vmatprep.mubr.bf16.mxu0 0
  %114 = vmatmul.mubr.bf16.gmra.mrb[0].mxu0 %v72
  %v115 = vpop.f32.mrb[0].mxu0
  %v116 = vadd.f32 %v53, %v115
  %v117 = vpop.f32.mrb[0].mxu0
  %v118 = vpop.f32.mrb[0].mxu0
  %v119 = vadd.f32 %v53, %v118
  %v120 = vpop.f32.mrb[0].mxu0
  %121 = vmatprep.mubr.bf16.mxu0 0
  %122 = vmatmul.mubr.bf16.gmra.mrb[0].mxu0 %v75
  %v123 = vpop.f32.mrb[0].mxu0
  %v124 = vadd.f32 %v53, %v123
  %v125 = vpop.f32.mrb[0].mxu0
  %v126 = vpop.f32.mrb[0].mxu0
  %v127 = vadd.f32 %v53, %v126
  %v128 = vpop.f32.mrb[0].mxu0
  %129 = vdwg.mxu0
  %v130 = vmax.f32 %v116, 0.0
  %v131 = vmax.f32 %v119, 0.0
  %v132 = vmax.f32 %v124, 0.0
  %v133 = vmax.f32 %v127, 0.0
  %v134 = vpack.c.bf16 %v131, %v130
  %v135 = vpack.c.bf16 %v133, %v132
  %v136 = vld [vmem:[%s5] sm:$0xf]
  %v137 = vld [vmem:[%s5 + $0x4] sm:$0xf]
  %v138 = vld [vmem:[%s5 + $0x8] sm:$0xf]
  %v139 = vld [vmem:[%s5 + $0xc] sm:$0xf]
  %v140 = vld [vmem:[%s5 + $0x10] sm:$0xf]
  %v141 = vld [vmem:[%s5 + $0x14] sm:$0xf]
  %v142 = vld [vmem:[%s5 + $0x18] sm:$0xf]
  %v143 = vld [vmem:[%s5 + $0x1c] sm:$0xf]
  %v144 = vld [vmem:[%s5 + $0x20] sm:$0xf]
  %v145 = vld [vmem:[%s5 + $0x24] sm:$0xf]
  %v146 = vld [vmem:[%s5 + $0x28] sm:$0xf]
  %v147 = vld [vmem:[%s5 + $0x2c] sm:$0xf]
  %v148 = vld [vmem:[%s5 + $0x30] sm:$0xf]
  %v149 = vld [vmem:[%s5 + $0x34] sm:$0xf]
  %v150 = vld [vmem:[%s5 + $0x38] sm:$0xf]
  %v151 = vld [vmem:[%s5 + $0x3c] sm:$0xf]
  %v152 = vld [vmem:[%s6] sm:$0x1]
  %v154 = vlaneseq
  %v155 = vshrl.u32 %v154, 7
  %v156 = vsub.s32 0, %v155
  %v157 = vrot.slane %v152, %v156
  %v175 = vunpack.c.l.b16 %v136
  %v176 = vunpack.c.l.b16 %v137
  %v177 = vunpack.c.l.b16 %v138
  %v178 = vunpack.c.l.b16 %v139
  %v179 = vunpack.c.l.b16 %v140
  %v180 = vunpack.c.l.b16 %v141
  %v181 = vunpack.c.l.b16 %v142
  %v182 = vunpack.c.l.b16 %v143
  %v183 = vunpack.c.l.b16 %v144
  %v184 = vunpack.c.l.b16 %v145
  %v185 = vunpack.c.l.b16 %v146
  %v186 = vunpack.c.l.b16 %v147
  %v187 = vunpack.c.l.b16 %v148
  %v188 = vunpack.c.l.b16 %v149
  %v189 = vunpack.c.l.b16 %v150
  %v190 = vunpack.c.l.b16 %v151
  %v191 = vpack.c.b16 %v176, %v175
  %v192 = vpack.c.b16 %v178, %v177
  %v193 = vpack.c.b16 %v180, %v179
  %v194 = vpack.c.b16 %v182, %v181
  %v195 = vpack.c.b16 %v184, %v183
  %v196 = vpack.c.b16 %v186, %v185
  %v197 = vpack.c.b16 %v188, %v187
  %v198 = vpack.c.b16 %v190, %v189
  %207 = vmatprep.subr.bf16.mxu0 0
  %208 = vmatpush1.bf16.msra.mxu0 %v191
  %209 = vmatprep.subr.bf16.mxu0 0
  %210 = vmatpush1.bf16.msra.mxu0 %v192
  %211 = vmatprep.subr.bf16.mxu0 0
  %212 = vmatpush1.bf16.msra.mxu0 %v193
  %213 = vmatprep.subr.bf16.mxu0 0
  %214 = vmatpush1.bf16.msra.mxu0 %v194
  %215 = vmatprep.subr.bf16.mxu0 0
  %216 = vmatpush1.bf16.msra.mxu0 %v195
  %217 = vmatprep.subr.bf16.mxu0 0
  %218 = vmatpush1.bf16.msra.mxu0 %v196
  %219 = vmatprep.subr.bf16.mxu0 0
  %220 = vmatpush1.bf16.msra.mxu0 %v197
  %221 = vmatprep.subr.bf16.mxu0 0
  %222 = vmatpush1.bf16.msra.mxu0 %v198
  %223 = vmatprep.subr.bf16.mxu0 0
  %224 = vmatpush1.bf16.msra.mxu0 0
  %225 = vmatprep.subr.bf16.mxu0 0
  %226 = vmatpush1.bf16.msra.mxu0 0
  %227 = vmatprep.subr.bf16.mxu0 0
  %228 = vmatpush1.bf16.msra.mxu0 0
  %229 = vmatprep.subr.bf16.mxu0 0
  %230 = vmatpush1.bf16.msra.mxu0 0
  %231 = vmatprep.subr.bf16.mxu0 0
  %232 = vmatpush1.bf16.msra.mxu0 0
  %233 = vmatprep.subr.bf16.mxu0 0
  %234 = vmatpush1.bf16.msra.mxu0 0
  %235 = vmatprep.subr.bf16.mxu0 0
  %236 = vmatpush1.bf16.msra.mxu0 0
  %237 = vmatprep.subr.bf16.mxu0 0
  %238 = vmatpush1.bf16.msra.mxu0 0
  %239 = vmatprep.mubr.bf16.mxu0 0
  %240 = vmatmul.mubr.bf16.gmra.mrb[0].mxu0 %v134
  %v241 = vpop.f32.mrb[0].mxu0
  %v242 = vadd.f32 %v157, %v241
  %v243 = vpop.f32.mrb[0].mxu0
  %v244 = vpop.f32.mrb[0].mxu0
  %v245 = vadd.f32 %v157, %v244
  %v246 = vpop.f32.mrb[0].mxu0
  %247 = vmatprep.mubr.bf16.mxu0 0
  %248 = vmatmul.mubr.bf16.gmra.mrb[0].mxu0 %v135
  %v249 = vpop.f32.mrb[0].mxu0
  %v250 = vadd.f32 %v157, %v249
  %v251 = vpop.f32.mrb[0].mxu0
  %v252 = vpop.f32.mrb[0].mxu0
  %v253 = vadd.f32 %v157, %v252
  %v254 = vpop.f32.mrb[0].mxu0
  %255 = vdwg.mxu0
  %v256 = vpack.c.bf16 %v245, %v242
  %v257 = vpack.c.bf16 %v253, %v250
  %v258 = vld [vmem:[%s9] sm:$0xff]
  %v259 = vld [vmem:[%s9 + $0x8] sm:$0xff]
  %v260 = vld [vmem:[%s9 + $0x10] sm:$0xff]
  %v261 = vld [vmem:[%s9 + $0x18] sm:$0xff]
  %v262 = vld [vmem:[%s9 + $0x20] sm:$0xff]
  %v263 = vld [vmem:[%s9 + $0x28] sm:$0xff]
  %v264 = vld [vmem:[%s9 + $0x30] sm:$0xff]
  %v265 = vld [vmem:[%s9 + $0x38] sm:$0xff]
  %v266 = vld [vmem:[%s9 + $0x40] sm:$0xff]
  %v267 = vld [vmem:[%s9 + $0x48] sm:$0xff]
  %v268 = vld [vmem:[%s9 + $0x50] sm:$0xff]
  %v269 = vld [vmem:[%s9 + $0x58] sm:$0xff]
  %v270 = vld [vmem:[%s9 + $0x60] sm:$0xff]
  %v271 = vld [vmem:[%s9 + $0x68] sm:$0xff]
  %v272 = vld [vmem:[%s9 + $0x70] sm:$0xff]
  %v273 = vld [vmem:[%s9 + $0x78] sm:$0xff]
  %v290 = vunpack.c.l.b16 %v258
  %v291 = vunpack.c.h.b16 %v258
  %v292 = vunpack.c.l.b16 %v259
  %v293 = vunpack.c.h.b16 %v259
  %v294 = vunpack.c.l.b16 %v260
  %v295 = vunpack.c.h.b16 %v260
  %v296 = vunpack.c.l.b16 %v261
  %v297 = vunpack.c.h.b16 %v261
  %v298 = vunpack.c.l.b16 %v262
  %v299 = vunpack.c.h.b16 %v262
  %v300 = vunpack.c.l.b16 %v263
  %v301 = vunpack.c.h.b16 %v263
  %v302 = vunpack.c.l.b16 %v264
  %v303 = vunpack.c.h.b16 %v264
  %v304 = vunpack.c.l.b16 %v265
  %v305 = vunpack.c.h.b16 %v265
  %v306 = vunpack.c.l.b16 %v266
  %v307 = vunpack.c.h.b16 %v266
  %v308 = vunpack.c.l.b16 %v267
  %v309 = vunpack.c.h.b16 %v267
  %v310 = vunpack.c.l.b16 %v268
  %v311 = vunpack.c.h.b16 %v268
  %v312 = vunpack.c.l.b16 %v269
  %v313 = vunpack.c.h.b16 %v269
  %v314 = vunpack.c.l.b16 %v270
  %v315 = vunpack.c.h.b16 %v270
  %v316 = vunpack.c.l.b16 %v271
  %v317 = vunpack.c.h.b16 %v271
  %v318 = vunpack.c.l.b16 %v272
  %v319 = vunpack.c.h.b16 %v272
  %v320 = vunpack.c.l.b16 %v273
  %v321 = vunpack.c.h.b16 %v273
  %v322 = vpack.c.b16 %v292, %v290
  %v323 = vpack.c.b16 %v293, %v291
  %v324 = vpack.c.b16 %v296, %v294
  %v325 = vpack.c.b16 %v297, %v295
  %v326 = vpack.c.b16 %v300, %v298
  %v327 = vpack.c.b16 %v301, %v299
  %v328 = vpack.c.b16 %v304, %v302
  %v329 = vpack.c.b16 %v305, %v303
  %v330 = vpack.c.b16 %v308, %v306
  %v331 = vpack.c.b16 %v309, %v307
  %v332 = vpack.c.b16 %v312, %v310
  %v333 = vpack.c.b16 %v313, %v311
  %v334 = vpack.c.b16 %v316, %v314
  %v335 = vpack.c.b16 %v317, %v315
  %v336 = vpack.c.b16 %v320, %v318
  %v337 = vpack.c.b16 %v321, %v319
  %354 = vmatprep.subr.bf16.mxu0 %v323
  %355 = vmatpush1.bf16.msra.mxu0 %v322
  %356 = vmatprep.subr.bf16.mxu0 %v325
  %357 = vmatpush1.bf16.msra.mxu0 %v324
  %358 = vmatprep.subr.bf16.mxu0 %v327
  %359 = vmatpush1.bf16.msra.mxu0 %v326
  %360 = vmatprep.subr.bf16.mxu0 %v329
  %361 = vmatpush1.bf16.msra.mxu0 %v328
  %362 = vmatprep.subr.bf16.mxu0 %v331
  %363 = vmatpush1.bf16.msra.mxu0 %v330
  %364 = vmatprep.subr.bf16.mxu0 %v333
  %365 = vmatpush1.bf16.msra.mxu0 %v332
  %366 = vmatprep.subr.bf16.mxu0 %v335
  %367 = vmatpush1.bf16.msra.mxu0 %v334
  %368 = vmatprep.subr.bf16.mxu0 %v337
  %369 = vmatpush1.bf16.msra.mxu0 %v336
  %370 = vmatprep.subr.bf16.mxu0 0
  %371 = vmatpush1.bf16.msra.mxu0 0
  %372 = vmatprep.subr.bf16.mxu0 0
  %373 = vmatpush1.bf16.msra.mxu0 0
  %374 = vmatprep.subr.bf16.mxu0 0
  %375 = vmatpush1.bf16.msra.mxu0 0
  %376 = vmatprep.subr.bf16.mxu0 0
  %377 = vmatpush1.bf16.msra.mxu0 0
  %378 = vmatprep.subr.bf16.mxu0 0
  %379 = vmatpush1.bf16.msra.mxu0 0
  %380 = vmatprep.subr.bf16.mxu0 0
  %381 = vmatpush1.bf16.msra.mxu0 0
  %382 = vmatprep.subr.bf16.mxu0 0
  %383 = vmatpush1.bf16.msra.mxu0 0
  %384 = vmatprep.subr.bf16.mxu0 0
  %385 = vmatpush1.bf16.msra.mxu0 0
  %386 = vmatprep.mubr.bf16.mxu0 0
  %387 = vmatmul.mubr.bf16.gmra.mrb[0].mxu0 %v256
  %v388 = vpop.f32.mrb[0].mxu0
  %v389 = vadd.f32 0.0, %v388
  %v390 = vpop.f32.mrb[0].mxu0
  %v391 = vadd.f32 0.0, %v390
  %v392 = vpop.f32.mrb[0].mxu0
  %v393 = vadd.f32 0.0, %v392
  %v394 = vpop.f32.mrb[0].mxu0
  %v395 = vadd.f32 0.0, %v394
  %396 = vmatprep.mubr.bf16.mxu0 0
  %397 = vmatmul.mubr.bf16.gmra.mrb[0].mxu0 %v257
  %v398 = vpop.f32.mrb[0].mxu0
  %v399 = vadd.f32 0.0, %v398
  %v400 = vpop.f32.mrb[0].mxu0
  %v401 = vadd.f32 0.0, %v400
  %v402 = vpop.f32.mrb[0].mxu0
  %v403 = vadd.f32 0.0, %v402
  %v404 = vpop.f32.mrb[0].mxu0
  %v405 = vadd.f32 0.0, %v404
  %406 = vdwg.mxu0
  %v407 = vld [vmem:[%s1] sm:$0xff]
  %v408 = vld [vmem:[%s1 + $0x8] sm:$0xff]
  %v409 = vld [vmem:[%s1 + $0x10] sm:$0xff]
  %v410 = vld [vmem:[%s1 + $0x18] sm:$0xff]
  %v411 = vld [vmem:[%s10] sm:$0xff]
  %v412 = vld [vmem:[%s10 + $0x8] sm:$0xff]
  %v413 = vld [vmem:[%s10 + $0x10] sm:$0xff]
  %v414 = vld [vmem:[%s10 + $0x18] sm:$0xff]
  %v415 = vld [vmem:[%s10 + $0x20] sm:$0xff]
  %v416 = vld [vmem:[%s10 + $0x28] sm:$0xff]
  %v417 = vld [vmem:[%s10 + $0x30] sm:$0xff]
  %v418 = vld [vmem:[%s10 + $0x38] sm:$0xff]
  %v419 = vld [vmem:[%s10 + $0x40] sm:$0xff]
  %v420 = vld [vmem:[%s10 + $0x48] sm:$0xff]
  %v421 = vld [vmem:[%s10 + $0x50] sm:$0xff]
  %v422 = vld [vmem:[%s10 + $0x58] sm:$0xff]
  %v423 = vld [vmem:[%s10 + $0x60] sm:$0xff]
  %v424 = vld [vmem:[%s10 + $0x68] sm:$0xff]
  %v425 = vld [vmem:[%s10 + $0x70] sm:$0xff]
  %v426 = vld [vmem:[%s10 + $0x78] sm:$0xff]
  %v427 = vld [vmem:[%s10 + $0x80] sm:$0xff]
  %v428 = vld [vmem:[%s10 + $0x88] sm:$0xff]
  %v429 = vld [vmem:[%s10 + $0x90] sm:$0xff]
  %v430 = vld [vmem:[%s10 + $0x98] sm:$0xff]
  %v431 = vld [vmem:[%s10 + $0xa0] sm:$0xff]
  %v432 = vld [vmem:[%s10 + $0xa8] sm:$0xff]
  %v433 = vld [vmem:[%s10 + $0xb0] sm:$0xff]
  %v434 = vld [vmem:[%s10 + $0xb8] sm:$0xff]
  %v435 = vld [vmem:[%s10 + $0xc0] sm:$0xff]
  %v436 = vld [vmem:[%s10 + $0xc8] sm:$0xff]
  %v437 = vld [vmem:[%s10 + $0xd0] sm:$0xff]
  %v438 = vld [vmem:[%s10 + $0xd8] sm:$0xff]
  %v439 = vld [vmem:[%s10 + $0xe0] sm:$0xff]
  %v440 = vld [vmem:[%s10 + $0xe8] sm:$0xff]
  %v441 = vld [vmem:[%s10 + $0xf0] sm:$0xff]
  %v442 = vld [vmem:[%s10 + $0xf8] sm:$0xff]
  %v443 = vld [vmem:[%s11] sm:$0x3]
  %v445 = vlaneseq
  %v446 = vshrl.u32 %v445, 7
  %v447 = vsub.s32 0, %v446
  %v448 = vrot.slane %v443, %v447
  %v449 = vlaneseq
  %v450 = vshrl.u32 %v449, 7
  %v451 = vsub.s32 1, %v450
  %v452 = vrot.slane %v443, %v451
  %v459 = vunpack.c.l.b16 %v407
  %v460 = vunpack.c.h.b16 %v407
  %v461 = vunpack.c.l.b16 %v408
  %v462 = vunpack.c.h.b16 %v408
  %v463 = vunpack.c.l.b16 %v409
  %v464 = vunpack.c.h.b16 %v409
  %v465 = vunpack.c.l.b16 %v410
  %v466 = vunpack.c.h.b16 %v410
  %v467 = vpack.c.b16 %v461, %v459
  %v468 = vpack.c.b16 %v462, %v460
  %v469 = vpack.c.b16 %v465, %v463
  %v470 = vpack.c.b16 %v466, %v464
  %v507 = vunpack.c.l.b16 %v411
  %v508 = vunpack.c.h.b16 %v411
  %v509 = vunpack.c.l.b16 %v412
  %v510 = vunpack.c.h.b16 %v412
  %v511 = vunpack.c.l.b16 %v413
  %v512 = vunpack.c.h.b16 %v413
  %v513 = vunpack.c.l.b16 %v414
  %v514 = vunpack.c.h.b16 %v414
  %v515 = vunpack.c.l.b16 %v415
  %v516 = vunpack.c.h.b16 %v415
  %v517 = vunpack.c.l.b16 %v416
  %v518 = vunpack.c.h.b16 %v416
  %v519 = vunpack.c.l.b16 %v417
  %v520 = vunpack.c.h.b16 %v417
  %v521 = vunpack.c.l.b16 %v418
  %v522 = vunpack.c.h.b16 %v418
  %v523 = vunpack.c.l.b16 %v419
  %v524 = vunpack.c.h.b16 %v419
  %v525 = vunpack.c.l.b16 %v420
  %v526 = vunpack.c.h.b16 %v420
  %v527 = vunpack.c.l.b16 %v421
  %v528 = vunpack.c.h.b16 %v421
  %v529 = vunpack.c.l.b16 %v422
  %v530 = vunpack.c.h.b16 %v422
  %v531 = vunpack.c.l.b16 %v423
  %v532 = vunpack.c.h.b16 %v423
  %v533 = vunpack.c.l.b16 %v424
  %v534 = vunpack.c.h.b16 %v424
  %v535 = vunpack.c.l.b16 %v425
  %v536 = vunpack.c.h.b16 %v425
  %v537 = vunpack.c.l.b16 %v426
  %v538 = vunpack.c.h.b16 %v426
  %v539 = vunpack.c.l.b16 %v427
  %v540 = vunpack.c.h.b16 %v427
  %v541 = vunpack.c.l.b16 %v428
  %v542 = vunpack.c.h.b16 %v428
  %v543 = vunpack.c.l.b16 %v429
  %v544 = vunpack.c.h.b16 %v429
  %v545 = vunpack.c.l.b16 %v430
  %v546 = vunpack.c.h.b16 %v430
  %v547 = vunpack.c.l.b16 %v431
  %v548 = vunpack.c.h.b16 %v431
  %v549 = vunpack.c.l.b16 %v432
  %v550 = vunpack.c.h.b16 %v432
  %v551 = vunpack.c.l.b16 %v433
  %v552 = vunpack.c.h.b16 %v433
  %v553 = vunpack.c.l.b16 %v434
  %v554 = vunpack.c.h.b16 %v434
  %v555 = vunpack.c.l.b16 %v435
  %v556 = vunpack.c.h.b16 %v435
  %v557 = vunpack.c.l.b16 %v436
  %v558 = vunpack.c.h.b16 %v436
  %v559 = vunpack.c.l.b16 %v437
  %v560 = vunpack.c.h.b16 %v437
  %v561 = vunpack.c.l.b16 %v438
  %v562 = vunpack.c.h.b16 %v438
  %v563 = vunpack.c.l.b16 %v439
  %v564 = vunpack.c.h.b16 %v439
  %v565 = vunpack.c.l.b16 %v440
  %v566 = vunpack.c.h.b16 %v440
  %v567 = vunpack.c.l.b16 %v441
  %v568 = vunpack.c.h.b16 %v441
  %v569 = vunpack.c.l.b16 %v442
  %v570 = vunpack.c.h.b16 %v442
  %v571 = vpack.c.b16 %v509, %v507
  %v572 = vpack.c.b16 %v510, %v508
  %v573 = vpack.c.b16 %v513, %v511
  %v574 = vpack.c.b16 %v514, %v512
  %v575 = vpack.c.b16 %v517, %v515
  %v576 = vpack.c.b16 %v518, %v516
  %v577 = vpack.c.b16 %v521, %v519
  %v578 = vpack.c.b16 %v522, %v520
  %v579 = vpack.c.b16 %v525, %v523
  %v580 = vpack.c.b16 %v526, %v524
  %v581 = vpack.c.b16 %v529, %v527
  %v582 = vpack.c.b16 %v530, %v528
  %v583 = vpack.c.b16 %v533, %v531
  %v584 = vpack.c.b16 %v534, %v532
  %v585 = vpack.c.b16 %v537, %v535
  %v586 = vpack.c.b16 %v538, %v536
  %v587 = vpack.c.b16 %v541, %v539
  %v588 = vpack.c.b16 %v542, %v540
  %v589 = vpack.c.b16 %v545, %v543
  %v590 = vpack.c.b16 %v546, %v544
  %v591 = vpack.c.b16 %v549, %v547
  %v592 = vpack.c.b16 %v550, %v548
  %v593 = vpack.c.b16 %v553, %v551
  %v594 = vpack.c.b16 %v554, %v552
  %v595 = vpack.c.b16 %v557, %v555
  %v596 = vpack.c.b16 %v558, %v556
  %v597 = vpack.c.b16 %v561, %v559
  %v598 = vpack.c.b16 %v562, %v560
  %v599 = vpack.c.b16 %v565, %v563
  %v600 = vpack.c.b16 %v566, %v564
  %v601 = vpack.c.b16 %v569, %v567
  %v602 = vpack.c.b16 %v570, %v568
  %635 = vmatprep.subr.bf16.mxu0 %v572
  %636 = vmatpush1.bf16.msra.mxu0 %v571
  %637 = vmatprep.subr.bf16.mxu0 %v574
  %638 = vmatpush1.bf16.msra.mxu0 %v573
  %639 = vmatprep.subr.bf16.mxu0 %v576
  %640 = vmatpush1.bf16.msra.mxu0 %v575
  %641 = vmatprep.subr.bf16.mxu0 %v578
  %642 = vmatpush1.bf16.msra.mxu0 %v577
  %643 = vmatprep.subr.bf16.mxu0 %v580
  %644 = vmatpush1.bf16.msra.mxu0 %v579
  %645 = vmatprep.subr.bf16.mxu0 %v582
  %646 = vmatpush1.bf16.msra.mxu0 %v581
  %647 = vmatprep.subr.bf16.mxu0 %v584
  %648 = vmatpush1.bf16.msra.mxu0 %v583
  %649 = vmatprep.subr.bf16.mxu0 %v586
  %650 = vmatpush1.bf16.msra.mxu0 %v585
  %651 = vmatprep.subr.bf16.mxu0 %v588
  %652 = vmatpush1.bf16.msra.mxu0 %v587
  %653 = vmatprep.subr.bf16.mxu0 %v590
  %654 = vmatpush1.bf16.msra.mxu0 %v589
  %655 = vmatprep.subr.bf16.mxu0 %v592
  %656 = vmatpush1.bf16.msra.mxu0 %v591
  %657 = vmatprep.subr.bf16.mxu0 %v594
  %658 = vmatpush1.bf16.msra.mxu0 %v593
  %659 = vmatprep.subr.bf16.mxu0 %v596
  %660 = vmatpush1.bf16.msra.mxu0 %v595
  %661 = vmatprep.subr.bf16.mxu0 %v598
  %662 = vmatpush1.bf16.msra.mxu0 %v597
  %663 = vmatprep.subr.bf16.mxu0 %v600
  %664 = vmatpush1.bf16.msra.mxu0 %v599
  %665 = vmatprep.subr.bf16.mxu0 %v602
  %666 = vmatpush1.bf16.msra.mxu0 %v601
  %667 = vmatprep.mubr.bf16.mxu0 %v468
  %668 = vmatmul.mubr.bf16.gmra.mrb[0].mxu0 %v467
  %v669 = vpop.f32.mrb[0].mxu0
  %v670 = vadd.f32 %v448, %v669
  %v671 = vpop.f32.mrb[0].mxu0
  %v672 = vadd.f32 %v452, %v671
  %v673 = vpop.f32.mrb[0].mxu0
  %v674 = vadd.f32 %v448, %v673
  %v675 = vpop.f32.mrb[0].mxu0
  %v676 = vadd.f32 %v452, %v675
  %677 = vmatprep.mubr.bf16.mxu0 %v470
  %678 = vmatmul.mubr.bf16.gmra.mrb[0].mxu0 %v469
  %v679 = vpop.f32.mrb[0].mxu0
  %v680 = vadd.f32 %v448, %v679
  %v681 = vpop.f32.mrb[0].mxu0
  %v682 = vadd.f32 %v452, %v681
  %v683 = vpop.f32.mrb[0].mxu0
  %v684 = vadd.f32 %v448, %v683
  %v685 = vpop.f32.mrb[0].mxu0
  %v686 = vadd.f32 %v452, %v685
  %687 = vdwg.mxu0
  %v688 = vld [vmem:[%s0] sm:$0xff]
  %v689 = vld [vmem:[%s0 + $0x8] sm:$0xff]
  %v690 = vld [vmem:[%s0 + $0x10] sm:$0xff]
  %v691 = vld [vmem:[%s0 + $0x18] sm:$0xff]
  %v692 = vld [vmem:[%s7] sm:$0xf]
  %v693 = vld [vmem:[%s7 + $0x4] sm:$0xf]
  %v694 = vld [vmem:[%s7 + $0x8] sm:$0xf]
  %v695 = vld [vmem:[%s7 + $0xc] sm:$0xf]
  %v696 = vld [vmem:[%s7 + $0x10] sm:$0xf]
  %v697 = vld [vmem:[%s7 + $0x14] sm:$0xf]
  %v698 = vld [vmem:[%s7 + $0x18] sm:$0xf]
  %v699 = vld [vmem:[%s7 + $0x1c] sm:$0xf]
  %v700 = vld [vmem:[%s7 + $0x20] sm:$0xf]
  %v701 = vld [vmem:[%s7 + $0x24] sm:$0xf]
  %v702 = vld [vmem:[%s7 + $0x28] sm:$0xf]
  %v703 = vld [vmem:[%s7 + $0x2c] sm:$0xf]
  %v704 = vld [vmem:[%s7 + $0x30] sm:$0xf]
  %v705 = vld [vmem:[%s7 + $0x34] sm:$0xf]
  %v706 = vld [vmem:[%s7 + $0x38] sm:$0xf]
  %v707 = vld [vmem:[%s7 + $0x3c] sm:$0xf]
  %v708 = vld [vmem:[%s7 + $0x40] sm:$0xf]
  %v709 = vld [vmem:[%s7 + $0x44] sm:$0xf]
  %v710 = vld [vmem:[%s7 + $0x48] sm:$0xf]
  %v711 = vld [vmem:[%s7 + $0x4c] sm:$0xf]
  %v712 = vld [vmem:[%s7 + $0x50] sm:$0xf]
  %v713 = vld [vmem:[%s7 + $0x54] sm:$0xf]
  %v714 = vld [vmem:[%s7 + $0x58] sm:$0xf]
  %v715 = vld [vmem:[%s7 + $0x5c] sm:$0xf]
  %v716 = vld [vmem:[%s7 + $0x60] sm:$0xf]
  %v717 = vld [vmem:[%s7 + $0x64] sm:$0xf]
  %v718 = vld [vmem:[%s7 + $0x68] sm:$0xf]
  %v719 = vld [vmem:[%s7 + $0x6c] sm:$0xf]
  %v720 = vld [vmem:[%s7 + $0x70] sm:$0xf]
  %v721 = vld [vmem:[%s7 + $0x74] sm:$0xf]
  %v722 = vld [vmem:[%s7 + $0x78] sm:$0xf]
  %v723 = vld [vmem:[%s7 + $0x7c] sm:$0xf]
  %v724 = vld [vmem:[%s8] sm:$0x1]
  %v726 = vlaneseq
  %v727 = vshrl.u32 %v726, 7
  %v728 = vsub.s32 0, %v727
  %v729 = vrot.slane %v724, %v728
  %v735 = vunpack.c.l.b16 %v688
  %v736 = vunpack.c.h.b16 %v688
  %v737 = vunpack.c.l.b16 %v689
  %v738 = vunpack.c.h.b16 %v689
  %v739 = vunpack.c.l.b16 %v690
  %v740 = vunpack.c.h.b16 %v690
  %v741 = vunpack.c.l.b16 %v691
  %v742 = vunpack.c.h.b16 %v691
  %v743 = vpack.c.b16 %v737, %v735
  %v744 = vpack.c.b16 %v738, %v736
  %v745 = vpack.c.b16 %v741, %v739
  %v746 = vpack.c.b16 %v742, %v740
  %v783 = vunpack.c.l.b16 %v692
  %v784 = vunpack.c.l.b16 %v693
  %v785 = vunpack.c.l.b16 %v694
  %v786 = vunpack.c.l.b16 %v695
  %v787 = vunpack.c.l.b16 %v696
  %v788 = vunpack.c.l.b16 %v697
  %v789 = vunpack.c.l.b16 %v698
  %v790 = vunpack.c.l.b16 %v699
  %v791 = vunpack.c.l.b16 %v700
  %v792 = vunpack.c.l.b16 %v701
  %v793 = vunpack.c.l.b16 %v702
  %v794 = vunpack.c.l.b16 %v703
  %v795 = vunpack.c.l.b16 %v704
  %v796 = vunpack.c.l.b16 %v705
  %v797 = vunpack.c.l.b16 %v706
  %v798 = vunpack.c.l.b16 %v707
  %v799 = vunpack.c.l.b16 %v708
  %v800 = vunpack.c.l.b16 %v709
  %v801 = vunpack.c.l.b16 %v710
  %v802 = vunpack.c.l.b16 %v711
  %v803 = vunpack.c.l.b16 %v712
  %v804 = vunpack.c.l.b16 %v713
  %v805 = vunpack.c.l.b16 %v714
  %v806 = vunpack.c.l.b16 %v715
  %v807 = vunpack.c.l.b16 %v716
  %v808 = vunpack.c.l.b16 %v717
  %v809 = vunpack.c.l.b16 %v718
  %v810 = vunpack.c.l.b16 %v719
  %v811 = vunpack.c.l.b16 %v720
  %v812 = vunpack.c.l.b16 %v721
  %v813 = vunpack.c.l.b16 %v722
  %v814 = vunpack.c.l.b16 %v723
  %v815 = vpack.c.b16 %v784, %v783
  %v816 = vpack.c.b16 %v786, %v785
  %v817 = vpack.c.b16 %v788, %v787
  %v818 = vpack.c.b16 %v790, %v789
  %v819 = vpack.c.b16 %v792, %v791
  %v820 = vpack.c.b16 %v794, %v793
  %v821 = vpack.c.b16 %v796, %v795
  %v822 = vpack.c.b16 %v798, %v797
  %v823 = vpack.c.b16 %v800, %v799
  %v824 = vpack.c.b16 %v802, %v801
  %v825 = vpack.c.b16 %v804, %v803
  %v826 = vpack.c.b16 %v806, %v805
  %v827 = vpack.c.b16 %v808, %v807
  %v828 = vpack.c.b16 %v810, %v809
  %v829 = vpack.c.b16 %v812, %v811
  %v830 = vpack.c.b16 %v814, %v813
  %847 = vmatprep.subr.bf16.mxu0 0
  %848 = vmatpush1.bf16.msra.mxu0 %v815
  %849 = vmatprep.subr.bf16.mxu0 0
  %850 = vmatpush1.bf16.msra.mxu0 %v816
  %851 = vmatprep.subr.bf16.mxu0 0
  %852 = vmatpush1.bf16.msra.mxu0 %v817
  %853 = vmatprep.subr.bf16.mxu0 0
  %854 = vmatpush1.bf16.msra.mxu0 %v818
  %855 = vmatprep.subr.bf16.mxu0 0
  %856 = vmatpush1.bf16.msra.mxu0 %v819
  %857 = vmatprep.subr.bf16.mxu0 0
  %858 = vmatpush1.bf16.msra.mxu0 %v820
  %859 = vmatprep.subr.bf16.mxu0 0
  %860 = vmatpush1.bf16.msra.mxu0 %v821
  %861 = vmatprep.subr.bf16.mxu0 0
  %862 = vmatpush1.bf16.msra.mxu0 %v822
  %863 = vmatprep.subr.bf16.mxu0 0
  %864 = vmatpush1.bf16.msra.mxu0 %v823
  %865 = vmatprep.subr.bf16.mxu0 0
  %866 = vmatpush1.bf16.msra.mxu0 %v824
  %867 = vmatprep.subr.bf16.mxu0 0
  %868 = vmatpush1.bf16.msra.mxu0 %v825
  %869 = vmatprep.subr.bf16.mxu0 0
  %870 = vmatpush1.bf16.msra.mxu0 %v826
  %871 = vmatprep.subr.bf16.mxu0 0
  %872 = vmatpush1.bf16.msra.mxu0 %v827
  %873 = vmatprep.subr.bf16.mxu0 0
  %874 = vmatpush1.bf16.msra.mxu0 %v828
  %875 = vmatprep.subr.bf16.mxu0 0
  %876 = vmatpush1.bf16.msra.mxu0 %v829
  %877 = vmatprep.subr.bf16.mxu0 0
  %878 = vmatpush1.bf16.msra.mxu0 %v830
  %879 = vmatprep.mubr.bf16.mxu0 %v744
  %880 = vmatmul.mubr.bf16.gmra.mrb[0].mxu0 %v743
  %v881 = vpop.f32.mrb[0].mxu0
  %v882 = vadd.f32 %v729, %v881
  %v883 = vpop.f32.mrb[0].mxu0
  %v884 = vpop.f32.mrb[0].mxu0
  %v885 = vadd.f32 %v729, %v884
  %v886 = vpop.f32.mrb[0].mxu0
  %887 = vmatprep.mubr.bf16.mxu0 %v746
  %888 = vmatmul.mubr.bf16.gmra.mrb[0].mxu0 %v745
  %v889 = vpop.f32.mrb[0].mxu0
  %v890 = vadd.f32 %v729, %v889
  %v891 = vpop.f32.mrb[0].mxu0
  %v892 = vpop.f32.mrb[0].mxu0
  %v893 = vadd.f32 %v729, %v892
  %v894 = vpop.f32.mrb[0].mxu0
  %895 = vdwg.mxu0
  %v896 = vadd.f32 %v882, %v389
  %v897 = vadd.f32 %v885, %v393
  %v898 = vadd.f32 %v890, %v399
  %v899 = vadd.f32 %v893, %v403
  %v900 = vadd.f32 %v670, %v391
  %v901 = vadd.f32 %v674, %v395
  %v902 = vadd.f32 %v680, %v401
  %v903 = vadd.f32 %v684, %v405
  %v904 = vmul.f32 %v672, 0.17677669
  %v905 = vmul.f32 %v676, 0.17677669
  %v906 = vmul.f32 %v682, 0.17677669
  %v907 = vmul.f32 %v686, 0.17677669
  %v908 = vpack.c.bf16 %v901, %v900
  %v909 = vpack.c.bf16 %v903, %v902
  %v912 = vunpack.c.l.b16 %v908
  %v913 = vunpack.c.h.b16 %v908
  %v914 = vunpack.c.l.b16 %v909
  %v915 = vunpack.c.h.b16 %v909
  %v916 = vpack.c.b16 %v912, %v912
  %v917 = vpack.c.b16 %v913, %v913
  %v918 = vpack.c.b16 %v914, %v914
  %v919 = vpack.c.b16 %v915, %v915
  %924 = vst [vmem:[%s12] sm:$0xf] %v916
  %925 = vst [vmem:[%s12 + $0x8] sm:$0xf] %v917
  %926 = vst [vmem:[%s12 + $0x10] sm:$0xf] %v918
  %927 = vst [vmem:[%s12 + $0x18] sm:$0xf] %v919
  %v928 = vmul.f32 %v904, %v896
  %v929 = vmul.f32 %v905, %v897
  %v930 = vmul.f32 %v906, %v898
  %v931 = vmul.f32 %v907, %v899
  %v932 = vpack.c.bf16 %v929, %v928
  %v933 = vpack.c.bf16 %v931, %v930
  %v936 = vunpack.c.l.b16 %v932
  %v937 = vunpack.c.h.b16 %v932
  %v938 = vunpack.c.l.b16 %v933
  %v939 = vunpack.c.h.b16 %v933
  %v940 = vpack.c.b16 %v936, %v936
  %v941 = vpack.c.b16 %v937, %v937
  %v942 = vpack.c.b16 %v938, %v938
  %v943 = vpack.c.b16 %v939, %v939
  %948 = vst [vmem:[%s12 + $0x4] sm:$0xf] %v940
  %949 = vst [vmem:[%s12 + $0xc] sm:$0xf] %v941
  %950 = vst [vmem:[%s12 + $0x14] sm:$0xf] %v942
  %951 = vst [vmem:[%s12 + $0x1c] sm:$0xf] %v943
  // Predicated region
  $region50: #{_core_forward.15} parent=0 // pred_check
    _
  $region51: #{_core_forward.15} parent=0 // pred_check_branch
    %953 = sbr.rel (0) target = $region53
  $region52: #{_core_forward.15} parent=0 // pred_region
    _
  $region53: #{_core_forward.15} parent=0 // pred_fallthru
    _
  // Predicated region
  $region54: #{_core_forward.15} parent=0 // pred_check
    _
  $region55: #{_core_forward.15} parent=0 // pred_check_branch
    %955 = sbr.rel (0) target = $region57
  $region56: #{_core_forward.15} parent=0 // pred_region
    _
  $region57: #{_core_forward.15} parent=0 // pred_fallthru
    _

// kernel: _core_forward.19
$region0: #{_core_forward.19}
  #allocation0 [shape = 'u32[]', space=smem, size = 0x4, offset = 0x4, fixed_abs, tag = 'smem constant byte address 0x4 - core index']
  #allocation1 [shape = 'u32[144,128]{1,0:T(1,128)}', space=vmem, size = 0x12000, scoped, tag = 'internal scratch']
  %s0 = inlined_call_operand.vmem [shape: bf16[16,128], index: 0, kind: input, shape index: {}]
  %s1 = inlined_call_operand.vmem [shape: bf16[16,128], index: 1, kind: input, shape index: {}]
  %s2 = inlined_call_operand.vmem [shape: bf16[128,128], index: 2, kind: input, shape index: {}]
  %s3 = inlined_call_operand.vmem [shape: f32[1,128], index: 3, kind: input, shape index: {}]
  %s4 = inlined_call_operand.vmem [shape: bf16[128,128], index: 4, kind: input, shape index: {}]
  %s5 = inlined_call_operand.vmem [shape: f32[1,128], index: 5, kind: input, shape index: {}]
  %s6 = inlined_call_operand.vmem [shape: bf16[16,128], index: 6, kind: output, shape index: {}]
  %s7 = sld [smem:[#allocation0]]
  $region34: #{_core_forward.19} parent=0
    _
  %s9 = ssub.s32 1, %s7
  %s10 = scalar_select 0, %s9, %s7
  // Predicated region
  $region2: #{_core_forward.19} parent=0 // pred_check
    _
  $region3: #{_core_forward.19} parent=0 // pred_check_branch
    %12 = sbr.rel (0) target = $region5
  $region4: #{_core_forward.19} parent=0 // pred_region
    _
  $region5: #{_core_forward.19} parent=0 // pred_fallthru
    _
  // Predicated region
  $region6: #{_core_forward.19} parent=0 // pred_check
    _
  $region7: #{_core_forward.19} parent=0 // pred_check_branch
    %14 = sbr.rel (0) target = $region9
  $region8: #{_core_forward.19} parent=0 // pred_region
    _
  $region9: #{_core_forward.19} parent=0 // pred_fallthru
    _
  // Predicated region
  $region10: #{_core_forward.19} parent=0 // pred_check
    _
  $region11: #{_core_forward.19} parent=0 // pred_check_branch
    %16 = sbr.rel (0) target = $region13
  $region12: #{_core_forward.19} parent=0 // pred_region
    _
  $region13: #{_core_forward.19} parent=0 // pred_fallthru
    _
  // Predicated region
  $region14: #{_core_forward.19} parent=0 // pred_check
    _
  $region15: #{_core_forward.19} parent=0 // pred_check_branch
    %18 = sbr.rel (0) target = $region17
  $region16: #{_core_forward.19} parent=0 // pred_region
    _
  $region17: #{_core_forward.19} parent=0 // pred_fallthru
    _
  // Predicated region
  $region18: #{_core_forward.19} parent=0 // pred_check
    _
  $region19: #{_core_forward.19} parent=0 // pred_check_branch
    %20 = sbr.rel (0) target = $region21
  $region20: #{_core_forward.19} parent=0 // pred_region
    _
  $region21: #{_core_forward.19} parent=0 // pred_fallthru
    _
  // Predicated region
  $region22: #{_core_forward.19} parent=0 // pred_check
    _
  $region23: #{_core_forward.19} parent=0 // pred_check_branch
    %22 = sbr.rel (0) target = $region25
  $region24: #{_core_forward.19} parent=0 // pred_region
    _
  $region25: #{_core_forward.19} parent=0 // pred_fallthru
    _
  %v24 = vld [vmem:[%s0] sm:$0xf]
  %v25 = vld [vmem:[%s0 + $0x4] sm:$0xf]
  %v26 = vld [vmem:[%s2] sm:$0xf]
  %v27 = vld [vmem:[%s2 + $0x4] sm:$0xf]
  %v28 = vld [vmem:[%s2 + $0x8] sm:$0xf]
  %v29 = vld [vmem:[%s2 + $0xc] sm:$0xf]
  %v30 = vld [vmem:[%s2 + $0x10] sm:$0xf]
  %v31 = vld [vmem:[%s2 + $0x14] sm:$0xf]
  %v32 = vld [vmem:[%s2 + $0x18] sm:$0xf]
  %v33 = vld [vmem:[%s2 + $0x1c] sm:$0xf]
  %v34 = vld [vmem:[%s2 + $0x20] sm:$0xf]
  %v35 = vld [vmem:[%s2 + $0x24] sm:$0xf]
  %v36 = vld [vmem:[%s2 + $0x28] sm:$0xf]
  %v37 = vld [vmem:[%s2 + $0x2c] sm:$0xf]
  %v38 = vld [vmem:[%s2 + $0x30] sm:$0xf]
  %v39 = vld [vmem:[%s2 + $0x34] sm:$0xf]
  %v40 = vld [vmem:[%s2 + $0x38] sm:$0xf]
  %v41 = vld [vmem:[%s2 + $0x3c] sm:$0xf]
  %v42 = vld [vmem:[%s3] sm:$0x1]
  %v44 = vlaneseq
  %v45 = vshrl.u32 %v44, 7
  %v46 = vsub.s32 0, %v45
  %v47 = vrot.slane %v42, %v46
  %v51 = vunpack.c.l.b16 %v24
  %v52 = vunpack.c.l.b16 %v25
  %v53 = vpack.c.b16 %v52, %v51
  %v71 = vunpack.c.l.b16 %v26
  %v72 = vunpack.c.l.b16 %v27
  %v73 = vunpack.c.l.b16 %v28
  %v74 = vunpack.c.l.b16 %v29
  %v75 = vunpack.c.l.b16 %v30
  %v76 = vunpack.c.l.b16 %v31
  %v77 = vunpack.c.l.b16 %v32
  %v78 = vunpack.c.l.b16 %v33
  %v79 = vunpack.c.l.b16 %v34
  %v80 = vunpack.c.l.b16 %v35
  %v81 = vunpack.c.l.b16 %v36
  %v82 = vunpack.c.l.b16 %v37
  %v83 = vunpack.c.l.b16 %v38
  %v84 = vunpack.c.l.b16 %v39
  %v85 = vunpack.c.l.b16 %v40
  %v86 = vunpack.c.l.b16 %v41
  %v87 = vpack.c.b16 %v72, %v71
  %v88 = vpack.c.b16 %v74, %v73
  %v89 = vpack.c.b16 %v76, %v75
  %v90 = vpack.c.b16 %v78, %v77
  %v91 = vpack.c.b16 %v80, %v79
  %v92 = vpack.c.b16 %v82, %v81
  %v93 = vpack.c.b16 %v84, %v83
  %v94 = vpack.c.b16 %v86, %v85
  %103 = vmatprep.subr.bf16.mxu0 0
  %104 = vmatpush1.bf16.msra.mxu0 %v87
  %105 = vmatprep.subr.bf16.mxu0 0
  %106 = vmatpush1.bf16.msra.mxu0 %v88
  %107 = vmatprep.subr.bf16.mxu0 0
  %108 = vmatpush1.bf16.msra.mxu0 %v89
  %109 = vmatprep.subr.bf16.mxu0 0
  %110 = vmatpush1.bf16.msra.mxu0 %v90
  %111 = vmatprep.subr.bf16.mxu0 0
  %112 = vmatpush1.bf16.msra.mxu0 %v91
  %113 = vmatprep.subr.bf16.mxu0 0
  %114 = vmatpush1.bf16.msra.mxu0 %v92
  %115 = vmatprep.subr.bf16.mxu0 0
  %116 = vmatpush1.bf16.msra.mxu0 %v93
  %117 = vmatprep.subr.bf16.mxu0 0
  %118 = vmatpush1.bf16.msra.mxu0 %v94
  %119 = vmatprep.subr.bf16.mxu0 0
  %120 = vmatpush1.bf16.msra.mxu0 0
  %121 = vmatprep.subr.bf16.mxu0 0
  %122 = vmatpush1.bf16.msra.mxu0 0
  %123 = vmatprep.subr.bf16.mxu0 0
  %124 = vmatpush1.bf16.msra.mxu0 0
  %125 = vmatprep.subr.bf16.mxu0 0
  %126 = vmatpush1.bf16.msra.mxu0 0
  %127 = vmatprep.subr.bf16.mxu0 0
  %128 = vmatpush1.bf16.msra.mxu0 0
  %129 = vmatprep.subr.bf16.mxu0 0
  %130 = vmatpush1.bf16.msra.mxu0 0
  %131 = vmatprep.subr.bf16.mxu0 0
  %132 = vmatpush1.bf16.msra.mxu0 0
  %133 = vmatprep.subr.bf16.mxu0 0
  %134 = vmatpush1.bf16.msra.mxu0 0
  %135 = vmatprep.mubr.bf16.mxu0 0
  %136 = vmatmul.mubr.bf16.gmra.mrb[0].mxu0 %v53
  %v137 = vpop.f32.mrb[0].mxu0
  %v138 = vadd.f32 %v47, %v137
  %v139 = vpop.f32.mrb[0].mxu0
  %v140 = vpop.f32.mrb[0].mxu0
  %v141 = vadd.f32 %v47, %v140
  %v142 = vpop.f32.mrb[0].mxu0
  %143 = vdwg.mxu0
  %v144 = vld [vmem:[%s1] sm:$0xf]
  %v145 = vld [vmem:[%s1 + $0x4] sm:$0xf]
  %v146 = vld [vmem:[%s4] sm:$0xf]
  %v147 = vld [vmem:[%s4 + $0x4] sm:$0xf]
  %v148 = vld [vmem:[%s4 + $0x8] sm:$0xf]
  %v149 = vld [vmem:[%s4 + $0xc] sm:$0xf]
  %v150 = vld [vmem:[%s4 + $0x10] sm:$0xf]
  %v151 = vld [vmem:[%s4 + $0x14] sm:$0xf]
  %v152 = vld [vmem:[%s4 + $0x18] sm:$0xf]
  %v153 = vld [vmem:[%s4 + $0x1c] sm:$0xf]
  %v154 = vld [vmem:[%s4 + $0x20] sm:$0xf]
  %v155 = vld [vmem:[%s4 + $0x24] sm:$0xf]
  %v156 = vld [vmem:[%s4 + $0x28] sm:$0xf]
  %v157 = vld [vmem:[%s4 + $0x2c] sm:$0xf]
  %v158 = vld [vmem:[%s4 + $0x30] sm:$0xf]
  %v159 = vld [vmem:[%s4 + $0x34] sm:$0xf]
  %v160 = vld [vmem:[%s4 + $0x38] sm:$0xf]
  %v161 = vld [vmem:[%s4 + $0x3c] sm:$0xf]
  %v164 = vunpack.c.l.b16 %v144
  %v165 = vunpack.c.l.b16 %v145
  %v166 = vpack.c.b16 %v165, %v164
  %v184 = vunpack.c.l.b16 %v146
  %v185 = vunpack.c.l.b16 %v147
  %v186 = vunpack.c.l.b16 %v148
  %v187 = vunpack.c.l.b16 %v149
  %v188 = vunpack.c.l.b16 %v150
  %v189 = vunpack.c.l.b16 %v151
  %v190 = vunpack.c.l.b16 %v152
  %v191 = vunpack.c.l.b16 %v153
  %v192 = vunpack.c.l.b16 %v154
  %v193 = vunpack.c.l.b16 %v155
  %v194 = vunpack.c.l.b16 %v156
  %v195 = vunpack.c.l.b16 %v157
  %v196 = vunpack.c.l.b16 %v158
  %v197 = vunpack.c.l.b16 %v159
  %v198 = vunpack.c.l.b16 %v160
  %v199 = vunpack.c.l.b16 %v161
  %v200 = vpack.c.b16 %v185, %v184
  %v201 = vpack.c.b16 %v187, %v186
  %v202 = vpack.c.b16 %v189, %v188
  %v203 = vpack.c.b16 %v191, %v190
  %v204 = vpack.c.b16 %v193, %v192
  %v205 = vpack.c.b16 %v195, %v194
  %v206 = vpack.c.b16 %v197, %v196
  %v207 = vpack.c.b16 %v199, %v198
  %216 = vmatprep.subr.bf16.mxu0 0
  %217 = vmatpush1.bf16.msra.mxu0 %v200
  %218 = vmatprep.subr.bf16.mxu0 0
  %219 = vmatpush1.bf16.msra.mxu0 %v201
  %220 = vmatprep.subr.bf16.mxu0 0
  %221 = vmatpush1.bf16.msra.mxu0 %v202
  %222 = vmatprep.subr.bf16.mxu0 0
  %223 = vmatpush1.bf16.msra.mxu0 %v203
  %224 = vmatprep.subr.bf16.mxu0 0
  %225 = vmatpush1.bf16.msra.mxu0 %v204
  %226 = vmatprep.subr.bf16.mxu0 0
  %227 = vmatpush1.bf16.msra.mxu0 %v205
  %228 = vmatprep.subr.bf16.mxu0 0
  %229 = vmatpush1.bf16.msra.mxu0 %v206
  %230 = vmatprep.subr.bf16.mxu0 0
  %231 = vmatpush1.bf16.msra.mxu0 %v207
  %232 = vmatprep.subr.bf16.mxu0 0
  %233 = vmatpush1.bf16.msra.mxu0 0
  %234 = vmatprep.subr.bf16.mxu0 0
  %235 = vmatpush1.bf16.msra.mxu0 0
  %236 = vmatprep.subr.bf16.mxu0 0
  %237 = vmatpush1.bf16.msra.mxu0 0
  %238 = vmatprep.subr.bf16.mxu0 0
  %239 = vmatpush1.bf16.msra.mxu0 0
  %240 = vmatprep.subr.bf16.mxu0 0
  %241 = vmatpush1.bf16.msra.mxu0 0
  %242 = vmatprep.subr.bf16.mxu0 0
  %243 = vmatpush1.bf16.msra.mxu0 0
  %244 = vmatprep.subr.bf16.mxu0 0
  %245 = vmatpush1.bf16.msra.mxu0 0
  %246 = vmatprep.subr.bf16.mxu0 0
  %247 = vmatpush1.bf16.msra.mxu0 0
  %248 = vmatprep.mubr.bf16.mxu0 0
  %249 = vmatmul.mubr.bf16.gmra.mrb[0].mxu0 %v166
  %v250 = vpop.f32.mrb[0].mxu0
  %v251 = vadd.f32 0.0, %v250
  %v252 = vpop.f32.mrb[0].mxu0
  %v253 = vpop.f32.mrb[0].mxu0
  %v254 = vadd.f32 0.0, %v253
  %v255 = vpop.f32.mrb[0].mxu0
  %256 = vdwg.mxu0
  %v257 = vadd.f32 %v138, %v251
  %v258 = vadd.f32 %v141, %v254
  %v259 = vld [vmem:[%s5] sm:$0x1]
  %v261 = vlaneseq
  %v262 = vshrl.u32 %v261, 7
  %v263 = vsub.s32 0, %v262
  %v264 = vrot.slane %v259, %v263
  %v266 = vadd.f32 %v257, %v264
  %v267 = vadd.f32 %v258, %v264
  %v268 = vmul.f32 %v266, 0.5
  %v269 = vmul.f32 %v267, 0.5
  %v270 = vmul.f32 %v266, %v266
  %v271 = vmul.f32 %v267, %v267
  %v272 = vmul.f32 %v266, %v270
  %v273 = vmul.f32 %v267, %v271
  %v274 = vmul.f32 %v272, 0.044715
  %v275 = vmul.f32 %v273, 0.044715
  %v276 = vadd.f32 %v266, %v274
  %v277 = vadd.f32 %v267, %v275
  %v278 = vmul.f32 %v276, 0.7978846
  %v279 = vmul.f32 %v277, 0.7978846
  %v280 = vtanh.pop %v278
  %v281 = vtanh.pop %v279
  %v282 = vadd.f32 %v280, 1.0
  %v283 = vadd.f32 %v281, 1.0
  %v284 = vmul.f32 %v268, %v282
  %v285 = vmul.f32 %v269, %v283
  %v286 = vpack.c.bf16 %v285, %v284
  %v288 = vunpack.c.l.b16 %v286
  %v289 = vunpack.c.h.b16 %v286
  %v290 = vpack.c.b16 %v288, %v288
  %v291 = vpack.c.b16 %v289, %v289
  %294 = vst [vmem:[%s6] sm:$0xf] %v290
  %295 = vst [vmem:[%s6 + $0x4] sm:$0xf] %v291
  // Predicated region
  $region26: #{_core_forward.19} parent=0 // pred_check
    _
  $region27: #{_core_forward.19} parent=0 // pred_check_branch
    %297 = sbr.rel (0) target = $region29
  $region28: #{_core_forward.19} parent=0 // pred_region
    _
  $region29: #{_core_forward.19} parent=0 // pred_fallthru
    _
  // Predicated region
  $region30: #{_core_forward.19} parent=0 // pred_check
    _
  $region31: #{_core_forward.19} parent=0 // pred_check_branch
    %299 = sbr.rel (0) target = $region33
  $region32: #{_core_forward.19} parent=0 // pred_region
    _
  $region33: #{_core_forward.19} parent=0 // pred_fallthru
    _

// kernel: _core_forward.16
$region0: #{_core_forward.16}
  #allocation0 [shape = 'u32[]', space=smem, size = 0x4, offset = 0x4, fixed_abs, tag = 'smem constant byte address 0x4 - core index']
  #allocation1 [shape = 'u32[144,128]{1,0:T(1,128)}', space=vmem, size = 0x12000, scoped, tag = 'internal scratch']
  %s0 = inlined_call_operand.vmem [shape: bf16[16,128], index: 0, kind: input, shape index: {}]
  %s1 = inlined_call_operand.vmem [shape: bf16[128,128], index: 1, kind: input, shape index: {}]
  %s2 = inlined_call_operand.vmem [shape: f32[1,128], index: 2, kind: input, shape index: {}]
  %s3 = inlined_call_operand.vmem [shape: bf16[128,128], index: 3, kind: input, shape index: {}]
  %s4 = inlined_call_operand.vmem [shape: f32[1,128], index: 4, kind: input, shape index: {}]
  %s5 = inlined_call_operand.vmem [shape: bf16[16,128], index: 5, kind: output, shape index: {}]
  %s6 = sld [smem:[#allocation0]]
  $region30: #{_core_forward.16} parent=0
    _
  %s8 = ssub.s32 1, %s6
  %s9 = scalar_select 0, %s8, %s6
  // Predicated region
  $region2: #{_core_forward.16} parent=0 // pred_check
    _
  $region3: #{_core_forward.16} parent=0 // pred_check_branch
    %11 = sbr.rel (0) target = $region5
  $region4: #{_core_forward.16} parent=0 // pred_region
    _
  $region5: #{_core_forward.16} parent=0 // pred_fallthru
    _
  // Predicated region
  $region6: #{_core_forward.16} parent=0 // pred_check
    _
  $region7: #{_core_forward.16} parent=0 // pred_check_branch
    %13 = sbr.rel (0) target = $region9
  $region8: #{_core_forward.16} parent=0 // pred_region
    _
  $region9: #{_core_forward.16} parent=0 // pred_fallthru
    _
  // Predicated region
  $region10: #{_core_forward.16} parent=0 // pred_check
    _
  $region11: #{_core_forward.16} parent=0 // pred_check_branch
    %15 = sbr.rel (0) target = $region13
  $region12: #{_core_forward.16} parent=0 // pred_region
    _
  $region13: #{_core_forward.16} parent=0 // pred_fallthru
    _
  // Predicated region
  $region14: #{_core_forward.16} parent=0 // pred_check
    _
  $region15: #{_core_forward.16} parent=0 // pred_check_branch
    %17 = sbr.rel (0) target = $region17
  $region16: #{_core_forward.16} parent=0 // pred_region
    _
  $region17: #{_core_forward.16} parent=0 // pred_fallthru
    _
  // Predicated region
  $region18: #{_core_forward.16} parent=0 // pred_check
    _
  $region19: #{_core_forward.16} parent=0 // pred_check_branch
    %19 = sbr.rel (0) target = $region21
  $region20: #{_core_forward.16} parent=0 // pred_region
    _
  $region21: #{_core_forward.16} parent=0 // pred_fallthru
    _
  %v21 = vld [vmem:[%s0] sm:$0xf]
  %v22 = vld [vmem:[%s0 + $0x4] sm:$0xf]
  %v23 = vld [vmem:[%s1] sm:$0xf]
  %v24 = vld [vmem:[%s1 + $0x4] sm:$0xf]
  %v25 = vld [vmem:[%s1 + $0x8] sm:$0xf]
  %v26 = vld [vmem:[%s1 + $0xc] sm:$0xf]
  %v27 = vld [vmem:[%s1 + $0x10] sm:$0xf]
  %v28 = vld [vmem:[%s1 + $0x14] sm:$0xf]
  %v29 = vld [vmem:[%s1 + $0x18] sm:$0xf]
  %v30 = vld [vmem:[%s1 + $0x1c] sm:$0xf]
  %v31 = vld [vmem:[%s1 + $0x20] sm:$0xf]
  %v32 = vld [vmem:[%s1 + $0x24] sm:$0xf]
  %v33 = vld [vmem:[%s1 + $0x28] sm:$0xf]
  %v34 = vld [vmem:[%s1 + $0x2c] sm:$0xf]
  %v35 = vld [vmem:[%s1 + $0x30] sm:$0xf]
  %v36 = vld [vmem:[%s1 + $0x34] sm:$0xf]
  %v37 = vld [vmem:[%s1 + $0x38] sm:$0xf]
  %v38 = vld [vmem:[%s1 + $0x3c] sm:$0xf]
  %v39 = vld [vmem:[%s2] sm:$0x1]
  %v41 = vlaneseq
  %v42 = vshrl.u32 %v41, 7
  %v43 = vsub.s32 0, %v42
  %v44 = vrot.slane %v39, %v43
  %v48 = vunpack.c.l.b16 %v21
  %v49 = vunpack.c.l.b16 %v22
  %v50 = vpack.c.b16 %v49, %v48
  %v68 = vunpack.c.l.b16 %v23
  %v69 = vunpack.c.l.b16 %v24
  %v70 = vunpack.c.l.b16 %v25
  %v71 = vunpack.c.l.b16 %v26
  %v72 = vunpack.c.l.b16 %v27
  %v73 = vunpack.c.l.b16 %v28
  %v74 = vunpack.c.l.b16 %v29
  %v75 = vunpack.c.l.b16 %v30
  %v76 = vunpack.c.l.b16 %v31
  %v77 = vunpack.c.l.b16 %v32
  %v78 = vunpack.c.l.b16 %v33
  %v79 = vunpack.c.l.b16 %v34
  %v80 = vunpack.c.l.b16 %v35
  %v81 = vunpack.c.l.b16 %v36
  %v82 = vunpack.c.l.b16 %v37
  %v83 = vunpack.c.l.b16 %v38
  %v84 = vpack.c.b16 %v69, %v68
  %v85 = vpack.c.b16 %v71, %v70
  %v86 = vpack.c.b16 %v73, %v72
  %v87 = vpack.c.b16 %v75, %v74
  %v88 = vpack.c.b16 %v77, %v76
  %v89 = vpack.c.b16 %v79, %v78
  %v90 = vpack.c.b16 %v81, %v80
  %v91 = vpack.c.b16 %v83, %v82
  %100 = vmatprep.subr.bf16.mxu0 0
  %101 = vmatpush1.bf16.msra.mxu0 %v84
  %102 = vmatprep.subr.bf16.mxu0 0
  %103 = vmatpush1.bf16.msra.mxu0 %v85
  %104 = vmatprep.subr.bf16.mxu0 0
  %105 = vmatpush1.bf16.msra.mxu0 %v86
  %106 = vmatprep.subr.bf16.mxu0 0
  %107 = vmatpush1.bf16.msra.mxu0 %v87
  %108 = vmatprep.subr.bf16.mxu0 0
  %109 = vmatpush1.bf16.msra.mxu0 %v88
  %110 = vmatprep.subr.bf16.mxu0 0
  %111 = vmatpush1.bf16.msra.mxu0 %v89
  %112 = vmatprep.subr.bf16.mxu0 0
  %113 = vmatpush1.bf16.msra.mxu0 %v90
  %114 = vmatprep.subr.bf16.mxu0 0
  %115 = vmatpush1.bf16.msra.mxu0 %v91
  %116 = vmatprep.subr.bf16.mxu0 0
  %117 = vmatpush1.bf16.msra.mxu0 0
  %118 = vmatprep.subr.bf16.mxu0 0
  %119 = vmatpush1.bf16.msra.mxu0 0
  %120 = vmatprep.subr.bf16.mxu0 0
  %121 = vmatpush1.bf16.msra.mxu0 0
  %122 = vmatprep.subr.bf16.mxu0 0
  %123 = vmatpush1.bf16.msra.mxu0 0
  %124 = vmatprep.subr.bf16.mxu0 0
  %125 = vmatpush1.bf16.msra.mxu0 0
  %126 = vmatprep.subr.bf16.mxu0 0
  %127 = vmatpush1.bf16.msra.mxu0 0
  %128 = vmatprep.subr.bf16.mxu0 0
  %129 = vmatpush1.bf16.msra.mxu0 0
  %130 = vmatprep.subr.bf16.mxu0 0
  %131 = vmatpush1.bf16.msra.mxu0 0
  %132 = vmatprep.mubr.bf16.mxu0 0
  %133 = vmatmul.mubr.bf16.gmra.mrb[0].mxu0 %v50
  %v134 = vpop.f32.mrb[0].mxu0
  %v135 = vadd.f32 %v44, %v134
  %v136 = vpop.f32.mrb[0].mxu0
  %v137 = vpop.f32.mrb[0].mxu0
  %v138 = vadd.f32 %v44, %v137
  %v139 = vpop.f32.mrb[0].mxu0
  %140 = vdwg.mxu0
  %v141 = vmax.f32 %v135, 0.0
  %v142 = vmax.f32 %v138, 0.0
  %v143 = vpack.c.bf16 %v142, %v141
  %v144 = vld [vmem:[%s3] sm:$0xf]
  %v145 = vld [vmem:[%s3 + $0x4] sm:$0xf]
  %v146 = vld [vmem:[%s3 + $0x8] sm:$0xf]
  %v147 = vld [vmem:[%s3 + $0xc] sm:$0xf]
  %v148 = vld [vmem:[%s3 + $0x10] sm:$0xf]
  %v149 = vld [vmem:[%s3 + $0x14] sm:$0xf]
  %v150 = vld [vmem:[%s3 + $0x18] sm:$0xf]
  %v151 = vld [vmem:[%s3 + $0x1c] sm:$0xf]
  %v152 = vld [vmem:[%s3 + $0x20] sm:$0xf]
  %v153 = vld [vmem:[%s3 + $0x24] sm:$0xf]
  %v154 = vld [vmem:[%s3 + $0x28] sm:$0xf]
  %v155 = vld [vmem:[%s3 + $0x2c] sm:$0xf]
  %v156 = vld [vmem:[%s3 + $0x30] sm:$0xf]
  %v157 = vld [vmem:[%s3 + $0x34] sm:$0xf]
  %v158 = vld [vmem:[%s3 + $0x38] sm:$0xf]
  %v159 = vld [vmem:[%s3 + $0x3c] sm:$0xf]
  %v160 = vld [vmem:[%s4] sm:$0x1]
  %v162 = vlaneseq
  %v163 = vshrl.u32 %v162, 7
  %v164 = vsub.s32 0, %v163
  %v165 = vrot.slane %v160, %v164
  %v183 = vunpack.c.l.b16 %v144
  %v184 = vunpack.c.l.b16 %v145
  %v185 = vunpack.c.l.b16 %v146
  %v186 = vunpack.c.l.b16 %v147
  %v187 = vunpack.c.l.b16 %v148
  %v188 = vunpack.c.l.b16 %v149
  %v189 = vunpack.c.l.b16 %v150
  %v190 = vunpack.c.l.b16 %v151
  %v191 = vunpack.c.l.b16 %v152
  %v192 = vunpack.c.l.b16 %v153
  %v193 = vunpack.c.l.b16 %v154
  %v194 = vunpack.c.l.b16 %v155
  %v195 = vunpack.c.l.b16 %v156
  %v196 = vunpack.c.l.b16 %v157
  %v197 = vunpack.c.l.b16 %v158
  %v198 = vunpack.c.l.b16 %v159
  %v199 = vpack.c.b16 %v184, %v183
  %v200 = vpack.c.b16 %v186, %v185
  %v201 = vpack.c.b16 %v188, %v187
  %v202 = vpack.c.b16 %v190, %v189
  %v203 = vpack.c.b16 %v192, %v191
  %v204 = vpack.c.b16 %v194, %v193
  %v205 = vpack.c.b16 %v196, %v195
  %v206 = vpack.c.b16 %v198, %v197
  %215 = vmatprep.subr.bf16.mxu0 0
  %216 = vmatpush1.bf16.msra.mxu0 %v199
  %217 = vmatprep.subr.bf16.mxu0 0
  %218 = vmatpush1.bf16.msra.mxu0 %v200
  %219 = vmatprep.subr.bf16.mxu0 0
  %220 = vmatpush1.bf16.msra.mxu0 %v201
  %221 = vmatprep.subr.bf16.mxu0 0
  %222 = vmatpush1.bf16.msra.mxu0 %v202
  %223 = vmatprep.subr.bf16.mxu0 0
  %224 = vmatpush1.bf16.msra.mxu0 %v203
  %225 = vmatprep.subr.bf16.mxu0 0
  %226 = vmatpush1.bf16.msra.mxu0 %v204
  %227 = vmatprep.subr.bf16.mxu0 0
  %228 = vmatpush1.bf16.msra.mxu0 %v205
  %229 = vmatprep.subr.bf16.mxu0 0
  %230 = vmatpush1.bf16.msra.mxu0 %v206
  %231 = vmatprep.subr.bf16.mxu0 0
  %232 = vmatpush1.bf16.msra.mxu0 0
  %233 = vmatprep.subr.bf16.mxu0 0
  %234 = vmatpush1.bf16.msra.mxu0 0
  %235 = vmatprep.subr.bf16.mxu0 0
  %236 = vmatpush1.bf16.msra.mxu0 0
  %237 = vmatprep.subr.bf16.mxu0 0
  %238 = vmatpush1.bf16.msra.mxu0 0
  %239 = vmatprep.subr.bf16.mxu0 0
  %240 = vmatpush1.bf16.msra.mxu0 0
  %241 = vmatprep.subr.bf16.mxu0 0
  %242 = vmatpush1.bf16.msra.mxu0 0
  %243 = vmatprep.subr.bf16.mxu0 0
  %244 = vmatpush1.bf16.msra.mxu0 0
  %245 = vmatprep.subr.bf16.mxu0 0
  %246 = vmatpush1.bf16.msra.mxu0 0
  %247 = vmatprep.mubr.bf16.mxu0 0
  %248 = vmatmul.mubr.bf16.gmra.mrb[0].mxu0 %v143
  %v249 = vpop.f32.mrb[0].mxu0
  %v250 = vadd.f32 %v165, %v249
  %v251 = vpop.f32.mrb[0].mxu0
  %v252 = vpop.f32.mrb[0].mxu0
  %v253 = vadd.f32 %v165, %v252
  %v254 = vpop.f32.mrb[0].mxu0
  %255 = vdwg.mxu0
  %v256 = vmul.f32 %v250, 0.5
  %v257 = vmul.f32 %v253, 0.5
  %v258 = vmul.f32 %v250, %v250
  %v259 = vmul.f32 %v253, %v253
  %v260 = vmul.f32 %v250, %v258
  %v261 = vmul.f32 %v253, %v259
  %v262 = vmul.f32 %v260, 0.044715
  %v263 = vmul.f32 %v261, 0.044715
  %v264 = vadd.f32 %v250, %v262
  %v265 = vadd.f32 %v253, %v263
  %v266 = vmul.f32 %v264, 0.7978846
  %v267 = vmul.f32 %v265, 0.7978846
  %v268 = vtanh.pop %v266
  %v269 = vtanh.pop %v267
  %v270 = vadd.f32 %v268, 1.0
  %v271 = vadd.f32 %v269, 1.0
  %v272 = vmul.f32 %v256, %v270
  %v273 = vmul.f32 %v257, %v271
  %v274 = vpack.c.bf16 %v273, %v272
  %v276 = vunpack.c.l.b16 %v274
  %v277 = vunpack.c.h.b16 %v274
  %v278 = vpack.c.b16 %v276, %v276
  %v279 = vpack.c.b16 %v277, %v277
  %282 = vst [vmem:[%s5] sm:$0xf] %v278
  %283 = vst [vmem:[%s5 + $0x4] sm:$0xf] %v279
  // Predicated region
  $region22: #{_core_forward.16} parent=0 // pred_check
    _
  $region23: #{_core_forward.16} parent=0 // pred_check_branch
    %285 = sbr.rel (0) target = $region25
  $region24: #{_core_forward.16} parent=0 // pred_region
    _
  $region25: #{_core_forward.16} parent=0 // pred_fallthru
    _
  // Predicated region
  $region26: #{_core_forward.16} parent=0 // pred_check
    _
  $region27: #{_core_forward.16} parent=0 // pred_check_branch
    %287 = sbr.rel (0) target = $region29
  $region28: #{_core_forward.16} parent=0 // pred_region
    _
  $region29: #{_core_forward.16} parent=0 // pred_fallthru
    _

// kernel: _core_forward.20
$region0: #{_core_forward.20}
  #allocation0 [shape = 'u32[]', space=smem, size = 0x4, offset = 0x4, fixed_abs, tag = 'smem constant byte address 0x4 - core index']
  #allocation1 [shape = 'u32[144,128]{1,0:T(1,128)}', space=vmem, size = 0x12000, scoped, tag = 'internal scratch']
  %s0 = inlined_call_operand.vmem [shape: bf16[16,128], index: 0, kind: input, shape index: {}]
  %s1 = inlined_call_operand.vmem [shape: bf16[128,256], index: 1, kind: input, shape index: {}]
  %s2 = inlined_call_operand.vmem [shape: f32[1,256], index: 2, kind: input, shape index: {}]
  %s3 = inlined_call_operand.vmem [shape: bf16[16,256], index: 3, kind: output, shape index: {}]
  %s4 = sld [smem:[#allocation0]]
  $region22: #{_core_forward.20} parent=0
    _
  %s6 = ssub.s32 1, %s4
  %s7 = scalar_select 0, %s6, %s4
  // Predicated region
  $region2: #{_core_forward.20} parent=0 // pred_check
    _
  $region3: #{_core_forward.20} parent=0 // pred_check_branch
    %9 = sbr.rel (0) target = $region5
  $region4: #{_core_forward.20} parent=0 // pred_region
    _
  $region5: #{_core_forward.20} parent=0 // pred_fallthru
    _
  // Predicated region
  $region6: #{_core_forward.20} parent=0 // pred_check
    _
  $region7: #{_core_forward.20} parent=0 // pred_check_branch
    %11 = sbr.rel (0) target = $region9
  $region8: #{_core_forward.20} parent=0 // pred_region
    _
  $region9: #{_core_forward.20} parent=0 // pred_fallthru
    _
  // Predicated region
  $region10: #{_core_forward.20} parent=0 // pred_check
    _
  $region11: #{_core_forward.20} parent=0 // pred_check_branch
    %13 = sbr.rel (0) target = $region13
  $region12: #{_core_forward.20} parent=0 // pred_region
    _
  $region13: #{_core_forward.20} parent=0 // pred_fallthru
    _
  %v15 = vld [vmem:[%s0] sm:$0xf]
  %v16 = vld [vmem:[%s0 + $0x4] sm:$0xf]
  %v17 = vld [vmem:[%s1] sm:$0xff]
  %v18 = vld [vmem:[%s1 + $0x8] sm:$0xff]
  %v19 = vld [vmem:[%s1 + $0x10] sm:$0xff]
  %v20 = vld [vmem:[%s1 + $0x18] sm:$0xff]
  %v21 = vld [vmem:[%s1 + $0x20] sm:$0xff]
  %v22 = vld [vmem:[%s1 + $0x28] sm:$0xff]
  %v23 = vld [vmem:[%s1 + $0x30] sm:$0xff]
  %v24 = vld [vmem:[%s1 + $0x38] sm:$0xff]
  %v25 = vld [vmem:[%s1 + $0x40] sm:$0xff]
  %v26 = vld [vmem:[%s1 + $0x48] sm:$0xff]
  %v27 = vld [vmem:[%s1 + $0x50] sm:$0xff]
  %v28 = vld [vmem:[%s1 + $0x58] sm:$0xff]
  %v29 = vld [vmem:[%s1 + $0x60] sm:$0xff]
  %v30 = vld [vmem:[%s1 + $0x68] sm:$0xff]
  %v31 = vld [vmem:[%s1 + $0x70] sm:$0xff]
  %v32 = vld [vmem:[%s1 + $0x78] sm:$0xff]
  %v33 = vld [vmem:[%s2] sm:$0x3]
  %v35 = vlaneseq
  %v36 = vshrl.u32 %v35, 7
  %v37 = vsub.s32 0, %v36
  %v38 = vrot.slane %v33, %v37
  %v39 = vlaneseq
  %v40 = vshrl.u32 %v39, 7
  %v41 = vsub.s32 1, %v40
  %v42 = vrot.slane %v33, %v41
  %v47 = vunpack.c.l.b16 %v15
  %v48 = vunpack.c.l.b16 %v16
  %v49 = vpack.c.b16 %v48, %v47
  %v67 = vunpack.c.l.b16 %v17
  %v68 = vunpack.c.h.b16 %v17
  %v69 = vunpack.c.l.b16 %v18
  %v70 = vunpack.c.h.b16 %v18
  %v71 = vunpack.c.l.b16 %v19
  %v72 = vunpack.c.h.b16 %v19
  %v73 = vunpack.c.l.b16 %v20
  %v74 = vunpack.c.h.b16 %v20
  %v75 = vunpack.c.l.b16 %v21
  %v76 = vunpack.c.h.b16 %v21
  %v77 = vunpack.c.l.b16 %v22
  %v78 = vunpack.c.h.b16 %v22
  %v79 = vunpack.c.l.b16 %v23
  %v80 = vunpack.c.h.b16 %v23
  %v81 = vunpack.c.l.b16 %v24
  %v82 = vunpack.c.h.b16 %v24
  %v83 = vunpack.c.l.b16 %v25
  %v84 = vunpack.c.h.b16 %v25
  %v85 = vunpack.c.l.b16 %v26
  %v86 = vunpack.c.h.b16 %v26
  %v87 = vunpack.c.l.b16 %v27
  %v88 = vunpack.c.h.b16 %v27
  %v89 = vunpack.c.l.b16 %v28
  %v90 = vunpack.c.h.b16 %v28
  %v91 = vunpack.c.l.b16 %v29
  %v92 = vunpack.c.h.b16 %v29
  %v93 = vunpack.c.l.b16 %v30
  %v94 = vunpack.c.h.b16 %v30
  %v95 = vunpack.c.l.b16 %v31
  %v96 = vunpack.c.h.b16 %v31
  %v97 = vunpack.c.l.b16 %v32
  %v98 = vunpack.c.h.b16 %v32
  %v99 = vpack.c.b16 %v69, %v67
  %v100 = vpack.c.b16 %v70, %v68
  %v101 = vpack.c.b16 %v73, %v71
  %v102 = vpack.c.b16 %v74, %v72
  %v103 = vpack.c.b16 %v77, %v75
  %v104 = vpack.c.b16 %v78, %v76
  %v105 = vpack.c.b16 %v81, %v79
  %v106 = vpack.c.b16 %v82, %v80
  %v107 = vpack.c.b16 %v85, %v83
  %v108 = vpack.c.b16 %v86, %v84
  %v109 = vpack.c.b16 %v89, %v87
  %v110 = vpack.c.b16 %v90, %v88
  %v111 = vpack.c.b16 %v93, %v91
  %v112 = vpack.c.b16 %v94, %v92
  %v113 = vpack.c.b16 %v97, %v95
  %v114 = vpack.c.b16 %v98, %v96
  %131 = vmatprep.subr.bf16.mxu0 %v100
  %132 = vmatpush1.bf16.msra.mxu0 %v99
  %133 = vmatprep.subr.bf16.mxu0 %v102
  %134 = vmatpush1.bf16.msra.mxu0 %v101
  %135 = vmatprep.subr.bf16.mxu0 %v104
  %136 = vmatpush1.bf16.msra.mxu0 %v103
  %137 = vmatprep.subr.bf16.mxu0 %v106
  %138 = vmatpush1.bf16.msra.mxu0 %v105
  %139 = vmatprep.subr.bf16.mxu0 %v108
  %140 = vmatpush1.bf16.msra.mxu0 %v107
  %141 = vmatprep.subr.bf16.mxu0 %v110
  %142 = vmatpush1.bf16.msra.mxu0 %v109
  %143 = vmatprep.subr.bf16.mxu0 %v112
  %144 = vmatpush1.bf16.msra.mxu0 %v111
  %145 = vmatprep.subr.bf16.mxu0 %v114
  %146 = vmatpush1.bf16.msra.mxu0 %v113
  %147 = vmatprep.subr.bf16.mxu0 0
  %148 = vmatpush1.bf16.msra.mxu0 0
  %149 = vmatprep.subr.bf16.mxu0 0
  %150 = vmatpush1.bf16.msra.mxu0 0
  %151 = vmatprep.subr.bf16.mxu0 0
  %152 = vmatpush1.bf16.msra.mxu0 0
  %153 = vmatprep.subr.bf16.mxu0 0
  %154 = vmatpush1.bf16.msra.mxu0 0
  %155 = vmatprep.subr.bf16.mxu0 0
  %156 = vmatpush1.bf16.msra.mxu0 0
  %157 = vmatprep.subr.bf16.mxu0 0
  %158 = vmatpush1.bf16.msra.mxu0 0
  %159 = vmatprep.subr.bf16.mxu0 0
  %160 = vmatpush1.bf16.msra.mxu0 0
  %161 = vmatprep.subr.bf16.mxu0 0
  %162 = vmatpush1.bf16.msra.mxu0 0
  %163 = vmatprep.mubr.bf16.mxu0 0
  %164 = vmatmul.mubr.bf16.gmra.mrb[0].mxu0 %v49
  %v165 = vpop.f32.mrb[0].mxu0
  %v166 = vadd.f32 %v38, %v165
  %v167 = vpop.f32.mrb[0].mxu0
  %v168 = vadd.f32 %v42, %v167
  %v169 = vpop.f32.mrb[0].mxu0
  %v170 = vadd.f32 %v38, %v169
  %v171 = vpop.f32.mrb[0].mxu0
  %v172 = vadd.f32 %v42, %v171
  %173 = vdwg.mxu0
  %v174 = vpack.c.bf16 %v170, %v166
  %v175 = vpack.c.bf16 %v172, %v168
  %v178 = vunpack.c.l.b16 %v174
  %v179 = vunpack.c.l.b16 %v175
  %v180 = vunpack.c.h.b16 %v174
  %v181 = vunpack.c.h.b16 %v175
  %v182 = vpack.c.b16 %v179, %v178
  %v183 = vpack.c.b16 %v181, %v180
  %186 = vst [vmem:[%s3] sm:$0xff] %v182
  %187 = vst [vmem:[%s3 + $0x8] sm:$0xff] %v183
  // Predicated region
  $region14: #{_core_forward.20} parent=0 // pred_check
    _
  $region15: #{_core_forward.20} parent=0 // pred_check_branch
    %189 = sbr.rel (0) target = $region17
  $region16: #{_core_forward.20} parent=0 // pred_region
    _
  $region17: #{_core_forward.20} parent=0 // pred_fallthru
    _
  // Predicated region
  $region18: #{_core_forward.20} parent=0 // pred_check
    _
  $region19: #{_core_forward.20} parent=0 // pred_check_branch
    %191 = sbr.rel (0) target = $region21
  $region20: #{_core_forward.20} parent=0 // pred_region
    _
  $region21: #{_core_forward.20} parent=0 // pred_fallthru
    _

// kernel: _core_forward.21
$region0: #{_core_forward.21}
  #allocation0 [shape = 'u32[]', space=smem, size = 0x4, offset = 0x4, fixed_abs, tag = 'smem constant byte address 0x4 - core index']
  #allocation1 [shape = 'u32[144,128]{1,0:T(1,128)}', space=vmem, size = 0x12000, scoped, tag = 'internal scratch']
  %s0 = inlined_call_operand.vmem [shape: bf16[8,384], index: 0, kind: input, shape index: {}]
  %s1 = inlined_call_operand.vmem [shape: bf16[384,128], index: 1, kind: input, shape index: {}]
  %s2 = inlined_call_operand.vmem [shape: f32[1,128], index: 2, kind: input, shape index: {}]
  %s3 = inlined_call_operand.vmem [shape: f32[1,128], index: 3, kind: input, shape index: {}]
  %s4 = inlined_call_operand.vmem [shape: f32[1,128], index: 4, kind: input, shape index: {}]
  %s5 = inlined_call_operand.vmem [shape: bf16[128,128], index: 5, kind: input, shape index: {}]
  %s6 = inlined_call_operand.vmem [shape: f32[1,128], index: 6, kind: input, shape index: {}]
  %s7 = inlined_call_operand.vmem [shape: f32[8,128], index: 7, kind: output, shape index: {}]
  %s8 = sld [smem:[#allocation0]]
  $region38: #{_core_forward.21} parent=0
    _
  %s10 = ssub.s32 1, %s8
  %s11 = scalar_select 0, %s10, %s8
  // Predicated region
  $region2: #{_core_forward.21} parent=0 // pred_check
    _
  $region3: #{_core_forward.21} parent=0 // pred_check_branch
    %13 = sbr.rel (0) target = $region5
  $region4: #{_core_forward.21} parent=0 // pred_region
    _
  $region5: #{_core_forward.21} parent=0 // pred_fallthru
    _
  // Predicated region
  $region6: #{_core_forward.21} parent=0 // pred_check
    _
  $region7: #{_core_forward.21} parent=0 // pred_check_branch
    %15 = sbr.rel (0) target = $region9
  $region8: #{_core_forward.21} parent=0 // pred_region
    _
  $region9: #{_core_forward.21} parent=0 // pred_fallthru
    _
  // Predicated region
  $region10: #{_core_forward.21} parent=0 // pred_check
    _
  $region11: #{_core_forward.21} parent=0 // pred_check_branch
    %17 = sbr.rel (0) target = $region13
  $region12: #{_core_forward.21} parent=0 // pred_region
    _
  $region13: #{_core_forward.21} parent=0 // pred_fallthru
    _
  // Predicated region
  $region14: #{_core_forward.21} parent=0 // pred_check
    _
  $region15: #{_core_forward.21} parent=0 // pred_check_branch
    %19 = sbr.rel (0) target = $region17
  $region16: #{_core_forward.21} parent=0 // pred_region
    _
  $region17: #{_core_forward.21} parent=0 // pred_fallthru
    _
  // Predicated region
  $region18: #{_core_forward.21} parent=0 // pred_check
    _
  $region19: #{_core_forward.21} parent=0 // pred_check_branch
    %21 = sbr.rel (0) target = $region21
  $region20: #{_core_forward.21} parent=0 // pred_region
    _
  $region21: #{_core_forward.21} parent=0 // pred_fallthru
    _
  // Predicated region
  $region22: #{_core_forward.21} parent=0 // pred_check
    _
  $region23: #{_core_forward.21} parent=0 // pred_check_branch
    %23 = sbr.rel (0) target = $region25
  $region24: #{_core_forward.21} parent=0 // pred_region
    _
  $region25: #{_core_forward.21} parent=0 // pred_fallthru
    _
  // Predicated region
  $region26: #{_core_forward.21} parent=0 // pred_check
    _
  $region27: #{_core_forward.21} parent=0 // pred_check_branch
    %25 = sbr.rel (0) target = $region29
  $region28: #{_core_forward.21} parent=0 // pred_region
    _
  $region29: #{_core_forward.21} parent=0 // pred_fallthru
    _
  %v27 = vld [vmem:[%s0] sm:$0xff]
  %v28 = vld [vmem:[%s0 + $0x8] sm:$0xf]
  %v29 = vld [vmem:[%s1] sm:$0xf]
  %v30 = vld [vmem:[%s1 + $0x4] sm:$0xf]
  %v31 = vld [vmem:[%s1 + $0x8] sm:$0xf]
  %v32 = vld [vmem:[%s1 + $0xc] sm:$0xf]
  %v33 = vld [vmem:[%s1 + $0x10] sm:$0xf]
  %v34 = vld [vmem:[%s1 + $0x14] sm:$0xf]
  %v35 = vld [vmem:[%s1 + $0x18] sm:$0xf]
  %v36 = vld [vmem:[%s1 + $0x1c] sm:$0xf]
  %v37 = vld [vmem:[%s1 + $0x20] sm:$0xf]
  %v38 = vld [vmem:[%s1 + $0x24] sm:$0xf]
  %v39 = vld [vmem:[%s1 + $0x28] sm:$0xf]
  %v40 = vld [vmem:[%s1 + $0x2c] sm:$0xf]
  %v41 = vld [vmem:[%s1 + $0x30] sm:$0xf]
  %v42 = vld [vmem:[%s1 + $0x34] sm:$0xf]
  %v43 = vld [vmem:[%s1 + $0x38] sm:$0xf]
  %v44 = vld [vmem:[%s1 + $0x3c] sm:$0xf]
  %v45 = vld [vmem:[%s1 + $0x40] sm:$0xf]
  %v46 = vld [vmem:[%s1 + $0x44] sm:$0xf]
  %v47 = vld [vmem:[%s1 + $0x48] sm:$0xf]
  %v48 = vld [vmem:[%s1 + $0x4c] sm:$0xf]
  %v49 = vld [vmem:[%s1 + $0x50] sm:$0xf]
  %v50 = vld [vmem:[%s1 + $0x54] sm:$0xf]
  %v51 = vld [vmem:[%s1 + $0x58] sm:$0xf]
  %v52 = vld [vmem:[%s1 + $0x5c] sm:$0xf]
  %v53 = vld [vmem:[%s1 + $0x60] sm:$0xf]
  %v54 = vld [vmem:[%s1 + $0x64] sm:$0xf]
  %v55 = vld [vmem:[%s1 + $0x68] sm:$0xf]
  %v56 = vld [vmem:[%s1 + $0x6c] sm:$0xf]
  %v57 = vld [vmem:[%s1 + $0x70] sm:$0xf]
  %v58 = vld [vmem:[%s1 + $0x74] sm:$0xf]
  %v59 = vld [vmem:[%s1 + $0x78] sm:$0xf]
  %v60 = vld [vmem:[%s1 + $0x7c] sm:$0xf]
  %v61 = vld [vmem:[%s1 + $0x80] sm:$0xf]
  %v62 = vld [vmem:[%s1 + $0x84] sm:$0xf]
  %v63 = vld [vmem:[%s1 + $0x88] sm:$0xf]
  %v64 = vld [vmem:[%s1 + $0x8c] sm:$0xf]
  %v65 = vld [vmem:[%s1 + $0x90] sm:$0xf]
  %v66 = vld [vmem:[%s1 + $0x94] sm:$0xf]
  %v67 = vld [vmem:[%s1 + $0x98] sm:$0xf]
  %v68 = vld [vmem:[%s1 + $0x9c] sm:$0xf]
  %v69 = vld [vmem:[%s1 + $0xa0] sm:$0xf]
  %v70 = vld [vmem:[%s1 + $0xa4] sm:$0xf]
  %v71 = vld [vmem:[%s1 + $0xa8] sm:$0xf]
  %v72 = vld [vmem:[%s1 + $0xac] sm:$0xf]
  %v73 = vld [vmem:[%s1 + $0xb0] sm:$0xf]
  %v74 = vld [vmem:[%s1 + $0xb4] sm:$0xf]
  %v75 = vld [vmem:[%s1 + $0xb8] sm:$0xf]
  %v76 = vld [vmem:[%s1 + $0xbc] sm:$0xf]
  %v77 = vld [vmem:[%s2] sm:$0x1]
  %v79 = vlaneseq
  %v80 = vshrl.u32 %v79, 7
  %v81 = vsub.s32 0, %v80
  %v82 = vrot.slane %v77, %v81
  %v86 = vunpack.c.l.b16 %v27
  %v87 = vunpack.c.h.b16 %v27
  %v88 = vunpack.c.l.b16 %v28
  %v89 = vpack.c.b16 %v86, %v86
  %v90 = vpack.c.b16 %v87, %v87
  %v91 = vpack.c.b16 %v88, %v88
  %v143 = vunpack.c.l.b16 %v29
  %v144 = vunpack.c.l.b16 %v30
  %v145 = vunpack.c.l.b16 %v31
  %v146 = vunpack.c.l.b16 %v32
  %v147 = vunpack.c.l.b16 %v33
  %v148 = vunpack.c.l.b16 %v34
  %v149 = vunpack.c.l.b16 %v35
  %v150 = vunpack.c.l.b16 %v36
  %v151 = vunpack.c.l.b16 %v37
  %v152 = vunpack.c.l.b16 %v38
  %v153 = vunpack.c.l.b16 %v39
  %v154 = vunpack.c.l.b16 %v40
  %v155 = vunpack.c.l.b16 %v41
  %v156 = vunpack.c.l.b16 %v42
  %v157 = vunpack.c.l.b16 %v43
  %v158 = vunpack.c.l.b16 %v44
  %v159 = vunpack.c.l.b16 %v45
  %v160 = vunpack.c.l.b16 %v46
  %v161 = vunpack.c.l.b16 %v47
  %v162 = vunpack.c.l.b16 %v48
  %v163 = vunpack.c.l.b16 %v49
  %v164 = vunpack.c.l.b16 %v50
  %v165 = vunpack.c.l.b16 %v51
  %v166 = vunpack.c.l.b16 %v52
  %v167 = vunpack.c.l.b16 %v53
  %v168 = vunpack.c.l.b16 %v54
  %v169 = vunpack.c.l.b16 %v55
  %v170 = vunpack.c.l.b16 %v56
  %v171 = vunpack.c.l.b16 %v57
  %v172 = vunpack.c.l.b16 %v58
  %v173 = vunpack.c.l.b16 %v59
  %v174 = vunpack.c.l.b16 %v60
  %v175 = vunpack.c.l.b16 %v61
  %v176 = vunpack.c.l.b16 %v62
  %v177 = vunpack.c.l.b16 %v63
  %v178 = vunpack.c.l.b16 %v64
  %v179 = vunpack.c.l.b16 %v65
  %v180 = vunpack.c.l.b16 %v66
  %v181 = vunpack.c.l.b16 %v67
  %v182 = vunpack.c.l.b16 %v68
  %v183 = vunpack.c.l.b16 %v69
  %v184 = vunpack.c.l.b16 %v70
  %v185 = vunpack.c.l.b16 %v71
  %v186 = vunpack.c.l.b16 %v72
  %v187 = vunpack.c.l.b16 %v73
  %v188 = vunpack.c.l.b16 %v74
  %v189 = vunpack.c.l.b16 %v75
  %v190 = vunpack.c.l.b16 %v76
  %v191 = vpack.c.b16 %v144, %v143
  %v192 = vpack.c.b16 %v146, %v145
  %v193 = vpack.c.b16 %v148, %v147
  %v194 = vpack.c.b16 %v150, %v149
  %v195 = vpack.c.b16 %v152, %v151
  %v196 = vpack.c.b16 %v154, %v153
  %v197 = vpack.c.b16 %v156, %v155
  %v198 = vpack.c.b16 %v158, %v157
  %v199 = vpack.c.b16 %v160, %v159
  %v200 = vpack.c.b16 %v162, %v161
  %v201 = vpack.c.b16 %v164, %v163
  %v202 = vpack.c.b16 %v166, %v165
  %v203 = vpack.c.b16 %v168, %v167
  %v204 = vpack.c.b16 %v170, %v169
  %v205 = vpack.c.b16 %v172, %v171
  %v206 = vpack.c.b16 %v174, %v173
  %v207 = vpack.c.b16 %v176, %v175
  %v208 = vpack.c.b16 %v178, %v177
  %v209 = vpack.c.b16 %v180, %v179
  %v210 = vpack.c.b16 %v182, %v181
  %v211 = vpack.c.b16 %v184, %v183
  %v212 = vpack.c.b16 %v186, %v185
  %v213 = vpack.c.b16 %v188, %v187
  %v214 = vpack.c.b16 %v190, %v189
  %239 = vmatprep.subr.bf16.mxu0 0
  %240 = vmatpush1.bf16.msra.mxu0 %v191
  %241 = vmatprep.subr.bf16.mxu0 0
  %242 = vmatpush1.bf16.msra.mxu0 %v192
  %243 = vmatprep.subr.bf16.mxu0 0
  %244 = vmatpush1.bf16.msra.mxu0 %v193
  %245 = vmatprep.subr.bf16.mxu0 0
  %246 = vmatpush1.bf16.msra.mxu0 %v194
  %247 = vmatprep.subr.bf16.mxu0 0
  %248 = vmatpush1.bf16.msra.mxu0 %v195
  %249 = vmatprep.subr.bf16.mxu0 0
  %250 = vmatpush1.bf16.msra.mxu0 %v196
  %251 = vmatprep.subr.bf16.mxu0 0
  %252 = vmatpush1.bf16.msra.mxu0 %v197
  %253 = vmatprep.subr.bf16.mxu0 0
  %254 = vmatpush1.bf16.msra.mxu0 %v198
  %255 = vmatprep.subr.bf16.mxu0 0
  %256 = vmatpush1.bf16.msra.mxu0 %v199
  %257 = vmatprep.subr.bf16.mxu0 0
  %258 = vmatpush1.bf16.msra.mxu0 %v200
  %259 = vmatprep.subr.bf16.mxu0 0
  %260 = vmatpush1.bf16.msra.mxu0 %v201
  %261 = vmatprep.subr.bf16.mxu0 0
  %262 = vmatpush1.bf16.msra.mxu0 %v202
  %263 = vmatprep.subr.bf16.mxu0 0
  %264 = vmatpush1.bf16.msra.mxu0 %v203
  %265 = vmatprep.subr.bf16.mxu0 0
  %266 = vmatpush1.bf16.msra.mxu0 %v204
  %267 = vmatprep.subr.bf16.mxu0 0
  %268 = vmatpush1.bf16.msra.mxu0 %v205
  %269 = vmatprep.subr.bf16.mxu0 0
  %270 = vmatpush1.bf16.msra.mxu0 %v206
  %271 = vmatprep.mubr.bf16.mxu0 %v90
  %272 = vmatmul.mubr.bf16.gmra.mrb[0].mxu0 %v89
  %v273 = vpop.f32.mrb[0].mxu0
  %v274 = vadd.f32 %v82, %v273
  %v275 = vpop.f32.mrb[0].mxu0
  %v276 = vpop.f32.mrb[0].mxu0
  %v277 = vpop.f32.mrb[0].mxu0
  %278 = vdwg.mxu0
  %279 = vmatprep.subr.bf16.mxu0 0
  %280 = vmatpush1.bf16.msra.mxu0 %v207
  %281 = vmatprep.subr.bf16.mxu0 0
  %282 = vmatpush1.bf16.msra.mxu0 %v208
  %283 = vmatprep.subr.bf16.mxu0 0
  %284 = vmatpush1.bf16.msra.mxu0 %v209
  %285 = vmatprep.subr.bf16.mxu0 0
  %286 = vmatpush1.bf16.msra.mxu0 %v210
  %287 = vmatprep.subr.bf16.mxu0 0
  %288 = vmatpush1.bf16.msra.mxu0 %v211
  %289 = vmatprep.subr.bf16.mxu0 0
  %290 = vmatpush1.bf16.msra.mxu0 %v212
  %291 = vmatprep.subr.bf16.mxu0 0
  %292 = vmatpush1.bf16.msra.mxu0 %v213
  %293 = vmatprep.subr.bf16.mxu0 0
  %294 = vmatpush1.bf16.msra.mxu0 %v214
  %295 = vmatprep.subr.bf16.mxu0 0
  %296 = vmatpush1.bf16.msra.mxu0 0
  %297 = vmatprep.subr.bf16.mxu0 0
  %298 = vmatpush1.bf16.msra.mxu0 0
  %299 = vmatprep.subr.bf16.mxu0 0
  %300 = vmatpush1.bf16.msra.mxu0 0
  %301 = vmatprep.subr.bf16.mxu0 0
  %302 = vmatpush1.bf16.msra.mxu0 0
  %303 = vmatprep.subr.bf16.mxu0 0
  %304 = vmatpush1.bf16.msra.mxu0 0
  %305 = vmatprep.subr.bf16.mxu0 0
  %306 = vmatpush1.bf16.msra.mxu0 0
  %307 = vmatprep.subr.bf16.mxu0 0
  %308 = vmatpush1.bf16.msra.mxu0 0
  %309 = vmatprep.subr.bf16.mxu0 0
  %310 = vmatpush1.bf16.msra.mxu0 0
  %311 = vmatprep.mubr.bf16.mxu0 0
  %312 = vmatmul.mubr.bf16.gmra.mrb[0].mxu0 %v91
  %v313 = vpop.f32.mrb[0].mxu0
  %v314 = vadd.f32 %v274, %v313
  %v315 = vpop.f32.mrb[0].mxu0
  %v316 = vpop.f32.mrb[0].mxu0
  %v317 = vpop.f32.mrb[0].mxu0
  %318 = vdwg.mxu0
  %319 = vadd.xlane.f32.xlu0 %v314
  %v320 = vpop.xlane.xlu0 %319
  %v321 = vrcp.pop 128.0
  %v322 = vmul.f32 %v320, %v321
  %v323 = vsub.f32 %v314, %v322
  %v324 = vmul.f32 %v323, %v323
  %325 = vadd.xlane.f32.xlu0 %v324
  %v326 = vpop.xlane.xlu0 %325
  %v327 = vmul.f32 %v326, %v321
  %v328 = vadd.f32 %v327, 1e-05
  %v329 = vrsqrt.pop %v328
  %v330 = vmul.f32 %v323, %v329
  %v331 = vld [vmem:[%s3] sm:$0x1]
  %v333 = vlaneseq
  %v334 = vshrl.u32 %v333, 7
  %v335 = vsub.s32 0, %v334
  %v336 = vrot.slane %v331, %v335
  %v338 = vmul.f32 %v330, %v336
  %v339 = vld [vmem:[%s4] sm:$0x1]
  %v341 = vlaneseq
  %v342 = vshrl.u32 %v341, 7
  %v343 = vsub.s32 0, %v342
  %v344 = vrot.slane %v339, %v343
  %v346 = vadd.f32 %v338, %v344
  %v347 = vmul.f32 %v346, 0.5
  %v348 = vmul.f32 %v346, %v346
  %v349 = vmul.f32 %v346, %v348
  %v350 = vmul.f32 %v349, 0.044715
  %v351 = vadd.f32 %v346, %v350
  %v352 = vmul.f32 %v351, 0.7978846
  %v353 = vtanh.pop %v352
  %v354 = vadd.f32 %v353, 1.0
  %v355 = vmul.f32 %v347, %v354
  %v356 = vpack.c.bf16 %v355, %v355
  %v357 = vld [vmem:[%s5] sm:$0xf]
  %v358 = vld [vmem:[%s5 + $0x4] sm:$0xf]
  %v359 = vld [vmem:[%s5 + $0x8] sm:$0xf]
  %v360 = vld [vmem:[%s5 + $0xc] sm:$0xf]
  %v361 = vld [vmem:[%s5 + $0x10] sm:$0xf]
  %v362 = vld [vmem:[%s5 + $0x14] sm:$0xf]
  %v363 = vld [vmem:[%s5 + $0x18] sm:$0xf]
  %v364 = vld [vmem:[%s5 + $0x1c] sm:$0xf]
  %v365 = vld [vmem:[%s5 + $0x20] sm:$0xf]
  %v366 = vld [vmem:[%s5 + $0x24] sm:$0xf]
  %v367 = vld [vmem:[%s5 + $0x28] sm:$0xf]
  %v368 = vld [vmem:[%s5 + $0x2c] sm:$0xf]
  %v369 = vld [vmem:[%s5 + $0x30] sm:$0xf]
  %v370 = vld [vmem:[%s5 + $0x34] sm:$0xf]
  %v371 = vld [vmem:[%s5 + $0x38] sm:$0xf]
  %v372 = vld [vmem:[%s5 + $0x3c] sm:$0xf]
  %v373 = vld [vmem:[%s6] sm:$0x1]
  %v375 = vlaneseq
  %v376 = vshrl.u32 %v375, 7
  %v377 = vsub.s32 0, %v376
  %v378 = vrot.slane %v373, %v377
  %v396 = vunpack.c.l.b16 %v357
  %v397 = vunpack.c.l.b16 %v358
  %v398 = vunpack.c.l.b16 %v359
  %v399 = vunpack.c.l.b16 %v360
  %v400 = vunpack.c.l.b16 %v361
  %v401 = vunpack.c.l.b16 %v362
  %v402 = vunpack.c.l.b16 %v363
  %v403 = vunpack.c.l.b16 %v364
  %v404 = vunpack.c.l.b16 %v365
  %v405 = vunpack.c.l.b16 %v366
  %v406 = vunpack.c.l.b16 %v367
  %v407 = vunpack.c.l.b16 %v368
  %v408 = vunpack.c.l.b16 %v369
  %v409 = vunpack.c.l.b16 %v370
  %v410 = vunpack.c.l.b16 %v371
  %v411 = vunpack.c.l.b16 %v372
  %v412 = vpack.c.b16 %v397, %v396
  %v413 = vpack.c.b16 %v399, %v398
  %v414 = vpack.c.b16 %v401, %v400
  %v415 = vpack.c.b16 %v403, %v402
  %v416 = vpack.c.b16 %v405, %v404
  %v417 = vpack.c.b16 %v407, %v406
  %v418 = vpack.c.b16 %v409, %v408
  %v419 = vpack.c.b16 %v411, %v410
  %428 = vmatprep.subr.bf16.mxu0 0
  %429 = vmatpush1.bf16.msra.mxu0 %v412
  %430 = vmatprep.subr.bf16.mxu0 0
  %431 = vmatpush1.bf16.msra.mxu0 %v413
  %432 = vmatprep.subr.bf16.mxu0 0
  %433 = vmatpush1.bf16.msra.mxu0 %v414
  %434 = vmatprep.subr.bf16.mxu0 0
  %435 = vmatpush1.bf16.msra.mxu0 %v415
  %436 = vmatprep.subr.bf16.mxu0 0
  %437 = vmatpush1.bf16.msra.mxu0 %v416
  %438 = vmatprep.subr.bf16.mxu0 0
  %439 = vmatpush1.bf16.msra.mxu0 %v417
  %440 = vmatprep.subr.bf16.mxu0 0
  %441 = vmatpush1.bf16.msra.mxu0 %v418
  %442 = vmatprep.subr.bf16.mxu0 0
  %443 = vmatpush1.bf16.msra.mxu0 %v419
  %444 = vmatprep.subr.bf16.mxu0 0
  %445 = vmatpush1.bf16.msra.mxu0 0
  %446 = vmatprep.subr.bf16.mxu0 0
  %447 = vmatpush1.bf16.msra.mxu0 0
  %448 = vmatprep.subr.bf16.mxu0 0
  %449 = vmatpush1.bf16.msra.mxu0 0
  %450 = vmatprep.subr.bf16.mxu0 0
  %451 = vmatpush1.bf16.msra.mxu0 0
  %452 = vmatprep.subr.bf16.mxu0 0
  %453 = vmatpush1.bf16.msra.mxu0 0
  %454 = vmatprep.subr.bf16.mxu0 0
  %455 = vmatpush1.bf16.msra.mxu0 0
  %456 = vmatprep.subr.bf16.mxu0 0
  %457 = vmatpush1.bf16.msra.mxu0 0
  %458 = vmatprep.subr.bf16.mxu0 0
  %459 = vmatpush1.bf16.msra.mxu0 0
  %460 = vmatprep.mubr.bf16.mxu0 0
  %461 = vmatmul.mubr.bf16.gmra.mrb[0].mxu0 %v356
  %v462 = vpop.f32.mrb[0].mxu0
  %v463 = vadd.f32 %v378, %v462
  %v464 = vpop.f32.mrb[0].mxu0
  %v465 = vpop.f32.mrb[0].mxu0
  %v466 = vpop.f32.mrb[0].mxu0
  %467 = vdwg.mxu0
  %v468 = vxor.u32 %v463, 2147483648
  %v469 = vmul.f32 %v468, 1.442695
  %v470 = vpow.pop %v469
  %v471 = vadd.f32 %v470, 1.0
  %v472 = vrcp.pop %v471
  %v473 = vmul.f32 1.0, %v472
  %474 = vst [vmem:[%s7] sm:$0xff] %v473
  // Predicated region
  $region30: #{_core_forward.21} parent=0 // pred_check
    _
  $region31: #{_core_forward.21} parent=0 // pred_check_branch
    %476 = sbr.rel (0) target = $region33
  $region32: #{_core_forward.21} parent=0 // pred_region
    _
  $region33: #{_core_forward.21} parent=0 // pred_fallthru
    _
  // Predicated region
  $region34: #{_core_forward.21} parent=0 // pred_check
    _
  $region35: #{_core_forward.21} parent=0 // pred_check_branch
    %478 = sbr.rel (0) target = $region37
  $region36: #{_core_forward.21} parent=0 // pred_region
    _
  $region37: #{_core_forward.21} parent=0 // pred_fallthru
    _

</llo_original>
